<compile_context>
chip_gen: v7x
topology: tpu7x:2x2x1
jax: 0.10.0
libtpu: 0.0.40
codegen_flags: <defaults>
</compile_context>

<pallas_src>
import functools

import jax
import jax.numpy as jnp
from jax.experimental import pallas as pl
from jax.experimental.pallas import tpu as pltpu


# ----------------------------- numerics helpers -----------------------------

_EPS = 1e-5  # nn.LayerNorm default eps


def _layernorm(x, gamma, beta):
    # x: (..., D), gamma/beta: (1, D). Biased variance, matching PyTorch.
    mu = jnp.mean(x, axis=-1, keepdims=True)
    var = jnp.mean((x - mu) ** 2, axis=-1, keepdims=True)
    return (x - mu) * jax.lax.rsqrt(var + _EPS) * gamma + beta


def _gelu_exact(x):
    # nn.GELU() default: exact erf form.
    return 0.5 * x * (1.0 + jax.lax.erf(x * (2.0 ** -0.5)))


# ------------------------------ fused kernel --------------------------------

def decoder_layer_kernel(x_ref, mem_ref,
                         sa_g, sa_b, sa_wq, sa_wkv, sa_wo, sa_bo,
                         ca_g, ca_b, ca_wq, ca_wkv, ca_wo, ca_bo,
                         ff_g, ff_b, ff_w1, ff_b1, ff_w2, ff_b2,
                         o_ref, *, n_head, head_dim, B, T, S, scale):
    """One grid step = one decoder layer over the full (B*T, D) activation slab.

    The running activation is carried in the resident output block (its block
    index is constant across the depth grid axis = accumulator pattern)."""
    layer = pl.program_id(0)

    @pl.when(layer == 0)
    def _():
        o_ref[...] = x_ref[...]

    x = o_ref[...]                                  # (B*T, D) f32
    inner = n_head * head_dim

    def split_heads(t2, n_seq):
        # (B*n_seq, inner) f32 -> (n_head*B, n_seq, head_dim) bf16.
        # Per-head slices fall on 128-lane boundaries; concatenating them
        # along a new leading batch axis avoids any lane-dim reshape/transpose.
        heads = [t2[:, h * head_dim:(h + 1) * head_dim].reshape(B, n_seq, head_dim)
                 for h in range(n_head)]
        return jnp.concatenate(heads, axis=0).astype(jnp.bfloat16)

    def merge_heads(ctx):
        # (n_head*B, T, head_dim) f32 -> (B*T, inner); lane-aligned concat,
        # matching torch's 'b h n d -> b n (h d)' head ordering.
        parts = [ctx[h * B:(h + 1) * B].reshape(B * T, head_dim)
                 for h in range(n_head)]
        return jnp.concatenate(parts, axis=-1)

    def attention(xn, to_, seq_to, wq, wkv, wo, bo):
        xnb = xn.astype(jnp.bfloat16)
        tob = to_.astype(jnp.bfloat16)
        # Full-width projections (bf16 operands, f32 accumulation).
        q = jnp.dot(xnb, wq, preferred_element_type=jnp.float32) * scale   # (B*T, inner)
        kv = jnp.dot(tob, wkv, preferred_element_type=jnp.float32)         # (B*seq_to, 2*inner)
        k = kv[:, :inner]
        v = kv[:, inner:]

        qh = split_heads(q, T)         # (H*B, T, d) bf16
        kh = split_heads(k, seq_to)    # (H*B, S, d) bf16
        vh = split_heads(v, seq_to)    # (H*B, S, d) bf16

        # Scores + softmax for ALL heads at once (one batched einsum, one
        # reduction pass over the (H*B, T, S) slab).
        s = jnp.einsum('btd,bsd->bts', qh, kh,
                       preferred_element_type=jnp.float32)                 # (H*B, T, S)
        s = s - jnp.max(s, axis=-1, keepdims=True)
        e = jnp.exp(s)
        p = e / jnp.sum(e, axis=-1, keepdims=True)                         # exact divide

        ctx = jnp.einsum('bts,bsd->btd', p.astype(jnp.bfloat16), vh,
                         preferred_element_type=jnp.float32)               # (H*B, T, d)
        ctx2 = merge_heads(ctx).astype(jnp.bfloat16)                       # (B*T, inner)
        # Single output projection with K = inner (full MXU depth).
        return jnp.dot(ctx2, wo, preferred_element_type=jnp.float32) + bo

    # ---- PreNorm self-attention + residual (key/value = normalized x) ----
    xn = _layernorm(x, sa_g[...], sa_b[...])
    x = x + attention(xn, xn, T, sa_wq[...], sa_wkv[...], sa_wo[...], sa_bo[...])

    # ---- PreNorm cross-attention + residual (key/value = raw memory) ----
    xn = _layernorm(x, ca_g[...], ca_b[...])
    x = x + attention(xn, mem_ref[...], S,
                      ca_wq[...], ca_wkv[...], ca_wo[...], ca_bo[...])

    # ---- PreNorm feed-forward + residual ----
    xn = _layernorm(x, ff_g[...], ff_b[...])
    hid = _gelu_exact(jnp.dot(xn.astype(jnp.bfloat16), ff_w1[...],
                              preferred_element_type=jnp.float32) + ff_b1[...])
    x = x + jnp.dot(hid.astype(jnp.bfloat16), ff_w2[...],
                    preferred_element_type=jnp.float32) + ff_b2[...]

    o_ref[...] = x.astype(o_ref.dtype)


# ------------------------------ pallas wrapper -------------------------------

def transformer_decoder(x, memory, params, *, n_head, head_dim):
    B, T, D = x.shape
    S = memory.shape[1]
    depth = params["sa_wq"].shape[0]
    inner = n_head * head_dim
    ff_dim = params["ff_w1"].shape[-1]
    scale = head_dim ** (-0.5)

    # Lane-dense 2-D activation slabs (last dim = D is a multiple of 128).
    x2 = x.reshape(B * T, D).astype(jnp.float32)
    m2 = memory.reshape(B * S, D).astype(jnp.float32)

    kernel = functools.partial(decoder_layer_kernel, n_head=n_head,
                               head_dim=head_dim, B=B, T=T, S=S, scale=scale)

    def w_spec(r, c):
        # stacked per-layer weight: (depth, r, c) -> kernel sees (r, c)
        return pl.BlockSpec((None, r, c), lambda l: (l, 0, 0))

    act_spec = pl.BlockSpec((B * T, D), lambda l: (0, 0))
    mem_spec = pl.BlockSpec((B * S, D), lambda l: (0, 0))

    # Explicit VMEM budget: double-buffered bf16 layer weights + resident
    # activation / memory / output blocks, with generous headroom for
    # in-kernel temporaries.
    w_elems = 8 * D * inner + 2 * D * ff_dim           # wq+wkv+wo (x2 attn) + w1+w2
    w_bytes = 2 * (w_elems * 2)                        # bf16, double-buffered
    act_bytes = 2 * (2 * B * T * D + B * S * D) * 4    # x, out, memory (f32)
    vmem_limit = min(2 * (w_bytes + act_bytes) + (16 << 20), 64 << 20)

    out = pl.pallas_call(
        kernel,
        out_shape=jax.ShapeDtypeStruct((B * T, D), jnp.float32),
        grid=(depth,),
        in_specs=[
            act_spec, mem_spec,
            w_spec(1, D), w_spec(1, D), w_spec(D, inner), w_spec(D, 2 * inner),
            w_spec(inner, D), w_spec(1, D),
            w_spec(1, D), w_spec(1, D), w_spec(D, inner), w_spec(D, 2 * inner),
            w_spec(inner, D), w_spec(1, D),
            w_spec(1, D), w_spec(1, D), w_spec(D, ff_dim), w_spec(1, ff_dim),
            w_spec(ff_dim, D), w_spec(1, D),
        ],
        out_specs=pl.BlockSpec((B * T, D), lambda l: (0, 0)),
        input_output_aliases={0: 0},    # donate the activation slab to the output
        compiler_params=pltpu.CompilerParams(
            dimension_semantics=("arbitrary",),   # layers are sequential
            vmem_limit_bytes=int(vmem_limit)),
    )(x2, m2,
      params["sa_g"], params["sa_b"], params["sa_wq"], params["sa_wkv"],
      params["sa_wo"], params["sa_bo"],
      params["ca_g"], params["ca_b"], params["ca_wq"], params["ca_wkv"],
      params["ca_wo"], params["ca_bo"],
      params["ff_g"], params["ff_b"], params["ff_w1"], params["ff_b1"],
      params["ff_w2"], params["ff_b2"])
    return out.reshape(B, T, D)


# ------------------------------- parameters ----------------------------------

def init_params(key, dim, depth, n_head, head_dim, ff_dim):
    inner = n_head * head_dim

    def rnd_bf16(k, shape, scale=0.05):
        # Matmul weights are stored bf16 ONCE at init (streamed bf16 each call).
        return (scale * jax.random.normal(k, shape)).astype(jnp.bfloat16)

    def rnd_f32(k, shape, scale=0.05):
        return (scale * jax.random.normal(k, shape)).astype(jnp.float32)

    ks = jax.random.split(key, 10)
    return dict(
        sa_g=jnp.ones((depth, 1, dim), jnp.float32),
        sa_b=jnp.zeros((depth, 1, dim), jnp.float32),
        sa_wq=rnd_bf16(ks[0], (depth, dim, inner)),
        sa_wkv=rnd_bf16(ks[1], (depth, dim, 2 * inner)),
        sa_wo=rnd_bf16(ks[2], (depth, inner, dim)),
        sa_bo=rnd_f32(ks[3], (depth, 1, dim)),
        ca_g=jnp.ones((depth, 1, dim), jnp.float32),
        ca_b=jnp.zeros((depth, 1, dim), jnp.float32),
        ca_wq=rnd_bf16(ks[4], (depth, dim, inner)),
        ca_wkv=rnd_bf16(ks[5], (depth, dim, 2 * inner)),
        ca_wo=rnd_bf16(ks[6], (depth, inner, dim)),
        ca_bo=rnd_f32(ks[7], (depth, 1, dim)),
        ff_g=jnp.ones((depth, 1, dim), jnp.float32),
        ff_b=jnp.zeros((depth, 1, dim), jnp.float32),
        ff_w1=rnd_bf16(ks[8], (depth, dim, ff_dim)),
        ff_b1=jnp.zeros((depth, 1, ff_dim), jnp.float32),
        ff_w2=rnd_bf16(ks[9], (depth, ff_dim, dim)),
        ff_b2=jnp.zeros((depth, 1, dim), jnp.float32),
    )


# --------------------------- pure-JAX reference ------------------------------
# f32 reference with the same (bf16-valued) weights; the kernel additionally
# rounds matmul operands to bf16, so comparison uses a bf16-level tolerance.

def _ref_attn(x, to, g, b, wq, wkv, wo, bo, n_head, head_dim):
    xn = _layernorm(x, g, b)
    to = xn if to is None else to
    B, T, _ = xn.shape
    S = to.shape[1]
    inner = n_head * head_dim
    q = xn @ wq
    kv = to @ wkv
    k, v = kv[..., :inner], kv[..., inner:]
    rh = lambda t, n: t.reshape(B, n, n_head, head_dim).transpose(0, 2, 1, 3)
    qh, kh, vh = rh(q, T), rh(k, S), rh(v, S)
    dots = jnp.einsum("bhtd,bhsd->bhts", qh, kh) * head_dim ** (-0.5)
    attn = jax.nn.softmax(dots, axis=-1)
    o = jnp.einsum("bhts,bhsd->bhtd", attn, vh)
    o = o.transpose(0, 2, 1, 3).reshape(B, T, inner)
    return x + o @ wo + bo


def _ref_ff(x, g, b, w1, b1, w2, b2):
    xn = _layernorm(x, g, b)
    h = _gelu_exact(xn @ w1 + b1)
    return x + h @ w2 + b2


def transformer_decoder_ref(x, memory, p, *, n_head, head_dim):
    depth = p["sa_wq"].shape[0]
    f32 = lambda a: a.astype(jnp.float32)
    for l in range(depth):
        x = _ref_attn(x, None, p["sa_g"][l], p["sa_b"][l], f32(p["sa_wq"][l]),
                      f32(p["sa_wkv"][l]), f32(p["sa_wo"][l]), p["sa_bo"][l],
                      n_head, head_dim)
        x = _ref_attn(x, memory, p["ca_g"][l], p["ca_b"][l], f32(p["ca_wq"][l]),
                      f32(p["ca_wkv"][l]), f32(p["ca_wo"][l]), p["ca_bo"][l],
                      n_head, head_dim)
        x = _ref_ff(x, p["ff_g"][l], p["ff_b"][l], f32(p["ff_w1"][l]),
                    p["ff_b1"][l], f32(p["ff_w2"][l]), p["ff_b2"][l])
    return x


# ----------------------------------- main ------------------------------------

if __name__ == "__main__":
    # Lane-dense small shapes: D, head_dim, inner, ff_dim are multiples of 128.
    B, T, S, D = 2, 8, 8, 128
    depth, n_head, head_dim, ff_dim = 2, 2, 128, 256

    key = jax.random.PRNGKey(0)
    kx, km, kp = jax.random.split(key, 3)
    x = jax.random.normal(kx, (B, T, D), dtype=jnp.float32)
    memory = jax.random.normal(km, (B, S, D), dtype=jnp.float32)
    params = init_params(kp, D, depth, n_head, head_dim, ff_dim)

    out = transformer_decoder(x, memory, params, n_head=n_head, head_dim=head_dim)
    out = jax.block_until_ready(out)

    ref = transformer_decoder_ref(x, memory, params, n_head=n_head, head_dim=head_dim)
    ref = jax.block_until_ready(ref)

    assert out.shape == (B, T, D)
    # Tolerance covers bf16 matmul operands (kernel) vs f32 operands (reference);
    # accumulation is f32 everywhere and the softmax reciprocal is exact.
    err = float(jnp.max(jnp.abs(out - ref)))
    assert jnp.allclose(out, ref, atol=5e-2, rtol=5e-2), err
    print("KERNEL_OK")
</pallas_src>

<mosaic_0001>
module attributes {stable_mosaic.version = 11 : i64} {
  func.func @decoder_layer_kernel(%arg0: i32, %arg1: memref<16x128xf32, #tpu.memory_space<vmem>>, %arg2: memref<16x128xf32, #tpu.memory_space<vmem>>, %arg3: memref<1x1x128xf32, #tpu.memory_space<vmem>>, %arg4: memref<1x1x128xf32, #tpu.memory_space<vmem>>, %arg5: memref<1x128x256xbf16, #tpu.memory_space<vmem>>, %arg6: memref<1x128x512xbf16, #tpu.memory_space<vmem>>, %arg7: memref<1x256x128xbf16, #tpu.memory_space<vmem>>, %arg8: memref<1x1x128xf32, #tpu.memory_space<vmem>>, %arg9: memref<1x1x128xf32, #tpu.memory_space<vmem>>, %arg10: memref<1x1x128xf32, #tpu.memory_space<vmem>>, %arg11: memref<1x128x256xbf16, #tpu.memory_space<vmem>>, %arg12: memref<1x128x512xbf16, #tpu.memory_space<vmem>>, %arg13: memref<1x256x128xbf16, #tpu.memory_space<vmem>>, %arg14: memref<1x1x128xf32, #tpu.memory_space<vmem>>, %arg15: memref<1x1x128xf32, #tpu.memory_space<vmem>>, %arg16: memref<1x1x128xf32, #tpu.memory_space<vmem>>, %arg17: memref<1x128x256xbf16, #tpu.memory_space<vmem>>, %arg18: memref<1x1x256xf32, #tpu.memory_space<vmem>>, %arg19: memref<1x256x128xbf16, #tpu.memory_space<vmem>>, %arg20: memref<1x1x128xf32, #tpu.memory_space<vmem>>, %arg21: memref<16x128xf32, #tpu.memory_space<vmem>>) attributes {dimension_semantics = [#tpu.dimension_semantics<arbitrary>], iteration_bounds = array<i64: 2>, scalar_prefetch = 0 : i64, scratch_operands = 0 : i64, tpu.core_type = #tpu.core_type<tc>, window_params = [{pipeline_mode = #tpu.pipeline_mode<synchronous>, transform_indices = @transform_0, window_bounds = array<i64: 16, 128>}, {pipeline_mode = #tpu.pipeline_mode<synchronous>, transform_indices = @transform_1, window_bounds = array<i64: 16, 128>}, {transform_indices = @transform_2, window_bounds = array<i64: 1, 1, 128>}, {transform_indices = @transform_3, window_bounds = array<i64: 1, 1, 128>}, {transform_indices = @transform_4, window_bounds = array<i64: 1, 128, 256>}, {transform_indices = @transform_5, window_bounds = array<i64: 1, 128, 512>}, {transform_indices = @transform_6, window_bounds = array<i64: 1, 256, 128>}, {transform_indices = @transform_7, window_bounds = array<i64: 1, 1, 128>}, {transform_indices = @transform_8, window_bounds = array<i64: 1, 1, 128>}, {transform_indices = @transform_9, window_bounds = array<i64: 1, 1, 128>}, {transform_indices = @transform_10, window_bounds = array<i64: 1, 128, 256>}, {transform_indices = @transform_11, window_bounds = array<i64: 1, 128, 512>}, {transform_indices = @transform_12, window_bounds = array<i64: 1, 256, 128>}, {transform_indices = @transform_13, window_bounds = array<i64: 1, 1, 128>}, {transform_indices = @transform_14, window_bounds = array<i64: 1, 1, 128>}, {transform_indices = @transform_15, window_bounds = array<i64: 1, 1, 128>}, {transform_indices = @transform_16, window_bounds = array<i64: 1, 128, 256>}, {transform_indices = @transform_17, window_bounds = array<i64: 1, 1, 256>}, {transform_indices = @transform_18, window_bounds = array<i64: 1, 256, 128>}, {transform_indices = @transform_19, window_bounds = array<i64: 1, 1, 128>}, {pipeline_mode = #tpu.pipeline_mode<synchronous>, transform_indices = @transform_20, window_bounds = array<i64: 16, 128>}]} {
    %c0_i32 = arith.constant 0 : i32
    %0 = arith.cmpi eq, %arg0, %c0_i32 : i32
    %1 = arith.extui %0 : i1 to i32
    %c0_i32_0 = arith.constant 0 : i32
    %2 = arith.cmpi ne, %1, %c0_i32_0 : i32
    scf.if %2 {
      %c0_95 = arith.constant 0 : index
      %c0_96 = arith.constant 0 : index
      %221 = vector.load %arg1[%c0_95, %c0_96] : memref<16x128xf32, #tpu.memory_space<vmem>>, vector<16x128xf32>
      %c0_97 = arith.constant 0 : index
      %c0_98 = arith.constant 0 : index
      %222 = vector.load %arg21[%c0_97, %c0_98] : memref<16x128xf32, #tpu.memory_space<vmem>>, vector<16x128xf32>
      tpu.vector_store %arg21[%c0_97, %c0_98], %221 {strides = array<i32>} : memref<16x128xf32, #tpu.memory_space<vmem>>, vector<16x128xf32>,
    } else {
    }
    %c0 = arith.constant 0 : index
    %c0_1 = arith.constant 0 : index
    %3 = vector.load %arg21[%c0, %c0_1] : memref<16x128xf32, #tpu.memory_space<vmem>>, vector<16x128xf32>
    %c0_2 = arith.constant 0 : index
    %c0_3 = arith.constant 0 : index
    %c0_4 = arith.constant 0 : index
    %4 = vector.load %arg3[%c0_2, %c0_3, %c0_4] : memref<1x1x128xf32, #tpu.memory_space<vmem>>, vector<1x1x128xf32>
    %5 = vector.shape_cast %4 : vector<1x1x128xf32> to vector<1x128xf32>
    %c0_5 = arith.constant 0 : index
    %c0_6 = arith.constant 0 : index
    %c0_7 = arith.constant 0 : index
    %6 = vector.load %arg4[%c0_5, %c0_6, %c0_7] : memref<1x1x128xf32, #tpu.memory_space<vmem>>, vector<1x1x128xf32>
    %7 = vector.shape_cast %6 : vector<1x1x128xf32> to vector<1x128xf32>
    %cst = arith.constant dense<0.000000e+00> : vector<16xf32>
    %8 = vector.multi_reduction <add>, %3, %cst [1] : vector<16x128xf32> to vector<16xf32>
    %9 = vector.shape_cast %8 : vector<16xf32> to vector<16x1xf32>
    %cst_8 = arith.constant 1.280000e+02 : f32
    %10 = vector.broadcast %cst_8 : f32 to vector<16x1xf32>
    %11 = arith.divf %9, %10 : vector<16x1xf32>
    %12 = vector.broadcast %11 : vector<16x1xf32> to vector<16x128xf32>
    %13 = arith.subf %3, %12 : vector<16x128xf32>
    %14 = arith.mulf %13, %13 : vector<16x128xf32>
    %cst_9 = arith.constant dense<0.000000e+00> : vector<16xf32>
    %15 = vector.multi_reduction <add>, %14, %cst_9 [1] : vector<16x128xf32> to vector<16xf32>
    %16 = vector.shape_cast %15 : vector<16xf32> to vector<16x1xf32>
    %cst_10 = arith.constant 1.280000e+02 : f32
    %17 = vector.broadcast %cst_10 : f32 to vector<16x1xf32>
    %18 = arith.divf %16, %17 : vector<16x1xf32>
    %19 = vector.broadcast %11 : vector<16x1xf32> to vector<16x128xf32>
    %20 = arith.subf %3, %19 : vector<16x128xf32>
    %cst_11 = arith.constant 9.99999974E-6 : f32
    %21 = vector.broadcast %cst_11 : f32 to vector<16x1xf32>
    %22 = arith.addf %18, %21 : vector<16x1xf32>
    %23 = math.rsqrt %22 : vector<16x1xf32>
    %24 = vector.broadcast %23 : vector<16x1xf32> to vector<16x128xf32>
    %25 = arith.mulf %20, %24 : vector<16x128xf32>
    %26 = vector.broadcast %5 : vector<1x128xf32> to vector<16x128xf32>
    %27 = arith.mulf %25, %26 : vector<16x128xf32>
    %28 = vector.broadcast %7 : vector<1x128xf32> to vector<16x128xf32>
    %29 = arith.addf %27, %28 : vector<16x128xf32>
    %c0_12 = arith.constant 0 : index
    %c0_13 = arith.constant 0 : index
    %c0_14 = arith.constant 0 : index
    %30 = vector.load %arg5[%c0_12, %c0_13, %c0_14] : memref<1x128x256xbf16, #tpu.memory_space<vmem>>, vector<1x128x256xbf16>
    %31 = vector.shape_cast %30 : vector<1x128x256xbf16> to vector<128x256xbf16>
    %c0_15 = arith.constant 0 : index
    %c0_16 = arith.constant 0 : index
    %c0_17 = arith.constant 0 : index
    %32 = vector.load %arg6[%c0_15, %c0_16, %c0_17] : memref<1x128x512xbf16, #tpu.memory_space<vmem>>, vector<1x128x512xbf16>
    %33 = vector.shape_cast %32 : vector<1x128x512xbf16> to vector<128x512xbf16>
    %c0_18 = arith.constant 0 : index
    %c0_19 = arith.constant 0 : index
    %c0_20 = arith.constant 0 : index
    %34 = vector.load %arg7[%c0_18, %c0_19, %c0_20] : memref<1x256x128xbf16, #tpu.memory_space<vmem>>, vector<1x256x128xbf16>
    %35 = vector.shape_cast %34 : vector<1x256x128xbf16> to vector<256x128xbf16>
    %c0_21 = arith.constant 0 : index
    %c0_22 = arith.constant 0 : index
    %c0_23 = arith.constant 0 : index
    %36 = vector.load %arg8[%c0_21, %c0_22, %c0_23] : memref<1x1x128xf32, #tpu.memory_space<vmem>>, vector<1x1x128xf32>
    %37 = vector.shape_cast %36 : vector<1x1x128xf32> to vector<1x128xf32>
    %38 = arith.truncf %29 : vector<16x128xf32> to vector<16x128xbf16>
    %39 = arith.truncf %29 : vector<16x128xf32> to vector<16x128xbf16>
    %cst_24 = arith.constant dense<0.000000e+00> : vector<16x256xf32>
    %40 = tpu.matmul %38, %31, %cst_24 {dimension_numbers = #tpu.dot_dimension_numbers<[1], [0], [0], [1], [0, 0, 1, 1], [], []>} : vector<16x128xbf16>, vector<128x256xbf16>, vector<16x256xf32> -> vector<16x256xf32>
    %cst_25 = arith.constant 0.0883883461 : f32
    %41 = vector.broadcast %cst_25 : f32 to vector<16x256xf32>
    %42 = arith.mulf %40, %41 : vector<16x256xf32>
    %cst_26 = arith.constant dense<0.000000e+00> : vector<16x512xf32>
    %43 = tpu.matmul %39, %33, %cst_26 {dimension_numbers = #tpu.dot_dimension_numbers<[1], [0], [0], [1], [0, 0, 1, 1], [], []>} : vector<16x128xbf16>, vector<128x512xbf16>, vector<16x512xf32> -> vector<16x512xf32>
    %44 = vector.extract_strided_slice %43 {offsets = [0, 0], sizes = [16, 256], strides = [1, 1]} : vector<16x512xf32> to vector<16x256xf32>
    %45 = vector.extract_strided_slice %43 {offsets = [0, 256], sizes = [16, 256], strides = [1, 1]} : vector<16x512xf32> to vector<16x256xf32>
    %46 = vector.extract_strided_slice %42 {offsets = [0, 0], sizes = [16, 128], strides = [1, 1]} : vector<16x256xf32> to vector<16x128xf32>
    %47 = vector.shape_cast %46 : vector<16x128xf32> to vector<2x8x128xf32>
    %48 = vector.extract_strided_slice %42 {offsets = [0, 128], sizes = [16, 128], strides = [1, 1]} : vector<16x256xf32> to vector<16x128xf32>
    %49 = vector.shape_cast %48 : vector<16x128xf32> to vector<2x8x128xf32>
    %50 = tpu.concatenate %47, %49 in 0 : vector<2x8x128xf32>, vector<2x8x128xf32> -> vector<4x8x128xf32>
    %51 = arith.truncf %50 : vector<4x8x128xf32> to vector<4x8x128xbf16>
    %52 = vector.extract_strided_slice %44 {offsets = [0, 0], sizes = [16, 128], strides = [1, 1]} : vector<16x256xf32> to vector<16x128xf32>
    %53 = vector.shape_cast %52 : vector<16x128xf32> to vector<2x8x128xf32>
    %54 = vector.extract_strided_slice %44 {offsets = [0, 128], sizes = [16, 128], strides = [1, 1]} : vector<16x256xf32> to vector<16x128xf32>
    %55 = vector.shape_cast %54 : vector<16x128xf32> to vector<2x8x128xf32>
    %56 = tpu.concatenate %53, %55 in 0 : vector<2x8x128xf32>, vector<2x8x128xf32> -> vector<4x8x128xf32>
    %57 = arith.truncf %56 : vector<4x8x128xf32> to vector<4x8x128xbf16>
    %58 = vector.extract_strided_slice %45 {offsets = [0, 0], sizes = [16, 128], strides = [1, 1]} : vector<16x256xf32> to vector<16x128xf32>
    %59 = vector.shape_cast %58 : vector<16x128xf32> to vector<2x8x128xf32>
    %60 = vector.extract_strided_slice %45 {offsets = [0, 128], sizes = [16, 128], strides = [1, 1]} : vector<16x256xf32> to vector<16x128xf32>
    %61 = vector.shape_cast %60 : vector<16x128xf32> to vector<2x8x128xf32>
    %62 = tpu.concatenate %59, %61 in 0 : vector<2x8x128xf32>, vector<2x8x128xf32> -> vector<4x8x128xf32>
    %63 = arith.truncf %62 : vector<4x8x128xf32> to vector<4x8x128xbf16>
    "tpu.trace_start"() <{level = 10 : i32, message = "btd,bsd->bts"}> : () -> ()
    %cst_27 = arith.constant dense<0.000000e+00> : vector<4x8x8xf32>
    %64 = tpu.matmul %51, %57, %cst_27 {dimension_numbers = #tpu.dot_dimension_numbers<[2], [2], [1], [1], [0, 0, 0, 1, 1, 1], [0], [0]>} : vector<4x8x128xbf16>, vector<4x8x128xbf16>, vector<4x8x8xf32> -> vector<4x8x8xf32>
    "tpu.trace_stop"() : () -> ()
    %cst_28 = arith.constant dense<0xFF800000> : vector<4x8xf32>
    %65 = vector.multi_reduction <maximumf>, %64, %cst_28 [2] : vector<4x8x8xf32> to vector<4x8xf32>
    %66 = vector.shape_cast %65 : vector<4x8xf32> to vector<4x8x1xf32>
    %67 = vector.broadcast %66 : vector<4x8x1xf32> to vector<4x8x8xf32>
    %68 = arith.subf %64, %67 : vector<4x8x8xf32>
    %69 = math.exp %68 : vector<4x8x8xf32>
    %cst_29 = arith.constant dense<0.000000e+00> : vector<4x8xf32>
    %70 = vector.multi_reduction <add>, %69, %cst_29 [2] : vector<4x8x8xf32> to vector<4x8xf32>
    %71 = vector.shape_cast %70 : vector<4x8xf32> to vector<4x8x1xf32>
    %72 = vector.broadcast %71 : vector<4x8x1xf32> to vector<4x8x8xf32>
    %73 = arith.divf %69, %72 : vector<4x8x8xf32>
    %74 = arith.truncf %73 : vector<4x8x8xf32> to vector<4x8x8xbf16>
    "tpu.trace_start"() <{level = 10 : i32, message = "bts,bsd->btd"}> : () -> ()
    %cst_30 = arith.constant dense<0.000000e+00> : vector<4x8x128xf32>
    %75 = tpu.matmul %74, %63, %cst_30 {dimension_numbers = #tpu.dot_dimension_numbers<[2], [1], [1], [2], [0, 0, 0, 1, 1, 2], [0], [0]>} : vector<4x8x8xbf16>, vector<4x8x128xbf16>, vector<4x8x128xf32> -> vector<4x8x128xf32>
    "tpu.trace_stop"() : () -> ()
    %76 = vector.extract_strided_slice %75 {offsets = [0, 0, 0], sizes = [2, 8, 128], strides = [1, 1, 1]} : vector<4x8x128xf32> to vector<2x8x128xf32>
    %77 = vector.shape_cast %76 : vector<2x8x128xf32> to vector<16x128xf32>
    %78 = vector.extract_strided_slice %75 {offsets = [2, 0, 0], sizes = [2, 8, 128], strides = [1, 1, 1]} : vector<4x8x128xf32> to vector<2x8x128xf32>
    %79 = vector.shape_cast %78 : vector<2x8x128xf32> to vector<16x128xf32>
    %80 = tpu.concatenate %77, %79 in 1 : vector<16x128xf32>, vector<16x128xf32> -> vector<16x256xf32>
    %81 = arith.truncf %80 : vector<16x256xf32> to vector<16x256xbf16>
    %cst_31 = arith.constant dense<0.000000e+00> : vector<16x128xf32>
    %82 = tpu.matmul %81, %35, %cst_31 {dimension_numbers = #tpu.dot_dimension_numbers<[1], [0], [0], [1], [0, 0, 1, 1], [], []>} : vector<16x256xbf16>, vector<256x128xbf16>, vector<16x128xf32> -> vector<16x128xf32>
    %83 = vector.broadcast %37 : vector<1x128xf32> to vector<16x128xf32>
    %84 = arith.addf %82, %83 : vector<16x128xf32>
    %85 = arith.addf %3, %84 : vector<16x128xf32>
    %c0_32 = arith.constant 0 : index
    %c0_33 = arith.constant 0 : index
    %c0_34 = arith.constant 0 : index
    %86 = vector.load %arg9[%c0_32, %c0_33, %c0_34] : memref<1x1x128xf32, #tpu.memory_space<vmem>>, vector<1x1x128xf32>
    %87 = vector.shape_cast %86 : vector<1x1x128xf32> to vector<1x128xf32>
    %c0_35 = arith.constant 0 : index
    %c0_36 = arith.constant 0 : index
    %c0_37 = arith.constant 0 : index
    %88 = vector.load %arg10[%c0_35, %c0_36, %c0_37] : memref<1x1x128xf32, #tpu.memory_space<vmem>>, vector<1x1x128xf32>
    %89 = vector.shape_cast %88 : vector<1x1x128xf32> to vector<1x128xf32>
    %cst_38 = arith.constant dense<0.000000e+00> : vector<16xf32>
    %90 = vector.multi_reduction <add>, %85, %cst_38 [1] : vector<16x128xf32> to vector<16xf32>
    %91 = vector.shape_cast %90 : vector<16xf32> to vector<16x1xf32>
    %cst_39 = arith.constant 1.280000e+02 : f32
    %92 = vector.broadcast %cst_39 : f32 to vector<16x1xf32>
    %93 = arith.divf %91, %92 : vector<16x1xf32>
    %94 = vector.broadcast %93 : vector<16x1xf32> to vector<16x128xf32>
    %95 = arith.subf %85, %94 : vector<16x128xf32>
    %96 = arith.mulf %95, %95 : vector<16x128xf32>
    %cst_40 = arith.constant dense<0.000000e+00> : vector<16xf32>
    %97 = vector.multi_reduction <add>, %96, %cst_40 [1] : vector<16x128xf32> to vector<16xf32>
    %98 = vector.shape_cast %97 : vector<16xf32> to vector<16x1xf32>
    %cst_41 = arith.constant 1.280000e+02 : f32
    %99 = vector.broadcast %cst_41 : f32 to vector<16x1xf32>
    %100 = arith.divf %98, %99 : vector<16x1xf32>
    %101 = vector.broadcast %93 : vector<16x1xf32> to vector<16x128xf32>
    %102 = arith.subf %85, %101 : vector<16x128xf32>
    %cst_42 = arith.constant 9.99999974E-6 : f32
    %103 = vector.broadcast %cst_42 : f32 to vector<16x1xf32>
    %104 = arith.addf %100, %103 : vector<16x1xf32>
    %105 = math.rsqrt %104 : vector<16x1xf32>
    %106 = vector.broadcast %105 : vector<16x1xf32> to vector<16x128xf32>
    %107 = arith.mulf %102, %106 : vector<16x128xf32>
    %108 = vector.broadcast %87 : vector<1x128xf32> to vector<16x128xf32>
    %109 = arith.mulf %107, %108 : vector<16x128xf32>
    %110 = vector.broadcast %89 : vector<1x128xf32> to vector<16x128xf32>
    %111 = arith.addf %109, %110 : vector<16x128xf32>
    %c0_43 = arith.constant 0 : index
    %c0_44 = arith.constant 0 : index
    %112 = vector.load %arg2[%c0_43, %c0_44] : memref<16x128xf32, #tpu.memory_space<vmem>>, vector<16x128xf32>
    %c0_45 = arith.constant 0 : index
    %c0_46 = arith.constant 0 : index
    %c0_47 = arith.constant 0 : index
    %113 = vector.load %arg11[%c0_45, %c0_46, %c0_47] : memref<1x128x256xbf16, #tpu.memory_space<vmem>>, vector<1x128x256xbf16>
    %114 = vector.shape_cast %113 : vector<1x128x256xbf16> to vector<128x256xbf16>
    %c0_48 = arith.constant 0 : index
    %c0_49 = arith.constant 0 : index
    %c0_50 = arith.constant 0 : index
    %115 = vector.load %arg12[%c0_48, %c0_49, %c0_50] : memref<1x128x512xbf16, #tpu.memory_space<vmem>>, vector<1x128x512xbf16>
    %116 = vector.shape_cast %115 : vector<1x128x512xbf16> to vector<128x512xbf16>
    %c0_51 = arith.constant 0 : index
    %c0_52 = arith.constant 0 : index
    %c0_53 = arith.constant 0 : index
    %117 = vector.load %arg13[%c0_51, %c0_52, %c0_53] : memref<1x256x128xbf16, #tpu.memory_space<vmem>>, vector<1x256x128xbf16>
    %118 = vector.shape_cast %117 : vector<1x256x128xbf16> to vector<256x128xbf16>
    %c0_54 = arith.constant 0 : index
    %c0_55 = arith.constant 0 : index
    %c0_56 = arith.constant 0 : index
    %119 = vector.load %arg14[%c0_54, %c0_55, %c0_56] : memref<1x1x128xf32, #tpu.memory_space<vmem>>, vector<1x1x128xf32>
    %120 = vector.shape_cast %119 : vector<1x1x128xf32> to vector<1x128xf32>
    %121 = arith.truncf %111 : vector<16x128xf32> to vector<16x128xbf16>
    %122 = arith.truncf %112 : vector<16x128xf32> to vector<16x128xbf16>
    %cst_57 = arith.constant dense<0.000000e+00> : vector<16x256xf32>
    %123 = tpu.matmul %121, %114, %cst_57 {dimension_numbers = #tpu.dot_dimension_numbers<[1], [0], [0], [1], [0, 0, 1, 1], [], []>} : vector<16x128xbf16>, vector<128x256xbf16>, vector<16x256xf32> -> vector<16x256xf32>
    %cst_58 = arith.constant 0.0883883461 : f32
    %124 = vector.broadcast %cst_58 : f32 to vector<16x256xf32>
    %125 = arith.mulf %123, %124 : vector<16x256xf32>
    %cst_59 = arith.constant dense<0.000000e+00> : vector<16x512xf32>
    %126 = tpu.matmul %122, %116, %cst_59 {dimension_numbers = #tpu.dot_dimension_numbers<[1], [0], [0], [1], [0, 0, 1, 1], [], []>} : vector<16x128xbf16>, vector<128x512xbf16>, vector<16x512xf32> -> vector<16x512xf32>
    %127 = vector.extract_strided_slice %126 {offsets = [0, 0], sizes = [16, 256], strides = [1, 1]} : vector<16x512xf32> to vector<16x256xf32>
    %128 = vector.extract_strided_slice %126 {offsets = [0, 256], sizes = [16, 256], strides = [1, 1]} : vector<16x512xf32> to vector<16x256xf32>
    %129 = vector.extract_strided_slice %125 {offsets = [0, 0], sizes = [16, 128], strides = [1, 1]} : vector<16x256xf32> to vector<16x128xf32>
    %130 = vector.shape_cast %129 : vector<16x128xf32> to vector<2x8x128xf32>
    %131 = vector.extract_strided_slice %125 {offsets = [0, 128], sizes = [16, 128], strides = [1, 1]} : vector<16x256xf32> to vector<16x128xf32>
    %132 = vector.shape_cast %131 : vector<16x128xf32> to vector<2x8x128xf32>
    %133 = tpu.concatenate %130, %132 in 0 : vector<2x8x128xf32>, vector<2x8x128xf32> -> vector<4x8x128xf32>
    %134 = arith.truncf %133 : vector<4x8x128xf32> to vector<4x8x128xbf16>
    %135 = vector.extract_strided_slice %127 {offsets = [0, 0], sizes = [16, 128], strides = [1, 1]} : vector<16x256xf32> to vector<16x128xf32>
    %136 = vector.shape_cast %135 : vector<16x128xf32> to vector<2x8x128xf32>
    %137 = vector.extract_strided_slice %127 {offsets = [0, 128], sizes = [16, 128], strides = [1, 1]} : vector<16x256xf32> to vector<16x128xf32>
    %138 = vector.shape_cast %137 : vector<16x128xf32> to vector<2x8x128xf32>
    %139 = tpu.concatenate %136, %138 in 0 : vector<2x8x128xf32>, vector<2x8x128xf32> -> vector<4x8x128xf32>
    %140 = arith.truncf %139 : vector<4x8x128xf32> to vector<4x8x128xbf16>
    %141 = vector.extract_strided_slice %128 {offsets = [0, 0], sizes = [16, 128], strides = [1, 1]} : vector<16x256xf32> to vector<16x128xf32>
    %142 = vector.shape_cast %141 : vector<16x128xf32> to vector<2x8x128xf32>
    %143 = vector.extract_strided_slice %128 {offsets = [0, 128], sizes = [16, 128], strides = [1, 1]} : vector<16x256xf32> to vector<16x128xf32>
    %144 = vector.shape_cast %143 : vector<16x128xf32> to vector<2x8x128xf32>
    %145 = tpu.concatenate %142, %144 in 0 : vector<2x8x128xf32>, vector<2x8x128xf32> -> vector<4x8x128xf32>
    %146 = arith.truncf %145 : vector<4x8x128xf32> to vector<4x8x128xbf16>
    "tpu.trace_start"() <{level = 10 : i32, message = "btd,bsd->bts"}> : () -> ()
    %cst_60 = arith.constant dense<0.000000e+00> : vector<4x8x8xf32>
    %147 = tpu.matmul %134, %140, %cst_60 {dimension_numbers = #tpu.dot_dimension_numbers<[2], [2], [1], [1], [0, 0, 0, 1, 1, 1], [0], [0]>} : vector<4x8x128xbf16>, vector<4x8x128xbf16>, vector<4x8x8xf32> -> vector<4x8x8xf32>
    "tpu.trace_stop"() : () -> ()
    %cst_61 = arith.constant dense<0xFF800000> : vector<4x8xf32>
    %148 = vector.multi_reduction <maximumf>, %147, %cst_61 [2] : vector<4x8x8xf32> to vector<4x8xf32>
    %149 = vector.shape_cast %148 : vector<4x8xf32> to vector<4x8x1xf32>
    %150 = vector.broadcast %149 : vector<4x8x1xf32> to vector<4x8x8xf32>
    %151 = arith.subf %147, %150 : vector<4x8x8xf32>
    %152 = math.exp %151 : vector<4x8x8xf32>
    %cst_62 = arith.constant dense<0.000000e+00> : vector<4x8xf32>
    %153 = vector.multi_reduction <add>, %152, %cst_62 [2] : vector<4x8x8xf32> to vector<4x8xf32>
    %154 = vector.shape_cast %153 : vector<4x8xf32> to vector<4x8x1xf32>
    %155 = vector.broadcast %154 : vector<4x8x1xf32> to vector<4x8x8xf32>
    %156 = arith.divf %152, %155 : vector<4x8x8xf32>
    %157 = arith.truncf %156 : vector<4x8x8xf32> to vector<4x8x8xbf16>
    "tpu.trace_start"() <{level = 10 : i32, message = "bts,bsd->btd"}> : () -> ()
    %cst_63 = arith.constant dense<0.000000e+00> : vector<4x8x128xf32>
    %158 = tpu.matmul %157, %146, %cst_63 {dimension_numbers = #tpu.dot_dimension_numbers<[2], [1], [1], [2], [0, 0, 0, 1, 1, 2], [0], [0]>} : vector<4x8x8xbf16>, vector<4x8x128xbf16>, vector<4x8x128xf32> -> vector<4x8x128xf32>
    "tpu.trace_stop"() : () -> ()
    %159 = vector.extract_strided_slice %158 {offsets = [0, 0, 0], sizes = [2, 8, 128], strides = [1, 1, 1]} : vector<4x8x128xf32> to vector<2x8x128xf32>
    %160 = vector.shape_cast %159 : vector<2x8x128xf32> to vector<16x128xf32>
    %161 = vector.extract_strided_slice %158 {offsets = [2, 0, 0], sizes = [2, 8, 128], strides = [1, 1, 1]} : vector<4x8x128xf32> to vector<2x8x128xf32>
    %162 = vector.shape_cast %161 : vector<2x8x128xf32> to vector<16x128xf32>
    %163 = tpu.concatenate %160, %162 in 1 : vector<16x128xf32>, vector<16x128xf32> -> vector<16x256xf32>
    %164 = arith.truncf %163 : vector<16x256xf32> to vector<16x256xbf16>
    %cst_64 = arith.constant dense<0.000000e+00> : vector<16x128xf32>
    %165 = tpu.matmul %164, %118, %cst_64 {dimension_numbers = #tpu.dot_dimension_numbers<[1], [0], [0], [1], [0, 0, 1, 1], [], []>} : vector<16x256xbf16>, vector<256x128xbf16>, vector<16x128xf32> -> vector<16x128xf32>
    %166 = vector.broadcast %120 : vector<1x128xf32> to vector<16x128xf32>
    %167 = arith.addf %165, %166 : vector<16x128xf32>
    %168 = arith.addf %85, %167 : vector<16x128xf32>
    %c0_65 = arith.constant 0 : index
    %c0_66 = arith.constant 0 : index
    %c0_67 = arith.constant 0 : index
    %169 = vector.load %arg15[%c0_65, %c0_66, %c0_67] : memref<1x1x128xf32, #tpu.memory_space<vmem>>, vector<1x1x128xf32>
    %170 = vector.shape_cast %169 : vector<1x1x128xf32> to vector<1x128xf32>
    %c0_68 = arith.constant 0 : index
    %c0_69 = arith.constant 0 : index
    %c0_70 = arith.constant 0 : index
    %171 = vector.load %arg16[%c0_68, %c0_69, %c0_70] : memref<1x1x128xf32, #tpu.memory_space<vmem>>, vector<1x1x128xf32>
    %172 = vector.shape_cast %171 : vector<1x1x128xf32> to vector<1x128xf32>
    %cst_71 = arith.constant dense<0.000000e+00> : vector<16xf32>
    %173 = vector.multi_reduction <add>, %168, %cst_71 [1] : vector<16x128xf32> to vector<16xf32>
    %174 = vector.shape_cast %173 : vector<16xf32> to vector<16x1xf32>
    %cst_72 = arith.constant 1.280000e+02 : f32
    %175 = vector.broadcast %cst_72 : f32 to vector<16x1xf32>
    %176 = arith.divf %174, %175 : vector<16x1xf32>
    %177 = vector.broadcast %176 : vector<16x1xf32> to vector<16x128xf32>
    %178 = arith.subf %168, %177 : vector<16x128xf32>
    %179 = arith.mulf %178, %178 : vector<16x128xf32>
    %cst_73 = arith.constant dense<0.000000e+00> : vector<16xf32>
    %180 = vector.multi_reduction <add>, %179, %cst_73 [1] : vector<16x128xf32> to vector<16xf32>
    %181 = vector.shape_cast %180 : vector<16xf32> to vector<16x1xf32>
    %cst_74 = arith.constant 1.280000e+02 : f32
    %182 = vector.broadcast %cst_74 : f32 to vector<16x1xf32>
    %183 = arith.divf %181, %182 : vector<16x1xf32>
    %184 = vector.broadcast %176 : vector<16x1xf32> to vector<16x128xf32>
    %185 = arith.subf %168, %184 : vector<16x128xf32>
    %cst_75 = arith.constant 9.99999974E-6 : f32
    %186 = vector.broadcast %cst_75 : f32 to vector<16x1xf32>
    %187 = arith.addf %183, %186 : vector<16x1xf32>
    %188 = math.rsqrt %187 : vector<16x1xf32>
    %189 = vector.broadcast %188 : vector<16x1xf32> to vector<16x128xf32>
    %190 = arith.mulf %185, %189 : vector<16x128xf32>
    %191 = vector.broadcast %170 : vector<1x128xf32> to vector<16x128xf32>
    %192 = arith.mulf %190, %191 : vector<16x128xf32>
    %193 = vector.broadcast %172 : vector<1x128xf32> to vector<16x128xf32>
    %194 = arith.addf %192, %193 : vector<16x128xf32>
    %195 = arith.truncf %194 : vector<16x128xf32> to vector<16x128xbf16>
    %c0_76 = arith.constant 0 : index
    %c0_77 = arith.constant 0 : index
    %c0_78 = arith.constant 0 : index
    %196 = vector.load %arg17[%c0_76, %c0_77, %c0_78] : memref<1x128x256xbf16, #tpu.memory_space<vmem>>, vector<1x128x256xbf16>
    %197 = vector.shape_cast %196 : vector<1x128x256xbf16> to vector<128x256xbf16>
    %cst_79 = arith.constant dense<0.000000e+00> : vector<16x256xf32>
    %198 = tpu.matmul %195, %197, %cst_79 {dimension_numbers = #tpu.dot_dimension_numbers<[1], [0], [0], [1], [0, 0, 1, 1], [], []>} : vector<16x128xbf16>, vector<128x256xbf16>, vector<16x256xf32> -> vector<16x256xf32>
    %c0_80 = arith.constant 0 : index
    %c0_81 = arith.constant 0 : index
    %c0_82 = arith.constant 0 : index
    %199 = vector.load %arg18[%c0_80, %c0_81, %c0_82] : memref<1x1x256xf32, #tpu.memory_space<vmem>>, vector<1x1x256xf32>
    %200 = vector.shape_cast %199 : vector<1x1x256xf32> to vector<1x256xf32>
    %201 = vector.broadcast %200 : vector<1x256xf32> to vector<16x256xf32>
    %202 = arith.addf %198, %201 : vector<16x256xf32>
    %cst_83 = arith.constant 5.000000e-01 : f32
    %203 = vector.broadcast %cst_83 : f32 to vector<16x256xf32>
    %204 = arith.mulf %203, %202 : vector<16x256xf32>
    %cst_84 = arith.constant 0.707106769 : f32
    %205 = vector.broadcast %cst_84 : f32 to vector<16x256xf32>
    %206 = arith.mulf %202, %205 : vector<16x256xf32>
    %207 = math.erf %206 : vector<16x256xf32>
    %cst_85 = arith.constant 1.000000e+00 : f32
    %208 = vector.broadcast %cst_85 : f32 to vector<16x256xf32>
    %209 = arith.addf %208, %207 : vector<16x256xf32>
    %210 = arith.mulf %204, %209 : vector<16x256xf32>
    %211 = arith.truncf %210 : vector<16x256xf32> to vector<16x256xbf16>
    %c0_86 = arith.constant 0 : index
    %c0_87 = arith.constant 0 : index
    %c0_88 = arith.constant 0 : index
    %212 = vector.load %arg19[%c0_86, %c0_87, %c0_88] : memref<1x256x128xbf16, #tpu.memory_space<vmem>>, vector<1x256x128xbf16>
    %213 = vector.shape_cast %212 : vector<1x256x128xbf16> to vector<256x128xbf16>
    %cst_89 = arith.constant dense<0.000000e+00> : vector<16x128xf32>
    %214 = tpu.matmul %211, %213, %cst_89 {dimension_numbers = #tpu.dot_dimension_numbers<[1], [0], [0], [1], [0, 0, 1, 1], [], []>} : vector<16x256xbf16>, vector<256x128xbf16>, vector<16x128xf32> -> vector<16x128xf32>
    %215 = arith.addf %168, %214 : vector<16x128xf32>
    %c0_90 = arith.constant 0 : index
    %c0_91 = arith.constant 0 : index
    %c0_92 = arith.constant 0 : index
    %216 = vector.load %arg20[%c0_90, %c0_91, %c0_92] : memref<1x1x128xf32, #tpu.memory_space<vmem>>, vector<1x1x128xf32>
    %217 = vector.shape_cast %216 : vector<1x1x128xf32> to vector<1x128xf32>
    %218 = vector.broadcast %217 : vector<1x128xf32> to vector<16x128xf32>
    %219 = arith.addf %215, %218 : vector<16x128xf32>
    %c0_93 = arith.constant 0 : index
    %c0_94 = arith.constant 0 : index
    %220 = vector.load %arg21[%c0_93, %c0_94] : memref<16x128xf32, #tpu.memory_space<vmem>>, vector<16x128xf32>
    tpu.vector_store %arg21[%c0_93, %c0_94], %219 {strides = array<i32>} : memref<16x128xf32, #tpu.memory_space<vmem>>, vector<16x128xf32>,
    return
  }
  func.func @transform_0(%arg0: i32) -> (i32, i32) {
    %c0_i32 = arith.constant 0 : i32
    %c0_i32_0 = arith.constant 0 : i32
    %c0_i32_1 = arith.constant 0 : i32
    return %c0_i32, %c0_i32_0 : i32, i32
  }
  func.func @transform_1(%arg0: i32) -> (i32, i32) {
    %c0_i32 = arith.constant 0 : i32
    %c0_i32_0 = arith.constant 0 : i32
    %c0_i32_1 = arith.constant 0 : i32
    return %c0_i32, %c0_i32_0 : i32, i32
  }
  func.func @transform_2(%arg0: i32) -> (i32, i32, i32) {
    %c0_i32 = arith.constant 0 : i32
    %c0_i32_0 = arith.constant 0 : i32
    %c0_i32_1 = arith.constant 0 : i32
    return %arg0, %c0_i32, %c0_i32_0 : i32, i32, i32
  }
  func.func @transform_3(%arg0: i32) -> (i32, i32, i32) {
    %c0_i32 = arith.constant 0 : i32
    %c0_i32_0 = arith.constant 0 : i32
    %c0_i32_1 = arith.constant 0 : i32
    return %arg0, %c0_i32, %c0_i32_0 : i32, i32, i32
  }
  func.func @transform_4(%arg0: i32) -> (i32, i32, i32) {
    %c0_i32 = arith.constant 0 : i32
    %c0_i32_0 = arith.constant 0 : i32
    %c0_i32_1 = arith.constant 0 : i32
    return %arg0, %c0_i32, %c0_i32_0 : i32, i32, i32
  }
  func.func @transform_5(%arg0: i32) -> (i32, i32, i32) {
    %c0_i32 = arith.constant 0 : i32
    %c0_i32_0 = arith.constant 0 : i32
    %c0_i32_1 = arith.constant 0 : i32
    return %arg0, %c0_i32, %c0_i32_0 : i32, i32, i32
  }
  func.func @transform_6(%arg0: i32) -> (i32, i32, i32) {
    %c0_i32 = arith.constant 0 : i32
    %c0_i32_0 = arith.constant 0 : i32
    %c0_i32_1 = arith.constant 0 : i32
    return %arg0, %c0_i32, %c0_i32_0 : i32, i32, i32
  }
  func.func @transform_7(%arg0: i32) -> (i32, i32, i32) {
    %c0_i32 = arith.constant 0 : i32
    %c0_i32_0 = arith.constant 0 : i32
    %c0_i32_1 = arith.constant 0 : i32
    return %arg0, %c0_i32, %c0_i32_0 : i32, i32, i32
  }
  func.func @transform_8(%arg0: i32) -> (i32, i32, i32) {
    %c0_i32 = arith.constant 0 : i32
    %c0_i32_0 = arith.constant 0 : i32
    %c0_i32_1 = arith.constant 0 : i32
    return %arg0, %c0_i32, %c0_i32_0 : i32, i32, i32
  }
  func.func @transform_9(%arg0: i32) -> (i32, i32, i32) {
    %c0_i32 = arith.constant 0 : i32
    %c0_i32_0 = arith.constant 0 : i32
    %c0_i32_1 = arith.constant 0 : i32
    return %arg0, %c0_i32, %c0_i32_0 : i32, i32, i32
  }
  func.func @transform_10(%arg0: i32) -> (i32, i32, i32) {
    %c0_i32 = arith.constant 0 : i32
    %c0_i32_0 = arith.constant 0 : i32
    %c0_i32_1 = arith.constant 0 : i32
    return %arg0, %c0_i32, %c0_i32_0 : i32, i32, i32
  }
  func.func @transform_11(%arg0: i32) -> (i32, i32, i32) {
    %c0_i32 = arith.constant 0 : i32
    %c0_i32_0 = arith.constant 0 : i32
    %c0_i32_1 = arith.constant 0 : i32
    return %arg0, %c0_i32, %c0_i32_0 : i32, i32, i32
  }
  func.func @transform_12(%arg0: i32) -> (i32, i32, i32) {
    %c0_i32 = arith.constant 0 : i32
    %c0_i32_0 = arith.constant 0 : i32
    %c0_i32_1 = arith.constant 0 : i32
    return %arg0, %c0_i32, %c0_i32_0 : i32, i32, i32
  }
  func.func @transform_13(%arg0: i32) -> (i32, i32, i32) {
    %c0_i32 = arith.constant 0 : i32
    %c0_i32_0 = arith.constant 0 : i32
    %c0_i32_1 = arith.constant 0 : i32
    return %arg0, %c0_i32, %c0_i32_0 : i32, i32, i32
  }
  func.func @transform_14(%arg0: i32) -> (i32, i32, i32) {
    %c0_i32 = arith.constant 0 : i32
    %c0_i32_0 = arith.constant 0 : i32
    %c0_i32_1 = arith.constant 0 : i32
    return %arg0, %c0_i32, %c0_i32_0 : i32, i32, i32
  }
  func.func @transform_15(%arg0: i32) -> (i32, i32, i32) {
    %c0_i32 = arith.constant 0 : i32
    %c0_i32_0 = arith.constant 0 : i32
    %c0_i32_1 = arith.constant 0 : i32
    return %arg0, %c0_i32, %c0_i32_0 : i32, i32, i32
  }
  func.func @transform_16(%arg0: i32) -> (i32, i32, i32) {
    %c0_i32 = arith.constant 0 : i32
    %c0_i32_0 = arith.constant 0 : i32
    %c0_i32_1 = arith.constant 0 : i32
    return %arg0, %c0_i32, %c0_i32_0 : i32, i32, i32
  }
  func.func @transform_17(%arg0: i32) -> (i32, i32, i32) {
    %c0_i32 = arith.constant 0 : i32
    %c0_i32_0 = arith.constant 0 : i32
    %c0_i32_1 = arith.constant 0 : i32
    return %arg0, %c0_i32, %c0_i32_0 : i32, i32, i32
  }
  func.func @transform_18(%arg0: i32) -> (i32, i32, i32) {
    %c0_i32 = arith.constant 0 : i32
    %c0_i32_0 = arith.constant 0 : i32
    %c0_i32_1 = arith.constant 0 : i32
    return %arg0, %c0_i32, %c0_i32_0 : i32, i32, i32
  }
  func.func @transform_19(%arg0: i32) -> (i32, i32, i32) {
    %c0_i32 = arith.constant 0 : i32
    %c0_i32_0 = arith.constant 0 : i32
    %c0_i32_1 = arith.constant 0 : i32
    return %arg0, %c0_i32, %c0_i32_0 : i32, i32, i32
  }
  func.func @transform_20(%arg0: i32) -> (i32, i32) {
    %c0_i32 = arith.constant 0 : i32
    %c0_i32_0 = arith.constant 0 : i32
    %c0_i32_1 = arith.constant 0 : i32
    return %c0_i32, %c0_i32_0 : i32, i32
  }
}

</mosaic_0001>

<llo_original>
// kernel: tpu_custom_call.1
$region0: #{tpu_custom_call.1}
  #allocation0 [shape = 'u32[]', space=smem, size = 0x4, offset = 0x4, fixed_abs, tag = 'smem constant byte address 0x4 - core index']
  #allocation1 [shape = 'u32[144,128]{1,0:T(1,128)}', space=vmem, size = 0x12000, scoped, tag = 'internal scratch']
  %s0 = inlined_call_operand.hbm [shape: f32[16,128], index: 0, kind: input, shape index: {}, may-alias: {0,20}]
  %s1 = inlined_call_operand.vmem [shape: f32[16,128], index: 1, kind: input, shape index: {}]
  %s2 = inlined_call_operand.vmem [shape: f32[2,1,128], index: 2, kind: input, shape index: {}]
  %s3 = inlined_call_operand.vmem [shape: f32[2,1,128], index: 3, kind: input, shape index: {}]
  %s4 = inlined_call_operand.hbm [shape: bf16[2,128,256], index: 4, kind: input, shape index: {}]
  %s5 = inlined_call_operand.hbm [shape: bf16[2,128,512], index: 5, kind: input, shape index: {}]
  %s6 = inlined_call_operand.hbm [shape: bf16[2,256,128], index: 6, kind: input, shape index: {}]
  %s7 = inlined_call_operand.vmem [shape: f32[2,1,128], index: 7, kind: input, shape index: {}]
  %s8 = inlined_call_operand.vmem [shape: f32[2,1,128], index: 8, kind: input, shape index: {}]
  %s9 = inlined_call_operand.vmem [shape: f32[2,1,128], index: 9, kind: input, shape index: {}]
  %s10 = inlined_call_operand.hbm [shape: bf16[2,128,256], index: 10, kind: input, shape index: {}]
  %s11 = inlined_call_operand.hbm [shape: bf16[2,128,512], index: 11, kind: input, shape index: {}]
  %s12 = inlined_call_operand.hbm [shape: bf16[2,256,128], index: 12, kind: input, shape index: {}]
  %s13 = inlined_call_operand.vmem [shape: f32[2,1,128], index: 13, kind: input, shape index: {}]
  %s14 = inlined_call_operand.vmem [shape: f32[2,1,128], index: 14, kind: input, shape index: {}]
  %s15 = inlined_call_operand.vmem [shape: f32[2,1,128], index: 15, kind: input, shape index: {}]
  %s16 = inlined_call_operand.hbm [shape: bf16[2,128,256], index: 16, kind: input, shape index: {}]
  %s17 = inlined_call_operand.vmem [shape: f32[2,1,256], index: 17, kind: input, shape index: {}]
  %s18 = inlined_call_operand.hbm [shape: bf16[2,256,128], index: 18, kind: input, shape index: {}]
  %s19 = inlined_call_operand.vmem [shape: f32[2,1,128], index: 19, kind: input, shape index: {}]
  %s20 = inlined_call_operand.hbm [shape: f32[16,128], index: 20, kind: output, shape index: {}, may-alias: {0,20}]
  %s21 = sld [smem:[#allocation0]]
  $region153: #{tpu_custom_call.1} parent=0
    _
  %s23 = ssub.s32 1, %s21
  %s24 = scalar_select 0, %s23, %s21
  $region1: #{tpu_custom_call.1} parent=0
    #allocation2 [shape = 'u8[8192]{0}', space=vmem, size = 0x2000, scoped, tag = 'input window, operand 0, single buffered']
    #allocation3 [shape = 's32[2]{0}', space=sflag, size = 0x8, scoped, tag = 'scoped memory for tpu_custom_call.1']
    #allocation4 [shape = 's32[2]{0}', space=sflag, size = 0x8, scoped, tag = 'scoped memory for tpu_custom_call.1']
    #allocation5 [shape = 'u8[131072]{0}', space=vmem, size = 0x20000, scoped, tag = 'input window, operand 4']
    #allocation6 [shape = 's32[2]{0}', space=sflag, size = 0x8, scoped, tag = 'scoped memory for tpu_custom_call.1']
    #allocation7 [shape = 'u8[262144]{0}', space=vmem, size = 0x40000, scoped, tag = 'input window, operand 5']
    #allocation8 [shape = 'u8[131072]{0}', space=vmem, size = 0x20000, scoped, tag = 'input window, operand 6']
    #allocation9 [shape = 's32[2]{0}', space=sflag, size = 0x8, scoped, tag = 'scoped memory for tpu_custom_call.1']
    #allocation10 [shape = 'u8[131072]{0}', space=vmem, size = 0x20000, scoped, tag = 'input window, operand 10']
    #allocation11 [shape = 'u8[262144]{0}', space=vmem, size = 0x40000, scoped, tag = 'input window, operand 11']
    #allocation12 [shape = 's32[2]{0}', space=sflag, size = 0x8, scoped, tag = 'scoped memory for tpu_custom_call.1']
    #allocation13 [shape = 'u8[131072]{0}', space=vmem, size = 0x20000, scoped, tag = 'input window, operand 12']
    #allocation14 [shape = 'u8[131072]{0}', space=vmem, size = 0x20000, scoped, tag = 'input window, operand 16']
    #allocation15 [shape = 's32[2]{0}', space=sflag, size = 0x8, scoped, tag = 'scoped memory for tpu_custom_call.1']
    #allocation16 [shape = 'u8[131072]{0}', space=vmem, size = 0x20000, scoped, tag = 'input window, operand 18']
    #allocation17 [shape = 'u8[8192]{0}', space=vmem, size = 0x2000, scoped, tag = 'output window, operand 0, single buffered']
    %25 = vsyncpa [#allocation3], 0
    %26 = vsyncpa [#allocation6], 0
    %s27 = scalar_lea.sflag [#allocation6], 1
    %28 = vsyncpa %s27, 0
    %29 = vsyncpa [#allocation9], 0
    %s30 = scalar_lea.sflag [#allocation9], 1
    %31 = vsyncpa %s30, 0
    %32 = vsyncpa [#allocation12], 0
    %s33 = scalar_lea.sflag [#allocation12], 1
    %34 = vsyncpa %s33, 0
    %35 = vsyncpa [#allocation15], 0
    %s36 = scalar_lea.sflag [#allocation15], 1
    %37 = vsyncpa %s36, 0
    %38 = vsyncpa [#allocation4], 0
    loop: start=0, step=1, limit=4
    $region2: #{tpu_custom_call.1} parent=1 // loop_pre_header
      _
    $region3: #{tpu_custom_call.1} parent=1 // loop_header
      %s40 = sphi 0, %s44
      %p41 = scmp.ge.s32.totalorder %s40, 4
      %s48 = sphi 0, %s48
      %s50 = sphi 0, %s48
      %s51 = sphi 0, %s50
      %s65 = sphi 0, %s51
      %s69 = sphi 0, %s69
      %s71 = sphi 0, %s69
      %s72 = sphi 0, %s71
      %s86 = sphi 0, %s72
      %s92 = sphi 0, %s94
      %s95 = sphi 0, %s92
      %s96 = sphi 0, %s95
      %s112 = sphi 0, %s96
      %s118 = sphi 0, %s120
      %s121 = sphi 0, %s118
      %s122 = sphi 0, %s121
      %s138 = sphi 0, %s122
      %s144 = sphi 0, %s146
      %s147 = sphi 0, %s144
      %s148 = sphi 0, %s147
      %s164 = sphi 0, %s148
      %s170 = sphi 0, %s172
      %s173 = sphi 0, %s170
      %s174 = sphi 0, %s173
      %s190 = sphi 0, %s174
      %s196 = sphi 0, %s198
      %s199 = sphi 0, %s196
      %s200 = sphi 0, %s199
      %s216 = sphi 0, %s200
      %s222 = sphi 0, %s224
      %s225 = sphi 0, %s222
      %s226 = sphi 0, %s225
      %s242 = sphi 0, %s226
      %s248 = sphi 0, %s250
      %s251 = sphi 0, %s248
      %s252 = sphi 0, %s251
      %s268 = sphi 0, %s252
      %s274 = sphi 0, %s276
      %s277 = sphi 0, %s274
      %s278 = sphi 0, %s277
      %s294 = sphi 0, %s278
      %s300 = sphi 0, %s302
      %s303 = sphi 0, %s300
      %s304 = sphi 0, %s303
      %s320 = sphi 0, %s304
      %s326 = sphi 0, %s328
      %s329 = sphi 0, %s326
      %s330 = sphi 0, %s329
      %s346 = sphi 0, %s330
      %s352 = sphi 0, %s354
      %s355 = sphi 0, %s352
      %s356 = sphi 0, %s355
      %s372 = sphi 0, %s356
      %s378 = sphi 0, %s380
      %s381 = sphi 0, %s378
      %s382 = sphi 0, %s381
      %s398 = sphi 0, %s382
      %s404 = sphi 0, %s406
      %s407 = sphi 0, %s404
      %s408 = sphi 0, %s407
      %s424 = sphi 0, %s408
      %s430 = sphi 0, %s432
      %s433 = sphi 0, %s430
      %s434 = sphi 0, %s433
      %s450 = sphi 0, %s434
      %s456 = sphi 0, %s458
      %s459 = sphi 0, %s456
      %s460 = sphi 0, %s459
      %s476 = sphi 0, %s460
      %s482 = sphi 0, %s484
      %s485 = sphi 0, %s482
      %s486 = sphi 0, %s485
      %s502 = sphi 0, %s486
      %s508 = sphi 0, %s510
      %s511 = sphi 0, %s508
      %s512 = sphi 0, %s511
      %s528 = sphi 0, %s512
      %s534 = sphi 0, %s536
      %s537 = sphi 0, %s534
      %s538 = sphi 0, %s537
      %s554 = sphi 0, %s538
      %s558 = sphi 0, %s558
      %s560 = sphi 0, %s558
      %s561 = sphi 0, %s560
      %s575 = sphi 0, %s561
    $region4: #{tpu_custom_call.1} parent=1 // loop_header_branch
      %43 = sbr.rel (%p41) target = $region8
    $region5: #{tpu_custom_call.1} parent=1 // loop_body
      %s45 = ssub.s32 %s40, 1
      %s46 = ssub.s32 %s40, 2
      %s47 = sadd.s32 %s40, 1
      %s49 = sadd.s32 %s48, 1
      %p52 = scmp.eq.s32.totalorder %s40, 1
      %p53 = scmp.ne.s32.totalorder %s48, %s50
      %p54 = scmp.eq.s32.totalorder %s40, 0
      %p55 = por %p53, %p54
      %p56 = scmp.ne.s32.totalorder %s48, %s50
      %p57 = scmp.eq.s32.totalorder %s45, 1
      %p58 = por %p56, %p57
      %p59 = scmp.ne.s32.totalorder %s50, %s51
      %p60 = scmp.eq.s32.totalorder %s45, 0
      %p61 = por %p59, %p60
      %p62 = scmp.ne.s32.totalorder %s50, %s51
      %p63 = scmp.eq.s32.totalorder %s46, 1
      %p64 = por %p62, %p63
      %p66 = scmp.ne.s32.totalorder %s51, %s65
      %p67 = scmp.eq.s32.totalorder %s46, 0
      %p68 = por %p66, %p67
      %s70 = sadd.s32 %s69, 1
      %p73 = scmp.eq.s32.totalorder %s40, 1
      %p74 = scmp.ne.s32.totalorder %s69, %s71
      %p75 = scmp.eq.s32.totalorder %s40, 0
      %p76 = por %p74, %p75
      %p77 = scmp.ne.s32.totalorder %s69, %s71
      %p78 = scmp.eq.s32.totalorder %s45, 1
      %p79 = por %p77, %p78
      %p80 = scmp.ne.s32.totalorder %s71, %s72
      %p81 = scmp.eq.s32.totalorder %s45, 0
      %p82 = por %p80, %p81
      %p83 = scmp.ne.s32.totalorder %s71, %s72
      %p84 = scmp.eq.s32.totalorder %s46, 1
      %p85 = por %p83, %p84
      %p87 = scmp.ne.s32.totalorder %s72, %s86
      %p88 = scmp.eq.s32.totalorder %s46, 0
      %p89 = por %p87, %p88
      %s90 = ssub.s32 %s40, %s47
      %p91 = scmp.eq.s32.totalorder %s90, 0
      %s93 = sadd.s32 %s92, 1
      %s94 = scalar_select %p91, %s92, %s93
      %p97 = pneg %p91
      %p98 = scmp.eq.s32.totalorder %s40, 1
      %p99 = por %p97, %p98
      %p100 = scmp.ne.s32.totalorder %s92, %s95
      %p101 = scmp.eq.s32.totalorder %s40, 0
      %p102 = por %p100, %p101
      %p103 = scmp.ne.s32.totalorder %s92, %s95
      %p104 = scmp.eq.s32.totalorder %s45, 1
      %p105 = por %p103, %p104
      %p106 = scmp.ne.s32.totalorder %s95, %s96
      %p107 = scmp.eq.s32.totalorder %s45, 0
      %p108 = por %p106, %p107
      %p109 = scmp.ne.s32.totalorder %s95, %s96
      %p110 = scmp.eq.s32.totalorder %s46, 1
      %p111 = por %p109, %p110
      %p113 = scmp.ne.s32.totalorder %s96, %s112
      %p114 = scmp.eq.s32.totalorder %s46, 0
      %p115 = por %p113, %p114
      %s116 = ssub.s32 %s40, %s47
      %p117 = scmp.eq.s32.totalorder %s116, 0
      %s119 = sadd.s32 %s118, 1
      %s120 = scalar_select %p117, %s118, %s119
      %p123 = pneg %p117
      %p124 = scmp.eq.s32.totalorder %s40, 1
      %p125 = por %p123, %p124
      %p126 = scmp.ne.s32.totalorder %s118, %s121
      %p127 = scmp.eq.s32.totalorder %s40, 0
      %p128 = por %p126, %p127
      %p129 = scmp.ne.s32.totalorder %s118, %s121
      %p130 = scmp.eq.s32.totalorder %s45, 1
      %p131 = por %p129, %p130
      %p132 = scmp.ne.s32.totalorder %s121, %s122
      %p133 = scmp.eq.s32.totalorder %s45, 0
      %p134 = por %p132, %p133
      %p135 = scmp.ne.s32.totalorder %s121, %s122
      %p136 = scmp.eq.s32.totalorder %s46, 1
      %p137 = por %p135, %p136
      %p139 = scmp.ne.s32.totalorder %s122, %s138
      %p140 = scmp.eq.s32.totalorder %s46, 0
      %p141 = por %p139, %p140
      %s142 = ssub.s32 %s40, %s47
      %p143 = scmp.eq.s32.totalorder %s142, 0
      %s145 = sadd.s32 %s144, 1
      %s146 = scalar_select %p143, %s144, %s145
      %p149 = pneg %p143
      %p150 = scmp.eq.s32.totalorder %s40, 1
      %p151 = por %p149, %p150
      %p152 = scmp.ne.s32.totalorder %s144, %s147
      %p153 = scmp.eq.s32.totalorder %s40, 0
      %p154 = por %p152, %p153
      %p155 = scmp.ne.s32.totalorder %s144, %s147
      %p156 = scmp.eq.s32.totalorder %s45, 1
      %p157 = por %p155, %p156
      %p158 = scmp.ne.s32.totalorder %s147, %s148
      %p159 = scmp.eq.s32.totalorder %s45, 0
      %p160 = por %p158, %p159
      %p161 = scmp.ne.s32.totalorder %s147, %s148
      %p162 = scmp.eq.s32.totalorder %s46, 1
      %p163 = por %p161, %p162
      %p165 = scmp.ne.s32.totalorder %s148, %s164
      %p166 = scmp.eq.s32.totalorder %s46, 0
      %p167 = por %p165, %p166
      %s168 = ssub.s32 %s40, %s47
      %p169 = scmp.eq.s32.totalorder %s168, 0
      %s171 = sadd.s32 %s170, 1
      %s172 = scalar_select %p169, %s170, %s171
      %p175 = pneg %p169
      %p176 = scmp.eq.s32.totalorder %s40, 1
      %p177 = por %p175, %p176
      %p178 = scmp.ne.s32.totalorder %s170, %s173
      %p179 = scmp.eq.s32.totalorder %s40, 0
      %p180 = por %p178, %p179
      %p181 = scmp.ne.s32.totalorder %s170, %s173
      %p182 = scmp.eq.s32.totalorder %s45, 1
      %p183 = por %p181, %p182
      %p184 = scmp.ne.s32.totalorder %s173, %s174
      %p185 = scmp.eq.s32.totalorder %s45, 0
      %p186 = por %p184, %p185
      %p187 = scmp.ne.s32.totalorder %s173, %s174
      %p188 = scmp.eq.s32.totalorder %s46, 1
      %p189 = por %p187, %p188
      %p191 = scmp.ne.s32.totalorder %s174, %s190
      %p192 = scmp.eq.s32.totalorder %s46, 0
      %p193 = por %p191, %p192
      %s194 = ssub.s32 %s40, %s47
      %p195 = scmp.eq.s32.totalorder %s194, 0
      %s197 = sadd.s32 %s196, 1
      %s198 = scalar_select %p195, %s196, %s197
      %p201 = pneg %p195
      %p202 = scmp.eq.s32.totalorder %s40, 1
      %p203 = por %p201, %p202
      %p204 = scmp.ne.s32.totalorder %s196, %s199
      %p205 = scmp.eq.s32.totalorder %s40, 0
      %p206 = por %p204, %p205
      %p207 = scmp.ne.s32.totalorder %s196, %s199
      %p208 = scmp.eq.s32.totalorder %s45, 1
      %p209 = por %p207, %p208
      %p210 = scmp.ne.s32.totalorder %s199, %s200
      %p211 = scmp.eq.s32.totalorder %s45, 0
      %p212 = por %p210, %p211
      %p213 = scmp.ne.s32.totalorder %s199, %s200
      %p214 = scmp.eq.s32.totalorder %s46, 1
      %p215 = por %p213, %p214
      %p217 = scmp.ne.s32.totalorder %s200, %s216
      %p218 = scmp.eq.s32.totalorder %s46, 0
      %p219 = por %p217, %p218
      %s220 = ssub.s32 %s40, %s47
      %p221 = scmp.eq.s32.totalorder %s220, 0
      %s223 = sadd.s32 %s222, 1
      %s224 = scalar_select %p221, %s222, %s223
      %p227 = pneg %p221
      %p228 = scmp.eq.s32.totalorder %s40, 1
      %p229 = por %p227, %p228
      %p230 = scmp.ne.s32.totalorder %s222, %s225
      %p231 = scmp.eq.s32.totalorder %s40, 0
      %p232 = por %p230, %p231
      %p233 = scmp.ne.s32.totalorder %s222, %s225
      %p234 = scmp.eq.s32.totalorder %s45, 1
      %p235 = por %p233, %p234
      %p236 = scmp.ne.s32.totalorder %s225, %s226
      %p237 = scmp.eq.s32.totalorder %s45, 0
      %p238 = por %p236, %p237
      %p239 = scmp.ne.s32.totalorder %s225, %s226
      %p240 = scmp.eq.s32.totalorder %s46, 1
      %p241 = por %p239, %p240
      %p243 = scmp.ne.s32.totalorder %s226, %s242
      %p244 = scmp.eq.s32.totalorder %s46, 0
      %p245 = por %p243, %p244
      %s246 = ssub.s32 %s40, %s47
      %p247 = scmp.eq.s32.totalorder %s246, 0
      %s249 = sadd.s32 %s248, 1
      %s250 = scalar_select %p247, %s248, %s249
      %p253 = pneg %p247
      %p254 = scmp.eq.s32.totalorder %s40, 1
      %p255 = por %p253, %p254
      %p256 = scmp.ne.s32.totalorder %s248, %s251
      %p257 = scmp.eq.s32.totalorder %s40, 0
      %p258 = por %p256, %p257
      %p259 = scmp.ne.s32.totalorder %s248, %s251
      %p260 = scmp.eq.s32.totalorder %s45, 1
      %p261 = por %p259, %p260
      %p262 = scmp.ne.s32.totalorder %s251, %s252
      %p263 = scmp.eq.s32.totalorder %s45, 0
      %p264 = por %p262, %p263
      %p265 = scmp.ne.s32.totalorder %s251, %s252
      %p266 = scmp.eq.s32.totalorder %s46, 1
      %p267 = por %p265, %p266
      %p269 = scmp.ne.s32.totalorder %s252, %s268
      %p270 = scmp.eq.s32.totalorder %s46, 0
      %p271 = por %p269, %p270
      %s272 = ssub.s32 %s40, %s47
      %p273 = scmp.eq.s32.totalorder %s272, 0
      %s275 = sadd.s32 %s274, 1
      %s276 = scalar_select %p273, %s274, %s275
      %p279 = pneg %p273
      %p280 = scmp.eq.s32.totalorder %s40, 1
      %p281 = por %p279, %p280
      %p282 = scmp.ne.s32.totalorder %s274, %s277
      %p283 = scmp.eq.s32.totalorder %s40, 0
      %p284 = por %p282, %p283
      %p285 = scmp.ne.s32.totalorder %s274, %s277
      %p286 = scmp.eq.s32.totalorder %s45, 1
      %p287 = por %p285, %p286
      %p288 = scmp.ne.s32.totalorder %s277, %s278
      %p289 = scmp.eq.s32.totalorder %s45, 0
      %p290 = por %p288, %p289
      %p291 = scmp.ne.s32.totalorder %s277, %s278
      %p292 = scmp.eq.s32.totalorder %s46, 1
      %p293 = por %p291, %p292
      %p295 = scmp.ne.s32.totalorder %s278, %s294
      %p296 = scmp.eq.s32.totalorder %s46, 0
      %p297 = por %p295, %p296
      %s298 = ssub.s32 %s40, %s47
      %p299 = scmp.eq.s32.totalorder %s298, 0
      %s301 = sadd.s32 %s300, 1
      %s302 = scalar_select %p299, %s300, %s301
      %p305 = pneg %p299
      %p306 = scmp.eq.s32.totalorder %s40, 1
      %p307 = por %p305, %p306
      %p308 = scmp.ne.s32.totalorder %s300, %s303
      %p309 = scmp.eq.s32.totalorder %s40, 0
      %p310 = por %p308, %p309
      %p311 = scmp.ne.s32.totalorder %s300, %s303
      %p312 = scmp.eq.s32.totalorder %s45, 1
      %p313 = por %p311, %p312
      %p314 = scmp.ne.s32.totalorder %s303, %s304
      %p315 = scmp.eq.s32.totalorder %s45, 0
      %p316 = por %p314, %p315
      %p317 = scmp.ne.s32.totalorder %s303, %s304
      %p318 = scmp.eq.s32.totalorder %s46, 1
      %p319 = por %p317, %p318
      %p321 = scmp.ne.s32.totalorder %s304, %s320
      %p322 = scmp.eq.s32.totalorder %s46, 0
      %p323 = por %p321, %p322
      %s324 = ssub.s32 %s40, %s47
      %p325 = scmp.eq.s32.totalorder %s324, 0
      %s327 = sadd.s32 %s326, 1
      %s328 = scalar_select %p325, %s326, %s327
      %p331 = pneg %p325
      %p332 = scmp.eq.s32.totalorder %s40, 1
      %p333 = por %p331, %p332
      %p334 = scmp.ne.s32.totalorder %s326, %s329
      %p335 = scmp.eq.s32.totalorder %s40, 0
      %p336 = por %p334, %p335
      %p337 = scmp.ne.s32.totalorder %s326, %s329
      %p338 = scmp.eq.s32.totalorder %s45, 1
      %p339 = por %p337, %p338
      %p340 = scmp.ne.s32.totalorder %s329, %s330
      %p341 = scmp.eq.s32.totalorder %s45, 0
      %p342 = por %p340, %p341
      %p343 = scmp.ne.s32.totalorder %s329, %s330
      %p344 = scmp.eq.s32.totalorder %s46, 1
      %p345 = por %p343, %p344
      %p347 = scmp.ne.s32.totalorder %s330, %s346
      %p348 = scmp.eq.s32.totalorder %s46, 0
      %p349 = por %p347, %p348
      %s350 = ssub.s32 %s40, %s47
      %p351 = scmp.eq.s32.totalorder %s350, 0
      %s353 = sadd.s32 %s352, 1
      %s354 = scalar_select %p351, %s352, %s353
      %p357 = pneg %p351
      %p358 = scmp.eq.s32.totalorder %s40, 1
      %p359 = por %p357, %p358
      %p360 = scmp.ne.s32.totalorder %s352, %s355
      %p361 = scmp.eq.s32.totalorder %s40, 0
      %p362 = por %p360, %p361
      %p363 = scmp.ne.s32.totalorder %s352, %s355
      %p364 = scmp.eq.s32.totalorder %s45, 1
      %p365 = por %p363, %p364
      %p366 = scmp.ne.s32.totalorder %s355, %s356
      %p367 = scmp.eq.s32.totalorder %s45, 0
      %p368 = por %p366, %p367
      %p369 = scmp.ne.s32.totalorder %s355, %s356
      %p370 = scmp.eq.s32.totalorder %s46, 1
      %p371 = por %p369, %p370
      %p373 = scmp.ne.s32.totalorder %s356, %s372
      %p374 = scmp.eq.s32.totalorder %s46, 0
      %p375 = por %p373, %p374
      %s376 = ssub.s32 %s40, %s47
      %p377 = scmp.eq.s32.totalorder %s376, 0
      %s379 = sadd.s32 %s378, 1
      %s380 = scalar_select %p377, %s378, %s379
      %p383 = pneg %p377
      %p384 = scmp.eq.s32.totalorder %s40, 1
      %p385 = por %p383, %p384
      %p386 = scmp.ne.s32.totalorder %s378, %s381
      %p387 = scmp.eq.s32.totalorder %s40, 0
      %p388 = por %p386, %p387
      %p389 = scmp.ne.s32.totalorder %s378, %s381
      %p390 = scmp.eq.s32.totalorder %s45, 1
      %p391 = por %p389, %p390
      %p392 = scmp.ne.s32.totalorder %s381, %s382
      %p393 = scmp.eq.s32.totalorder %s45, 0
      %p394 = por %p392, %p393
      %p395 = scmp.ne.s32.totalorder %s381, %s382
      %p396 = scmp.eq.s32.totalorder %s46, 1
      %p397 = por %p395, %p396
      %p399 = scmp.ne.s32.totalorder %s382, %s398
      %p400 = scmp.eq.s32.totalorder %s46, 0
      %p401 = por %p399, %p400
      %s402 = ssub.s32 %s40, %s47
      %p403 = scmp.eq.s32.totalorder %s402, 0
      %s405 = sadd.s32 %s404, 1
      %s406 = scalar_select %p403, %s404, %s405
      %p409 = pneg %p403
      %p410 = scmp.eq.s32.totalorder %s40, 1
      %p411 = por %p409, %p410
      %p412 = scmp.ne.s32.totalorder %s404, %s407
      %p413 = scmp.eq.s32.totalorder %s40, 0
      %p414 = por %p412, %p413
      %p415 = scmp.ne.s32.totalorder %s404, %s407
      %p416 = scmp.eq.s32.totalorder %s45, 1
      %p417 = por %p415, %p416
      %p418 = scmp.ne.s32.totalorder %s407, %s408
      %p419 = scmp.eq.s32.totalorder %s45, 0
      %p420 = por %p418, %p419
      %p421 = scmp.ne.s32.totalorder %s407, %s408
      %p422 = scmp.eq.s32.totalorder %s46, 1
      %p423 = por %p421, %p422
      %p425 = scmp.ne.s32.totalorder %s408, %s424
      %p426 = scmp.eq.s32.totalorder %s46, 0
      %p427 = por %p425, %p426
      %s428 = ssub.s32 %s40, %s47
      %p429 = scmp.eq.s32.totalorder %s428, 0
      %s431 = sadd.s32 %s430, 1
      %s432 = scalar_select %p429, %s430, %s431
      %p435 = pneg %p429
      %p436 = scmp.eq.s32.totalorder %s40, 1
      %p437 = por %p435, %p436
      %p438 = scmp.ne.s32.totalorder %s430, %s433
      %p439 = scmp.eq.s32.totalorder %s40, 0
      %p440 = por %p438, %p439
      %p441 = scmp.ne.s32.totalorder %s430, %s433
      %p442 = scmp.eq.s32.totalorder %s45, 1
      %p443 = por %p441, %p442
      %p444 = scmp.ne.s32.totalorder %s433, %s434
      %p445 = scmp.eq.s32.totalorder %s45, 0
      %p446 = por %p444, %p445
      %p447 = scmp.ne.s32.totalorder %s433, %s434
      %p448 = scmp.eq.s32.totalorder %s46, 1
      %p449 = por %p447, %p448
      %p451 = scmp.ne.s32.totalorder %s434, %s450
      %p452 = scmp.eq.s32.totalorder %s46, 0
      %p453 = por %p451, %p452
      %s454 = ssub.s32 %s40, %s47
      %p455 = scmp.eq.s32.totalorder %s454, 0
      %s457 = sadd.s32 %s456, 1
      %s458 = scalar_select %p455, %s456, %s457
      %p461 = pneg %p455
      %p462 = scmp.eq.s32.totalorder %s40, 1
      %p463 = por %p461, %p462
      %p464 = scmp.ne.s32.totalorder %s456, %s459
      %p465 = scmp.eq.s32.totalorder %s40, 0
      %p466 = por %p464, %p465
      %p467 = scmp.ne.s32.totalorder %s456, %s459
      %p468 = scmp.eq.s32.totalorder %s45, 1
      %p469 = por %p467, %p468
      %p470 = scmp.ne.s32.totalorder %s459, %s460
      %p471 = scmp.eq.s32.totalorder %s45, 0
      %p472 = por %p470, %p471
      %p473 = scmp.ne.s32.totalorder %s459, %s460
      %p474 = scmp.eq.s32.totalorder %s46, 1
      %p475 = por %p473, %p474
      %p477 = scmp.ne.s32.totalorder %s460, %s476
      %p478 = scmp.eq.s32.totalorder %s46, 0
      %p479 = por %p477, %p478
      %s480 = ssub.s32 %s40, %s47
      %p481 = scmp.eq.s32.totalorder %s480, 0
      %s483 = sadd.s32 %s482, 1
      %s484 = scalar_select %p481, %s482, %s483
      %p487 = pneg %p481
      %p488 = scmp.eq.s32.totalorder %s40, 1
      %p489 = por %p487, %p488
      %p490 = scmp.ne.s32.totalorder %s482, %s485
      %p491 = scmp.eq.s32.totalorder %s40, 0
      %p492 = por %p490, %p491
      %p493 = scmp.ne.s32.totalorder %s482, %s485
      %p494 = scmp.eq.s32.totalorder %s45, 1
      %p495 = por %p493, %p494
      %p496 = scmp.ne.s32.totalorder %s485, %s486
      %p497 = scmp.eq.s32.totalorder %s45, 0
      %p498 = por %p496, %p497
      %p499 = scmp.ne.s32.totalorder %s485, %s486
      %p500 = scmp.eq.s32.totalorder %s46, 1
      %p501 = por %p499, %p500
      %p503 = scmp.ne.s32.totalorder %s486, %s502
      %p504 = scmp.eq.s32.totalorder %s46, 0
      %p505 = por %p503, %p504
      %s506 = ssub.s32 %s40, %s47
      %p507 = scmp.eq.s32.totalorder %s506, 0
      %s509 = sadd.s32 %s508, 1
      %s510 = scalar_select %p507, %s508, %s509
      %p513 = pneg %p507
      %p514 = scmp.eq.s32.totalorder %s40, 1
      %p515 = por %p513, %p514
      %p516 = scmp.ne.s32.totalorder %s508, %s511
      %p517 = scmp.eq.s32.totalorder %s40, 0
      %p518 = por %p516, %p517
      %p519 = scmp.ne.s32.totalorder %s508, %s511
      %p520 = scmp.eq.s32.totalorder %s45, 1
      %p521 = por %p519, %p520
      %p522 = scmp.ne.s32.totalorder %s511, %s512
      %p523 = scmp.eq.s32.totalorder %s45, 0
      %p524 = por %p522, %p523
      %p525 = scmp.ne.s32.totalorder %s511, %s512
      %p526 = scmp.eq.s32.totalorder %s46, 1
      %p527 = por %p525, %p526
      %p529 = scmp.ne.s32.totalorder %s512, %s528
      %p530 = scmp.eq.s32.totalorder %s46, 0
      %p531 = por %p529, %p530
      %s532 = ssub.s32 %s40, %s47
      %p533 = scmp.eq.s32.totalorder %s532, 0
      %s535 = sadd.s32 %s534, 1
      %s536 = scalar_select %p533, %s534, %s535
      %p539 = pneg %p533
      %p540 = scmp.eq.s32.totalorder %s40, 1
      %p541 = por %p539, %p540
      %p542 = scmp.ne.s32.totalorder %s534, %s537
      %p543 = scmp.eq.s32.totalorder %s40, 0
      %p544 = por %p542, %p543
      %p545 = scmp.ne.s32.totalorder %s534, %s537
      %p546 = scmp.eq.s32.totalorder %s45, 1
      %p547 = por %p545, %p546
      %p548 = scmp.ne.s32.totalorder %s537, %s538
      %p549 = scmp.eq.s32.totalorder %s45, 0
      %p550 = por %p548, %p549
      %p551 = scmp.ne.s32.totalorder %s537, %s538
      %p552 = scmp.eq.s32.totalorder %s46, 1
      %p553 = por %p551, %p552
      %p555 = scmp.ne.s32.totalorder %s538, %s554
      %p556 = scmp.eq.s32.totalorder %s46, 0
      %p557 = por %p555, %p556
      %s559 = sadd.s32 %s558, 1
      %p562 = scmp.eq.s32.totalorder %s40, 1
      %p563 = scmp.ne.s32.totalorder %s558, %s560
      %p564 = scmp.eq.s32.totalorder %s40, 0
      %p565 = por %p563, %p564
      %p566 = scmp.ne.s32.totalorder %s558, %s560
      %p567 = scmp.eq.s32.totalorder %s45, 1
      %p568 = por %p566, %p567
      %p569 = scmp.ne.s32.totalorder %s560, %s561
      %p570 = scmp.eq.s32.totalorder %s45, 0
      %p571 = por %p569, %p570
      %p572 = scmp.ne.s32.totalorder %s560, %s561
      %p573 = scmp.eq.s32.totalorder %s46, 1
      %p574 = por %p572, %p573
      %p576 = scmp.ne.s32.totalorder %s561, %s575
      %p577 = scmp.eq.s32.totalorder %s46, 0
      %p578 = por %p576, %p577
      %p579 = scmp.le.s32.totalorder 1, %s40
      %p580 = scmp.lt.s32.totalorder %s40, 3
      %p581 = pnand %p579, %p580
      %p582 = pneg %p581
      // Predicated region
      $region9: #{tpu_custom_call.1} parent=5 // pred_check
        _
      $region10: #{tpu_custom_call.1} parent=5 // pred_check_branch
        %584 = sbr.rel (%p581) target = $region12
      $region11: #{tpu_custom_call.1} parent=5 // pred_region
        %s585 = ssub.s32 %s40, 1
        // Predicated region
        $region13: #{tpu_custom_call.1} parent=11 // pred_check
          %p586 = pneg %p61
        $region14: #{tpu_custom_call.1} parent=11 // pred_check_branch
          %588 = sbr.rel (%p586) target = $region16
        $region15: #{tpu_custom_call.1} parent=11 // pred_region
          %s590 = ssub.s32 256, 256
          %591 = vsyncadd [#allocation3], %s590
          %s592 = sshll.u32 [#allocation2], 4
          %s593 = int_to_ptr.vmem [resolvable:$true] %s592
          %598 = dma.hbm_to_vmem [thread:$0]  %s0, 256, %s593, [#allocation3], 128, 128, 8
        $region16: #{tpu_custom_call.1} parent=11 // pred_fallthru
          _
        // Predicated region
        $region17: #{tpu_custom_call.1} parent=11 // pred_check
          %p599 = pneg %p82
        $region18: #{tpu_custom_call.1} parent=11 // pred_check_branch
          %601 = sbr.rel (%p599) target = $region20
        $region19: #{tpu_custom_call.1} parent=11 // pred_region
          _
        $region20: #{tpu_custom_call.1} parent=11 // pred_fallthru
          _
      $region12: #{tpu_custom_call.1} parent=5 // pred_fallthru
        _
      %p602 = scmp.lt.s32.totalorder %s40, 2
      // Predicated region
      $region21: #{tpu_custom_call.1} parent=5 // pred_check
        %p603 = pneg %p602
      $region22: #{tpu_custom_call.1} parent=5 // pred_check_branch
        %605 = sbr.rel (%p603) target = $region24
      $region23: #{tpu_custom_call.1} parent=5 // pred_region
        // Predicated region
        $region25: #{tpu_custom_call.1} parent=23 // pred_check
          %p606 = pneg %p102
        $region26: #{tpu_custom_call.1} parent=23 // pred_check_branch
          %608 = sbr.rel (%p606) target = $region28
        $region27: #{tpu_custom_call.1} parent=23 // pred_region
          %p609 = scmp.lt.s32.totalorder %s40, 1
          %s610 = scalar_select %p609, %s40, 1
          %s611 = scalar_lea.vmem %s2, %s610
        $region28: #{tpu_custom_call.1} parent=23 // pred_fallthru
          _
        // Predicated region
        $region29: #{tpu_custom_call.1} parent=23 // pred_check
          %p612 = pneg %p128
        $region30: #{tpu_custom_call.1} parent=23 // pred_check_branch
          %614 = sbr.rel (%p612) target = $region32
        $region31: #{tpu_custom_call.1} parent=23 // pred_region
          %p615 = scmp.lt.s32.totalorder %s40, 1
          %s616 = scalar_select %p615, %s40, 1
          %s617 = scalar_lea.vmem %s3, %s616
        $region32: #{tpu_custom_call.1} parent=23 // pred_fallthru
          _
        // Predicated region
        $region33: #{tpu_custom_call.1} parent=23 // pred_check
          %p618 = pneg %p154
        $region34: #{tpu_custom_call.1} parent=23 // pred_check_branch
          %620 = sbr.rel (%p618) target = $region36
        $region35: #{tpu_custom_call.1} parent=23 // pred_region
          %s621 = sand.u32 %s40, 1
          %s622 = scalar_lea.sflag [#allocation6], %s621
          %s623 = sand.u32 %s144, 1
          %s624 = smul.addr %s623, 128
          %s625 = scalar_lea.vmem [#allocation5], %s624
          %s627 = ssub.s32 2048, 2048
          %628 = vsyncadd %s622, %s627
          %s629 = smul.addr %s40, 32
          %s630 = smul.addr %s629, 64
          %s631 = scalar_lea.hbm %s4, %s630
          %s632 = sshll.u32 %s625, 4
          %s633 = int_to_ptr.vmem [resolvable:$true] %s632
          %638 = dma.hbm_to_vmem [thread:$0]  %s631, 2048, %s633, %s622, 128, 128, 8
        $region36: #{tpu_custom_call.1} parent=23 // pred_fallthru
          _
        // Predicated region
        $region37: #{tpu_custom_call.1} parent=23 // pred_check
          %p639 = pneg %p180
        $region38: #{tpu_custom_call.1} parent=23 // pred_check_branch
          %641 = sbr.rel (%p639) target = $region40
        $region39: #{tpu_custom_call.1} parent=23 // pred_region
          %s642 = sand.u32 %s40, 1
          %s643 = scalar_lea.sflag [#allocation6], %s642
          %s644 = sand.u32 %s170, 1
          %s645 = smul.addr %s644, 256
          %s646 = scalar_lea.vmem [#allocation7], %s645
          %s648 = ssub.s32 4096, 4096
          %649 = vsyncadd %s643, %s648
          %s650 = smul.addr %s40, 64
          %s651 = smul.addr %s650, 64
          %s652 = scalar_lea.hbm %s5, %s651
          %s653 = sshll.u32 %s646, 4
          %s654 = int_to_ptr.vmem [resolvable:$true] %s653
          %659 = dma.hbm_to_vmem [thread:$0]  %s652, 4096, %s654, %s643, 256, 256, 16
        $region40: #{tpu_custom_call.1} parent=23 // pred_fallthru
          _
        // Predicated region
        $region41: #{tpu_custom_call.1} parent=23 // pred_check
          %p660 = pneg %p206
        $region42: #{tpu_custom_call.1} parent=23 // pred_check_branch
          %662 = sbr.rel (%p660) target = $region44
        $region43: #{tpu_custom_call.1} parent=23 // pred_region
          %s663 = sand.u32 %s40, 1
          %s664 = scalar_lea.sflag [#allocation9], %s663
          %s665 = sand.u32 %s196, 1
          %s666 = smul.addr %s665, 128
          %s667 = scalar_lea.vmem [#allocation8], %s666
          %s669 = ssub.s32 2048, 2048
          %670 = vsyncadd %s664, %s669
          %s671 = smul.addr %s40, 32
          %s672 = smul.addr %s671, 64
          %s673 = scalar_lea.hbm %s6, %s672
          %s674 = sshll.u32 %s667, 4
          %s675 = int_to_ptr.vmem [resolvable:$true] %s674
          %680 = dma.hbm_to_vmem [thread:$0]  %s673, 2048, %s675, %s664, 64, 64, 4
        $region44: #{tpu_custom_call.1} parent=23 // pred_fallthru
          _
        // Predicated region
        $region45: #{tpu_custom_call.1} parent=23 // pred_check
          %p681 = pneg %p232
        $region46: #{tpu_custom_call.1} parent=23 // pred_check_branch
          %683 = sbr.rel (%p681) target = $region48
        $region47: #{tpu_custom_call.1} parent=23 // pred_region
          %p684 = scmp.lt.s32.totalorder %s40, 1
          %s685 = scalar_select %p684, %s40, 1
          %s686 = scalar_lea.vmem %s7, %s685
        $region48: #{tpu_custom_call.1} parent=23 // pred_fallthru
          _
        // Predicated region
        $region49: #{tpu_custom_call.1} parent=23 // pred_check
          %p687 = pneg %p258
        $region50: #{tpu_custom_call.1} parent=23 // pred_check_branch
          %689 = sbr.rel (%p687) target = $region52
        $region51: #{tpu_custom_call.1} parent=23 // pred_region
          %p690 = scmp.lt.s32.totalorder %s40, 1
          %s691 = scalar_select %p690, %s40, 1
          %s692 = scalar_lea.vmem %s8, %s691
        $region52: #{tpu_custom_call.1} parent=23 // pred_fallthru
          _
        // Predicated region
        $region53: #{tpu_custom_call.1} parent=23 // pred_check
          %p693 = pneg %p284
        $region54: #{tpu_custom_call.1} parent=23 // pred_check_branch
          %695 = sbr.rel (%p693) target = $region56
        $region55: #{tpu_custom_call.1} parent=23 // pred_region
          %p696 = scmp.lt.s32.totalorder %s40, 1
          %s697 = scalar_select %p696, %s40, 1
          %s698 = scalar_lea.vmem %s9, %s697
        $region56: #{tpu_custom_call.1} parent=23 // pred_fallthru
          _
        // Predicated region
        $region57: #{tpu_custom_call.1} parent=23 // pred_check
          %p699 = pneg %p310
        $region58: #{tpu_custom_call.1} parent=23 // pred_check_branch
          %701 = sbr.rel (%p699) target = $region60
        $region59: #{tpu_custom_call.1} parent=23 // pred_region
          %s702 = sand.u32 %s40, 1
          %s703 = scalar_lea.sflag [#allocation9], %s702
          %s704 = sand.u32 %s300, 1
          %s705 = smul.addr %s704, 128
          %s706 = scalar_lea.vmem [#allocation10], %s705
          %s708 = ssub.s32 2048, 2048
          %709 = vsyncadd %s703, %s708
          %s710 = smul.addr %s40, 32
          %s711 = smul.addr %s710, 64
          %s712 = scalar_lea.hbm %s10, %s711
          %s713 = sshll.u32 %s706, 4
          %s714 = int_to_ptr.vmem [resolvable:$true] %s713
          %719 = dma.hbm_to_vmem [thread:$0]  %s712, 2048, %s714, %s703, 128, 128, 8
        $region60: #{tpu_custom_call.1} parent=23 // pred_fallthru
          _
        // Predicated region
        $region61: #{tpu_custom_call.1} parent=23 // pred_check
          %p720 = pneg %p336
        $region62: #{tpu_custom_call.1} parent=23 // pred_check_branch
          %722 = sbr.rel (%p720) target = $region64
        $region63: #{tpu_custom_call.1} parent=23 // pred_region
          %s723 = sand.u32 %s40, 1
          %s724 = scalar_lea.sflag [#allocation12], %s723
          %s725 = sand.u32 %s326, 1
          %s726 = smul.addr %s725, 256
          %s727 = scalar_lea.vmem [#allocation11], %s726
          %s729 = ssub.s32 4096, 4096
          %730 = vsyncadd %s724, %s729
          %s731 = smul.addr %s40, 64
          %s732 = smul.addr %s731, 64
          %s733 = scalar_lea.hbm %s11, %s732
          %s734 = sshll.u32 %s727, 4
          %s735 = int_to_ptr.vmem [resolvable:$true] %s734
          %740 = dma.hbm_to_vmem [thread:$0]  %s733, 4096, %s735, %s724, 256, 256, 16
        $region64: #{tpu_custom_call.1} parent=23 // pred_fallthru
          _
        // Predicated region
        $region65: #{tpu_custom_call.1} parent=23 // pred_check
          %p741 = pneg %p362
        $region66: #{tpu_custom_call.1} parent=23 // pred_check_branch
          %743 = sbr.rel (%p741) target = $region68
        $region67: #{tpu_custom_call.1} parent=23 // pred_region
          %s744 = sand.u32 %s40, 1
          %s745 = scalar_lea.sflag [#allocation12], %s744
          %s746 = sand.u32 %s352, 1
          %s747 = smul.addr %s746, 128
          %s748 = scalar_lea.vmem [#allocation13], %s747
          %s750 = ssub.s32 2048, 2048
          %751 = vsyncadd %s745, %s750
          %s752 = smul.addr %s40, 32
          %s753 = smul.addr %s752, 64
          %s754 = scalar_lea.hbm %s12, %s753
          %s755 = sshll.u32 %s748, 4
          %s756 = int_to_ptr.vmem [resolvable:$true] %s755
          %761 = dma.hbm_to_vmem [thread:$0]  %s754, 2048, %s756, %s745, 64, 64, 4
        $region68: #{tpu_custom_call.1} parent=23 // pred_fallthru
          _
        // Predicated region
        $region69: #{tpu_custom_call.1} parent=23 // pred_check
          %p762 = pneg %p388
        $region70: #{tpu_custom_call.1} parent=23 // pred_check_branch
          %764 = sbr.rel (%p762) target = $region72
        $region71: #{tpu_custom_call.1} parent=23 // pred_region
          %p765 = scmp.lt.s32.totalorder %s40, 1
          %s766 = scalar_select %p765, %s40, 1
          %s767 = scalar_lea.vmem %s13, %s766
        $region72: #{tpu_custom_call.1} parent=23 // pred_fallthru
          _
        // Predicated region
        $region73: #{tpu_custom_call.1} parent=23 // pred_check
          %p768 = pneg %p414
        $region74: #{tpu_custom_call.1} parent=23 // pred_check_branch
          %770 = sbr.rel (%p768) target = $region76
        $region75: #{tpu_custom_call.1} parent=23 // pred_region
          %p771 = scmp.lt.s32.totalorder %s40, 1
          %s772 = scalar_select %p771, %s40, 1
          %s773 = scalar_lea.vmem %s14, %s772
        $region76: #{tpu_custom_call.1} parent=23 // pred_fallthru
          _
        // Predicated region
        $region77: #{tpu_custom_call.1} parent=23 // pred_check
          %p774 = pneg %p440
        $region78: #{tpu_custom_call.1} parent=23 // pred_check_branch
          %776 = sbr.rel (%p774) target = $region80
        $region79: #{tpu_custom_call.1} parent=23 // pred_region
          %p777 = scmp.lt.s32.totalorder %s40, 1
          %s778 = scalar_select %p777, %s40, 1
          %s779 = scalar_lea.vmem %s15, %s778
        $region80: #{tpu_custom_call.1} parent=23 // pred_fallthru
          _
        // Predicated region
        $region81: #{tpu_custom_call.1} parent=23 // pred_check
          %p780 = pneg %p466
        $region82: #{tpu_custom_call.1} parent=23 // pred_check_branch
          %782 = sbr.rel (%p780) target = $region84
        $region83: #{tpu_custom_call.1} parent=23 // pred_region
          %s783 = sand.u32 %s40, 1
          %s784 = scalar_lea.sflag [#allocation15], %s783
          %s785 = sand.u32 %s456, 1
          %s786 = smul.addr %s785, 128
          %s787 = scalar_lea.vmem [#allocation14], %s786
          %s789 = ssub.s32 2048, 2048
          %790 = vsyncadd %s784, %s789
          %s791 = smul.addr %s40, 32
          %s792 = smul.addr %s791, 64
          %s793 = scalar_lea.hbm %s16, %s792
          %s794 = sshll.u32 %s787, 4
          %s795 = int_to_ptr.vmem [resolvable:$true] %s794
          %800 = dma.hbm_to_vmem [thread:$0]  %s793, 2048, %s795, %s784, 128, 128, 8
        $region84: #{tpu_custom_call.1} parent=23 // pred_fallthru
          _
        // Predicated region
        $region85: #{tpu_custom_call.1} parent=23 // pred_check
          %p801 = pneg %p492
        $region86: #{tpu_custom_call.1} parent=23 // pred_check_branch
          %803 = sbr.rel (%p801) target = $region88
        $region87: #{tpu_custom_call.1} parent=23 // pred_region
          %p804 = scmp.lt.s32.totalorder %s40, 1
          %s805 = scalar_select %p804, %s40, 1
          %s806 = smul.addr %s805, 2
          %s807 = scalar_lea.vmem %s17, %s806
        $region88: #{tpu_custom_call.1} parent=23 // pred_fallthru
          _
        // Predicated region
        $region89: #{tpu_custom_call.1} parent=23 // pred_check
          %p808 = pneg %p518
        $region90: #{tpu_custom_call.1} parent=23 // pred_check_branch
          %810 = sbr.rel (%p808) target = $region92
        $region91: #{tpu_custom_call.1} parent=23 // pred_region
          %s811 = sand.u32 %s40, 1
          %s812 = scalar_lea.sflag [#allocation15], %s811
          %s813 = sand.u32 %s508, 1
          %s814 = smul.addr %s813, 128
          %s815 = scalar_lea.vmem [#allocation16], %s814
          %s817 = ssub.s32 2048, 2048
          %818 = vsyncadd %s812, %s817
          %s819 = smul.addr %s40, 32
          %s820 = smul.addr %s819, 64
          %s821 = scalar_lea.hbm %s18, %s820
          %s822 = sshll.u32 %s815, 4
          %s823 = int_to_ptr.vmem [resolvable:$true] %s822
          %828 = dma.hbm_to_vmem [thread:$0]  %s821, 2048, %s823, %s812, 64, 64, 4
        $region92: #{tpu_custom_call.1} parent=23 // pred_fallthru
          _
        // Predicated region
        $region93: #{tpu_custom_call.1} parent=23 // pred_check
          %p829 = pneg %p544
        $region94: #{tpu_custom_call.1} parent=23 // pred_check_branch
          %831 = sbr.rel (%p829) target = $region96
        $region95: #{tpu_custom_call.1} parent=23 // pred_region
          %p832 = scmp.lt.s32.totalorder %s40, 1
          %s833 = scalar_select %p832, %s40, 1
          %s834 = scalar_lea.vmem %s19, %s833
        $region96: #{tpu_custom_call.1} parent=23 // pred_fallthru
          _
      $region24: #{tpu_custom_call.1} parent=5 // pred_fallthru
        _
      %p835 = scmp.le.s32.totalorder 1, %s40
      %p836 = scmp.lt.s32.totalorder %s40, 3
      %p837 = pnand %p835, %p836
      %p838 = pneg %p837
      // Predicated region
      $region97: #{tpu_custom_call.1} parent=5 // pred_check
        _
      $region98: #{tpu_custom_call.1} parent=5 // pred_check_branch
        %840 = sbr.rel (%p837) target = $region100
      $region99: #{tpu_custom_call.1} parent=5 // pred_region
        %s841 = ssub.s32 %s40, 1
        // Predicated region
        $region101: #{tpu_custom_call.1} parent=99 // pred_check
          %p842 = pneg %p61
        $region102: #{tpu_custom_call.1} parent=99 // pred_check_branch
          %844 = sbr.rel (%p842) target = $region104
        $region103: #{tpu_custom_call.1} parent=99 // pred_region
          %845 = dma.done [#allocation3], 256
        $region104: #{tpu_custom_call.1} parent=99 // pred_fallthru
          _
        %s846 = sand.u32 %s45, 1
        %s847 = scalar_lea.sflag [#allocation6], %s846
        %s848 = sand.u32 %s147, 1
        %s849 = smul.addr %s848, 128
        %s850 = scalar_lea.vmem [#allocation5], %s849
        // Predicated region
        $region105: #{tpu_custom_call.1} parent=99 // pred_check
          %p851 = pneg %p160
        $region106: #{tpu_custom_call.1} parent=99 // pred_check_branch
          %853 = sbr.rel (%p851) target = $region108
        $region107: #{tpu_custom_call.1} parent=99 // pred_region
          %854 = dma.done %s847, 2048
        $region108: #{tpu_custom_call.1} parent=99 // pred_fallthru
          _
        %s855 = sand.u32 %s45, 1
        %s856 = scalar_lea.sflag [#allocation6], %s855
        %s857 = sand.u32 %s173, 1
        %s858 = smul.addr %s857, 256
        %s859 = scalar_lea.vmem [#allocation7], %s858
        // Predicated region
        $region109: #{tpu_custom_call.1} parent=99 // pred_check
          %p860 = pneg %p186
        $region110: #{tpu_custom_call.1} parent=99 // pred_check_branch
          %862 = sbr.rel (%p860) target = $region112
        $region111: #{tpu_custom_call.1} parent=99 // pred_region
          %863 = dma.done %s856, 4096
        $region112: #{tpu_custom_call.1} parent=99 // pred_fallthru
          _
        %s864 = sand.u32 %s45, 1
        %s865 = scalar_lea.sflag [#allocation9], %s864
        %s866 = sand.u32 %s199, 1
        %s867 = smul.addr %s866, 128
        %s868 = scalar_lea.vmem [#allocation8], %s867
        // Predicated region
        $region113: #{tpu_custom_call.1} parent=99 // pred_check
          %p869 = pneg %p212
        $region114: #{tpu_custom_call.1} parent=99 // pred_check_branch
          %871 = sbr.rel (%p869) target = $region116
        $region115: #{tpu_custom_call.1} parent=99 // pred_region
          %872 = dma.done %s865, 2048
        $region116: #{tpu_custom_call.1} parent=99 // pred_fallthru
          _
        %s873 = sand.u32 %s45, 1
        %s874 = scalar_lea.sflag [#allocation9], %s873
        %s875 = sand.u32 %s303, 1
        %s876 = smul.addr %s875, 128
        %s877 = scalar_lea.vmem [#allocation10], %s876
        // Predicated region
        $region117: #{tpu_custom_call.1} parent=99 // pred_check
          %p878 = pneg %p316
        $region118: #{tpu_custom_call.1} parent=99 // pred_check_branch
          %880 = sbr.rel (%p878) target = $region120
        $region119: #{tpu_custom_call.1} parent=99 // pred_region
          %881 = dma.done %s874, 2048
        $region120: #{tpu_custom_call.1} parent=99 // pred_fallthru
          _
        %s882 = sand.u32 %s45, 1
        %s883 = scalar_lea.sflag [#allocation12], %s882
        %s884 = sand.u32 %s329, 1
        %s885 = smul.addr %s884, 256
        %s886 = scalar_lea.vmem [#allocation11], %s885
        // Predicated region
        $region121: #{tpu_custom_call.1} parent=99 // pred_check
          %p887 = pneg %p342
        $region122: #{tpu_custom_call.1} parent=99 // pred_check_branch
          %889 = sbr.rel (%p887) target = $region124
        $region123: #{tpu_custom_call.1} parent=99 // pred_region
          %890 = dma.done %s883, 4096
        $region124: #{tpu_custom_call.1} parent=99 // pred_fallthru
          _
        %s891 = sand.u32 %s45, 1
        %s892 = scalar_lea.sflag [#allocation12], %s891
        %s893 = sand.u32 %s355, 1
        %s894 = smul.addr %s893, 128
        %s895 = scalar_lea.vmem [#allocation13], %s894
        // Predicated region
        $region125: #{tpu_custom_call.1} parent=99 // pred_check
          %p896 = pneg %p368
        $region126: #{tpu_custom_call.1} parent=99 // pred_check_branch
          %898 = sbr.rel (%p896) target = $region128
        $region127: #{tpu_custom_call.1} parent=99 // pred_region
          %899 = dma.done %s892, 2048
        $region128: #{tpu_custom_call.1} parent=99 // pred_fallthru
          _
        %s900 = sand.u32 %s45, 1
        %s901 = scalar_lea.sflag [#allocation15], %s900
        %s902 = sand.u32 %s459, 1
        %s903 = smul.addr %s902, 128
        %s904 = scalar_lea.vmem [#allocation14], %s903
        // Predicated region
        $region129: #{tpu_custom_call.1} parent=99 // pred_check
          %p905 = pneg %p472
        $region130: #{tpu_custom_call.1} parent=99 // pred_check_branch
          %907 = sbr.rel (%p905) target = $region132
        $region131: #{tpu_custom_call.1} parent=99 // pred_region
          %908 = dma.done %s901, 2048
        $region132: #{tpu_custom_call.1} parent=99 // pred_fallthru
          _
        %s909 = sand.u32 %s45, 1
        %s910 = scalar_lea.sflag [#allocation15], %s909
        %s911 = sand.u32 %s511, 1
        %s912 = smul.addr %s911, 128
        %s913 = scalar_lea.vmem [#allocation16], %s912
        // Predicated region
        $region133: #{tpu_custom_call.1} parent=99 // pred_check
          %p914 = pneg %p524
        $region134: #{tpu_custom_call.1} parent=99 // pred_check_branch
          %916 = sbr.rel (%p914) target = $region136
        $region135: #{tpu_custom_call.1} parent=99 // pred_region
          %917 = dma.done %s910, 2048
        $region136: #{tpu_custom_call.1} parent=99 // pred_fallthru
          _
        %p918 = pneg %p61
        %p919 = pneg %p58
        %p920 = pneg %p82
        %p921 = pneg %p79
        %p922 = scmp.lt.s32.totalorder %s45, 1
        %s923 = scalar_select %p922, %s45, 1
        %s924 = scalar_lea.vmem %s2, %s923
        %p925 = pneg %p108
        %p926 = pneg %p105
        %p927 = scmp.lt.s32.totalorder %s45, 1
        %s928 = scalar_select %p927, %s45, 1
        %s929 = scalar_lea.vmem %s3, %s928
        %p930 = pneg %p134
        %p931 = pneg %p131
        %s932 = sand.u32 %s45, 1
        %s933 = scalar_lea.sflag [#allocation6], %s932
        %s934 = sand.u32 %s147, 1
        %s935 = smul.addr %s934, 128
        %s936 = scalar_lea.vmem [#allocation5], %s935
        %p937 = pneg %p160
        %p938 = pneg %p157
        %s939 = sand.u32 %s45, 1
        %s940 = scalar_lea.sflag [#allocation6], %s939
        %s941 = sand.u32 %s173, 1
        %s942 = smul.addr %s941, 256
        %s943 = scalar_lea.vmem [#allocation7], %s942
        %p944 = pneg %p186
        %p945 = pneg %p183
        %s946 = sand.u32 %s45, 1
        %s947 = scalar_lea.sflag [#allocation9], %s946
        %s948 = sand.u32 %s199, 1
        %s949 = smul.addr %s948, 128
        %s950 = scalar_lea.vmem [#allocation8], %s949
        %p951 = pneg %p212
        %p952 = pneg %p209
        %p953 = scmp.lt.s32.totalorder %s45, 1
        %s954 = scalar_select %p953, %s45, 1
        %s955 = scalar_lea.vmem %s7, %s954
        %p956 = pneg %p238
        %p957 = pneg %p235
        %p958 = scmp.lt.s32.totalorder %s45, 1
        %s959 = scalar_select %p958, %s45, 1
        %s960 = scalar_lea.vmem %s8, %s959
        %p961 = pneg %p264
        %p962 = pneg %p261
        %p963 = scmp.lt.s32.totalorder %s45, 1
        %s964 = scalar_select %p963, %s45, 1
        %s965 = scalar_lea.vmem %s9, %s964
        %p966 = pneg %p290
        %p967 = pneg %p287
        %s968 = sand.u32 %s45, 1
        %s969 = scalar_lea.sflag [#allocation9], %s968
        %s970 = sand.u32 %s303, 1
        %s971 = smul.addr %s970, 128
        %s972 = scalar_lea.vmem [#allocation10], %s971
        %p973 = pneg %p316
        %p974 = pneg %p313
        %s975 = sand.u32 %s45, 1
        %s976 = scalar_lea.sflag [#allocation12], %s975
        %s977 = sand.u32 %s329, 1
        %s978 = smul.addr %s977, 256
        %s979 = scalar_lea.vmem [#allocation11], %s978
        %p980 = pneg %p342
        %p981 = pneg %p339
        %s982 = sand.u32 %s45, 1
        %s983 = scalar_lea.sflag [#allocation12], %s982
        %s984 = sand.u32 %s355, 1
        %s985 = smul.addr %s984, 128
        %s986 = scalar_lea.vmem [#allocation13], %s985
        %p987 = pneg %p368
        %p988 = pneg %p365
        %p989 = scmp.lt.s32.totalorder %s45, 1
        %s990 = scalar_select %p989, %s45, 1
        %s991 = scalar_lea.vmem %s13, %s990
        %p992 = pneg %p394
        %p993 = pneg %p391
        %p994 = scmp.lt.s32.totalorder %s45, 1
        %s995 = scalar_select %p994, %s45, 1
        %s996 = scalar_lea.vmem %s14, %s995
        %p997 = pneg %p420
        %p998 = pneg %p417
        %p999 = scmp.lt.s32.totalorder %s45, 1
        %s1000 = scalar_select %p999, %s45, 1
        %s1001 = scalar_lea.vmem %s15, %s1000
        %p1002 = pneg %p446
        %p1003 = pneg %p443
        %s1004 = sand.u32 %s45, 1
        %s1005 = scalar_lea.sflag [#allocation15], %s1004
        %s1006 = sand.u32 %s459, 1
        %s1007 = smul.addr %s1006, 128
        %s1008 = scalar_lea.vmem [#allocation14], %s1007
        %p1009 = pneg %p472
        %p1010 = pneg %p469
        %p1011 = scmp.lt.s32.totalorder %s45, 1
        %s1012 = scalar_select %p1011, %s45, 1
        %s1013 = smul.addr %s1012, 2
        %s1014 = scalar_lea.vmem %s17, %s1013
        %p1015 = pneg %p498
        %p1016 = pneg %p495
        %s1017 = sand.u32 %s45, 1
        %s1018 = scalar_lea.sflag [#allocation15], %s1017
        %s1019 = sand.u32 %s511, 1
        %s1020 = smul.addr %s1019, 128
        %s1021 = scalar_lea.vmem [#allocation16], %s1020
        %p1022 = pneg %p524
        %p1023 = pneg %p521
        %p1024 = scmp.lt.s32.totalorder %s45, 1
        %s1025 = scalar_select %p1024, %s45, 1
        %s1026 = scalar_lea.vmem %s19, %s1025
        %p1027 = pneg %p550
        %p1028 = pneg %p547
        %p1029 = pneg %p571
        %p1030 = pneg %p568
        %p1031 = scmp.lt.s32.totalorder %s45, 1
        %s1032 = scalar_select %p1031, %s45, 1
        %s1033 = scalar_lea.vmem %s2, %s1032
        %p1034 = scmp.lt.s32.totalorder %s45, 1
        %s1035 = scalar_select %p1034, %s45, 1
        %s1036 = scalar_lea.vmem %s3, %s1035
        %p1037 = scmp.lt.s32.totalorder %s45, 1
        %s1038 = scalar_select %p1037, %s45, 1
        %s1039 = scalar_lea.vmem %s7, %s1038
        %p1040 = scmp.lt.s32.totalorder %s45, 1
        %s1041 = scalar_select %p1040, %s45, 1
        %s1042 = scalar_lea.vmem %s8, %s1041
        %p1043 = scmp.lt.s32.totalorder %s45, 1
        %s1044 = scalar_select %p1043, %s45, 1
        %s1045 = scalar_lea.vmem %s9, %s1044
        %p1046 = scmp.lt.s32.totalorder %s45, 1
        %s1047 = scalar_select %p1046, %s45, 1
        %s1048 = scalar_lea.vmem %s13, %s1047
        %p1049 = scmp.lt.s32.totalorder %s45, 1
        %s1050 = scalar_select %p1049, %s45, 1
        %s1051 = scalar_lea.vmem %s14, %s1050
        %p1052 = scmp.lt.s32.totalorder %s45, 1
        %s1053 = scalar_select %p1052, %s45, 1
        %s1054 = scalar_lea.vmem %s15, %s1053
        %p1055 = scmp.lt.s32.totalorder %s45, 1
        %s1056 = scalar_select %p1055, %s45, 1
        %s1057 = smul.addr %s1056, 2
        %s1058 = scalar_lea.vmem %s17, %s1057
        %p1059 = scmp.lt.s32.totalorder %s45, 1
        %s1060 = scalar_select %p1059, %s45, 1
        %s1061 = scalar_lea.vmem %s19, %s1060
        %p1063 = scmp.eq.s32.totalorder %s45, 0
        // Predicated region
        $region137: #{tpu_custom_call.1} parent=99 // pred_check
          %p1064 = pneg %p1063
        $region138: #{tpu_custom_call.1} parent=99 // pred_check_branch
          %1066 = sbr.rel (%p1064) target = $region140
        $region139: #{tpu_custom_call.1} parent=99 // pred_region
          %v1067 = vld [vmem:[#allocation2] sm:$0xff]
          %v1068 = vld [vmem:[#allocation2 + $0x8] sm:$0xff]
          %1069 = vst [vmem:[#allocation17] sm:$0xff] %v1067
          %1070 = vst [vmem:[#allocation17 + $0x8] sm:$0xff] %v1068
        $region140: #{tpu_custom_call.1} parent=99 // pred_fallthru
          _
        %v1071 = vld [vmem:[#allocation17] sm:$0xff]
        %v1072 = vld [vmem:[#allocation17 + $0x8] sm:$0xff]
        %v1073 = vld [vmem:[%s1033] sm:$0x1]
        %v1074 = vld [vmem:[%s1036] sm:$0x1]
        %1075 = vadd.xlane.f32.xlu0 %v1071
        %v1076 = vpop.xlane.xlu0 %1075
        %1077 = vadd.xlane.f32.xlu0 %v1072
        %v1078 = vpop.xlane.xlu0 %1077
        %v1079 = vrcp.pop 128.0
        %v1080 = vmul.f32 %v1076, %v1079
        %v1081 = vmul.f32 %v1078, %v1079
        %v1082 = vsub.f32 %v1071, %v1080
        %v1083 = vsub.f32 %v1072, %v1081
        %v1084 = vmul.f32 %v1082, %v1082
        %v1085 = vmul.f32 %v1083, %v1083
        %1086 = vadd.xlane.f32.xlu0 %v1084
        %v1087 = vpop.xlane.xlu0 %1086
        %1088 = vadd.xlane.f32.xlu0 %v1085
        %v1089 = vpop.xlane.xlu0 %1088
        %v1090 = vmul.f32 %v1087, %v1079
        %v1091 = vmul.f32 %v1089, %v1079
        %v1092 = vadd.f32 %v1090, 1e-05
        %v1093 = vadd.f32 %v1091, 1e-05
        %v1094 = vrsqrt.pop %v1092
        %v1095 = vrsqrt.pop %v1093
        %v1096 = vmul.f32 %v1082, %v1094
        %v1097 = vmul.f32 %v1083, %v1095
        %v1099 = vlaneseq
        %v1100 = vshrl.u32 %v1099, 7
        %v1101 = vsub.s32 0, %v1100
        %v1102 = vrot.slane %v1073, %v1101
        %v1104 = vmul.f32 %v1096, %v1102
        %v1105 = vmul.f32 %v1097, %v1102
        %v1107 = vlaneseq
        %v1108 = vshrl.u32 %v1107, 7
        %v1109 = vsub.s32 0, %v1108
        %v1110 = vrot.slane %v1074, %v1109
        %v1112 = vadd.f32 %v1104, %v1110
        %v1113 = vadd.f32 %v1105, %v1110
        %v1114 = vld [vmem:[%s850] sm:$0xff]
        %v1115 = vld [vmem:[%s850 + $0x8] sm:$0xff]
        %v1116 = vld [vmem:[%s850 + $0x10] sm:$0xff]
        %v1117 = vld [vmem:[%s850 + $0x18] sm:$0xff]
        %v1118 = vld [vmem:[%s850 + $0x20] sm:$0xff]
        %v1119 = vld [vmem:[%s850 + $0x28] sm:$0xff]
        %v1120 = vld [vmem:[%s850 + $0x30] sm:$0xff]
        %v1121 = vld [vmem:[%s850 + $0x38] sm:$0xff]
        %v1122 = vld [vmem:[%s850 + $0x40] sm:$0xff]
        %v1123 = vld [vmem:[%s850 + $0x48] sm:$0xff]
        %v1124 = vld [vmem:[%s850 + $0x50] sm:$0xff]
        %v1125 = vld [vmem:[%s850 + $0x58] sm:$0xff]
        %v1126 = vld [vmem:[%s850 + $0x60] sm:$0xff]
        %v1127 = vld [vmem:[%s850 + $0x68] sm:$0xff]
        %v1128 = vld [vmem:[%s850 + $0x70] sm:$0xff]
        %v1129 = vld [vmem:[%s850 + $0x78] sm:$0xff]
        %v1130 = vld [vmem:[%s859] sm:$0xff]
        %v1131 = vld [vmem:[%s859 + $0x8] sm:$0xff]
        %v1132 = vld [vmem:[%s859 + $0x10] sm:$0xff]
        %v1133 = vld [vmem:[%s859 + $0x18] sm:$0xff]
        %v1134 = vld [vmem:[%s859 + $0x20] sm:$0xff]
        %v1135 = vld [vmem:[%s859 + $0x28] sm:$0xff]
        %v1136 = vld [vmem:[%s859 + $0x30] sm:$0xff]
        %v1137 = vld [vmem:[%s859 + $0x38] sm:$0xff]
        %v1138 = vld [vmem:[%s859 + $0x40] sm:$0xff]
        %v1139 = vld [vmem:[%s859 + $0x48] sm:$0xff]
        %v1140 = vld [vmem:[%s859 + $0x50] sm:$0xff]
        %v1141 = vld [vmem:[%s859 + $0x58] sm:$0xff]
        %v1142 = vld [vmem:[%s859 + $0x60] sm:$0xff]
        %v1143 = vld [vmem:[%s859 + $0x68] sm:$0xff]
        %v1144 = vld [vmem:[%s859 + $0x70] sm:$0xff]
        %v1145 = vld [vmem:[%s859 + $0x78] sm:$0xff]
        %v1146 = vld [vmem:[%s859 + $0x80] sm:$0xff]
        %v1147 = vld [vmem:[%s859 + $0x88] sm:$0xff]
        %v1148 = vld [vmem:[%s859 + $0x90] sm:$0xff]
        %v1149 = vld [vmem:[%s859 + $0x98] sm:$0xff]
        %v1150 = vld [vmem:[%s859 + $0xa0] sm:$0xff]
        %v1151 = vld [vmem:[%s859 + $0xa8] sm:$0xff]
        %v1152 = vld [vmem:[%s859 + $0xb0] sm:$0xff]
        %v1153 = vld [vmem:[%s859 + $0xb8] sm:$0xff]
        %v1154 = vld [vmem:[%s859 + $0xc0] sm:$0xff]
        %v1155 = vld [vmem:[%s859 + $0xc8] sm:$0xff]
        %v1156 = vld [vmem:[%s859 + $0xd0] sm:$0xff]
        %v1157 = vld [vmem:[%s859 + $0xd8] sm:$0xff]
        %v1158 = vld [vmem:[%s859 + $0xe0] sm:$0xff]
        %v1159 = vld [vmem:[%s859 + $0xe8] sm:$0xff]
        %v1160 = vld [vmem:[%s859 + $0xf0] sm:$0xff]
        %v1161 = vld [vmem:[%s859 + $0xf8] sm:$0xff]
        %v1162 = vld [vmem:[%s868] sm:$0xf]
        %v1163 = vld [vmem:[%s868 + $0x4] sm:$0xf]
        %v1164 = vld [vmem:[%s868 + $0x8] sm:$0xf]
        %v1165 = vld [vmem:[%s868 + $0xc] sm:$0xf]
        %v1166 = vld [vmem:[%s868 + $0x10] sm:$0xf]
        %v1167 = vld [vmem:[%s868 + $0x14] sm:$0xf]
        %v1168 = vld [vmem:[%s868 + $0x18] sm:$0xf]
        %v1169 = vld [vmem:[%s868 + $0x1c] sm:$0xf]
        %v1170 = vld [vmem:[%s868 + $0x20] sm:$0xf]
        %v1171 = vld [vmem:[%s868 + $0x24] sm:$0xf]
        %v1172 = vld [vmem:[%s868 + $0x28] sm:$0xf]
        %v1173 = vld [vmem:[%s868 + $0x2c] sm:$0xf]
        %v1174 = vld [vmem:[%s868 + $0x30] sm:$0xf]
        %v1175 = vld [vmem:[%s868 + $0x34] sm:$0xf]
        %v1176 = vld [vmem:[%s868 + $0x38] sm:$0xf]
        %v1177 = vld [vmem:[%s868 + $0x3c] sm:$0xf]
        %v1178 = vld [vmem:[%s868 + $0x40] sm:$0xf]
        %v1179 = vld [vmem:[%s868 + $0x44] sm:$0xf]
        %v1180 = vld [vmem:[%s868 + $0x48] sm:$0xf]
        %v1181 = vld [vmem:[%s868 + $0x4c] sm:$0xf]
        %v1182 = vld [vmem:[%s868 + $0x50] sm:$0xf]
        %v1183 = vld [vmem:[%s868 + $0x54] sm:$0xf]
        %v1184 = vld [vmem:[%s868 + $0x58] sm:$0xf]
        %v1185 = vld [vmem:[%s868 + $0x5c] sm:$0xf]
        %v1186 = vld [vmem:[%s868 + $0x60] sm:$0xf]
        %v1187 = vld [vmem:[%s868 + $0x64] sm:$0xf]
        %v1188 = vld [vmem:[%s868 + $0x68] sm:$0xf]
        %v1189 = vld [vmem:[%s868 + $0x6c] sm:$0xf]
        %v1190 = vld [vmem:[%s868 + $0x70] sm:$0xf]
        %v1191 = vld [vmem:[%s868 + $0x74] sm:$0xf]
        %v1192 = vld [vmem:[%s868 + $0x78] sm:$0xf]
        %v1193 = vld [vmem:[%s868 + $0x7c] sm:$0xf]
        %v1194 = vld [vmem:[%s1039] sm:$0x1]
        %v1195 = vpack.c.bf16 %v1113, %v1112
        %v1212 = vunpack.c.l.b16 %v1114
        %v1213 = vunpack.c.h.b16 %v1114
        %v1214 = vunpack.c.l.b16 %v1115
        %v1215 = vunpack.c.h.b16 %v1115
        %v1216 = vunpack.c.l.b16 %v1116
        %v1217 = vunpack.c.h.b16 %v1116
        %v1218 = vunpack.c.l.b16 %v1117
        %v1219 = vunpack.c.h.b16 %v1117
        %v1220 = vunpack.c.l.b16 %v1118
        %v1221 = vunpack.c.h.b16 %v1118
        %v1222 = vunpack.c.l.b16 %v1119
        %v1223 = vunpack.c.h.b16 %v1119
        %v1224 = vunpack.c.l.b16 %v1120
        %v1225 = vunpack.c.h.b16 %v1120
        %v1226 = vunpack.c.l.b16 %v1121
        %v1227 = vunpack.c.h.b16 %v1121
        %v1228 = vunpack.c.l.b16 %v1122
        %v1229 = vunpack.c.h.b16 %v1122
        %v1230 = vunpack.c.l.b16 %v1123
        %v1231 = vunpack.c.h.b16 %v1123
        %v1232 = vunpack.c.l.b16 %v1124
        %v1233 = vunpack.c.h.b16 %v1124
        %v1234 = vunpack.c.l.b16 %v1125
        %v1235 = vunpack.c.h.b16 %v1125
        %v1236 = vunpack.c.l.b16 %v1126
        %v1237 = vunpack.c.h.b16 %v1126
        %v1238 = vunpack.c.l.b16 %v1127
        %v1239 = vunpack.c.h.b16 %v1127
        %v1240 = vunpack.c.l.b16 %v1128
        %v1241 = vunpack.c.h.b16 %v1128
        %v1242 = vunpack.c.l.b16 %v1129
        %v1243 = vunpack.c.h.b16 %v1129
        %v1244 = vpack.c.b16 %v1214, %v1212
        %v1245 = vpack.c.b16 %v1215, %v1213
        %v1246 = vpack.c.b16 %v1218, %v1216
        %v1247 = vpack.c.b16 %v1219, %v1217
        %v1248 = vpack.c.b16 %v1222, %v1220
        %v1249 = vpack.c.b16 %v1223, %v1221
        %v1250 = vpack.c.b16 %v1226, %v1224
        %v1251 = vpack.c.b16 %v1227, %v1225
        %v1252 = vpack.c.b16 %v1230, %v1228
        %v1253 = vpack.c.b16 %v1231, %v1229
        %v1254 = vpack.c.b16 %v1234, %v1232
        %v1255 = vpack.c.b16 %v1235, %v1233
        %v1256 = vpack.c.b16 %v1238, %v1236
        %v1257 = vpack.c.b16 %v1239, %v1237
        %v1258 = vpack.c.b16 %v1242, %v1240
        %v1259 = vpack.c.b16 %v1243, %v1241
        %1276 = vmatprep.subr.bf16.mxu0 %v1245
        %1277 = vmatpush1.bf16.msra.mxu0 %v1244
        %1278 = vmatprep.subr.bf16.mxu0 %v1247
        %1279 = vmatpush1.bf16.msra.mxu0 %v1246
        %1280 = vmatprep.subr.bf16.mxu0 %v1249
        %1281 = vmatpush1.bf16.msra.mxu0 %v1248
        %1282 = vmatprep.subr.bf16.mxu0 %v1251
        %1283 = vmatpush1.bf16.msra.mxu0 %v1250
        %1284 = vmatprep.subr.bf16.mxu0 %v1253
        %1285 = vmatpush1.bf16.msra.mxu0 %v1252
        %1286 = vmatprep.subr.bf16.mxu0 %v1255
        %1287 = vmatpush1.bf16.msra.mxu0 %v1254
        %1288 = vmatprep.subr.bf16.mxu0 %v1257
        %1289 = vmatpush1.bf16.msra.mxu0 %v1256
        %1290 = vmatprep.subr.bf16.mxu0 %v1259
        %1291 = vmatpush1.bf16.msra.mxu0 %v1258
        %1292 = vmatprep.subr.bf16.mxu0 0
        %1293 = vmatpush1.bf16.msra.mxu0 0
        %1294 = vmatprep.subr.bf16.mxu0 0
        %1295 = vmatpush1.bf16.msra.mxu0 0
        %1296 = vmatprep.subr.bf16.mxu0 0
        %1297 = vmatpush1.bf16.msra.mxu0 0
        %1298 = vmatprep.subr.bf16.mxu0 0
        %1299 = vmatpush1.bf16.msra.mxu0 0
        %1300 = vmatprep.subr.bf16.mxu0 0
        %1301 = vmatpush1.bf16.msra.mxu0 0
        %1302 = vmatprep.subr.bf16.mxu0 0
        %1303 = vmatpush1.bf16.msra.mxu0 0
        %1304 = vmatprep.subr.bf16.mxu0 0
        %1305 = vmatpush1.bf16.msra.mxu0 0
        %1306 = vmatprep.subr.bf16.mxu0 0
        %1307 = vmatpush1.bf16.msra.mxu0 0
        %1308 = vmatprep.mubr.bf16.mxu0 0
        %1309 = vmatmul.mubr.bf16.gmra.mrb[0].mxu0 %v1195
        %v1310 = vpop.f32.mrb[0].mxu0
        %v1311 = vadd.f32 0.0, %v1310
        %v1312 = vpop.f32.mrb[0].mxu0
        %v1313 = vadd.f32 0.0, %v1312
        %v1314 = vpop.f32.mrb[0].mxu0
        %v1315 = vadd.f32 0.0, %v1314
        %v1316 = vpop.f32.mrb[0].mxu0
        %v1317 = vadd.f32 0.0, %v1316
        %1318 = vdwg.mxu0
        %v1319 = vmul.f32 %v1311, 0.088388346
        %v1320 = vmul.f32 %v1313, 0.088388346
        %v1321 = vmul.f32 %v1315, 0.088388346
        %v1322 = vmul.f32 %v1317, 0.088388346
        %v1355 = vunpack.c.l.b16 %v1130
        %v1356 = vunpack.c.h.b16 %v1130
        %v1357 = vunpack.c.l.b16 %v1131
        %v1358 = vunpack.c.h.b16 %v1131
        %v1359 = vunpack.c.l.b16 %v1132
        %v1360 = vunpack.c.h.b16 %v1132
        %v1361 = vunpack.c.l.b16 %v1133
        %v1362 = vunpack.c.h.b16 %v1133
        %v1363 = vunpack.c.l.b16 %v1134
        %v1364 = vunpack.c.h.b16 %v1134
        %v1365 = vunpack.c.l.b16 %v1135
        %v1366 = vunpack.c.h.b16 %v1135
        %v1367 = vunpack.c.l.b16 %v1136
        %v1368 = vunpack.c.h.b16 %v1136
        %v1369 = vunpack.c.l.b16 %v1137
        %v1370 = vunpack.c.h.b16 %v1137
        %v1371 = vunpack.c.l.b16 %v1138
        %v1372 = vunpack.c.h.b16 %v1138
        %v1373 = vunpack.c.l.b16 %v1139
        %v1374 = vunpack.c.h.b16 %v1139
        %v1375 = vunpack.c.l.b16 %v1140
        %v1376 = vunpack.c.h.b16 %v1140
        %v1377 = vunpack.c.l.b16 %v1141
        %v1378 = vunpack.c.h.b16 %v1141
        %v1379 = vunpack.c.l.b16 %v1142
        %v1380 = vunpack.c.h.b16 %v1142
        %v1381 = vunpack.c.l.b16 %v1143
        %v1382 = vunpack.c.h.b16 %v1143
        %v1383 = vunpack.c.l.b16 %v1144
        %v1384 = vunpack.c.h.b16 %v1144
        %v1385 = vunpack.c.l.b16 %v1145
        %v1386 = vunpack.c.h.b16 %v1145
        %v1387 = vunpack.c.l.b16 %v1146
        %v1388 = vunpack.c.h.b16 %v1146
        %v1389 = vunpack.c.l.b16 %v1147
        %v1390 = vunpack.c.h.b16 %v1147
        %v1391 = vunpack.c.l.b16 %v1148
        %v1392 = vunpack.c.h.b16 %v1148
        %v1393 = vunpack.c.l.b16 %v1149
        %v1394 = vunpack.c.h.b16 %v1149
        %v1395 = vunpack.c.l.b16 %v1150
        %v1396 = vunpack.c.h.b16 %v1150
        %v1397 = vunpack.c.l.b16 %v1151
        %v1398 = vunpack.c.h.b16 %v1151
        %v1399 = vunpack.c.l.b16 %v1152
        %v1400 = vunpack.c.h.b16 %v1152
        %v1401 = vunpack.c.l.b16 %v1153
        %v1402 = vunpack.c.h.b16 %v1153
        %v1403 = vunpack.c.l.b16 %v1154
        %v1404 = vunpack.c.h.b16 %v1154
        %v1405 = vunpack.c.l.b16 %v1155
        %v1406 = vunpack.c.h.b16 %v1155
        %v1407 = vunpack.c.l.b16 %v1156
        %v1408 = vunpack.c.h.b16 %v1156
        %v1409 = vunpack.c.l.b16 %v1157
        %v1410 = vunpack.c.h.b16 %v1157
        %v1411 = vunpack.c.l.b16 %v1158
        %v1412 = vunpack.c.h.b16 %v1158
        %v1413 = vunpack.c.l.b16 %v1159
        %v1414 = vunpack.c.h.b16 %v1159
        %v1415 = vunpack.c.l.b16 %v1160
        %v1416 = vunpack.c.h.b16 %v1160
        %v1417 = vunpack.c.l.b16 %v1161
        %v1418 = vunpack.c.h.b16 %v1161
        %v1419 = vpack.c.b16 %v1359, %v1355
        %v1420 = vpack.c.b16 %v1360, %v1356
        %v1421 = vpack.c.b16 %v1361, %v1357
        %v1422 = vpack.c.b16 %v1362, %v1358
        %v1423 = vpack.c.b16 %v1367, %v1363
        %v1424 = vpack.c.b16 %v1368, %v1364
        %v1425 = vpack.c.b16 %v1369, %v1365
        %v1426 = vpack.c.b16 %v1370, %v1366
        %v1427 = vpack.c.b16 %v1375, %v1371
        %v1428 = vpack.c.b16 %v1376, %v1372
        %v1429 = vpack.c.b16 %v1377, %v1373
        %v1430 = vpack.c.b16 %v1378, %v1374
        %v1431 = vpack.c.b16 %v1383, %v1379
        %v1432 = vpack.c.b16 %v1384, %v1380
        %v1433 = vpack.c.b16 %v1385, %v1381
        %v1434 = vpack.c.b16 %v1386, %v1382
        %v1435 = vpack.c.b16 %v1391, %v1387
        %v1436 = vpack.c.b16 %v1392, %v1388
        %v1437 = vpack.c.b16 %v1393, %v1389
        %v1438 = vpack.c.b16 %v1394, %v1390
        %v1439 = vpack.c.b16 %v1399, %v1395
        %v1440 = vpack.c.b16 %v1400, %v1396
        %v1441 = vpack.c.b16 %v1401, %v1397
        %v1442 = vpack.c.b16 %v1402, %v1398
        %v1443 = vpack.c.b16 %v1407, %v1403
        %v1444 = vpack.c.b16 %v1408, %v1404
        %v1445 = vpack.c.b16 %v1409, %v1405
        %v1446 = vpack.c.b16 %v1410, %v1406
        %v1447 = vpack.c.b16 %v1415, %v1411
        %v1448 = vpack.c.b16 %v1416, %v1412
        %v1449 = vpack.c.b16 %v1417, %v1413
        %v1450 = vpack.c.b16 %v1418, %v1414
        %1483 = vmatprep.subr.bf16.mxu0 %v1420
        %1484 = vmatpush1.bf16.msra.mxu0 %v1419
        %1485 = vmatprep.subr.bf16.mxu0 %v1424
        %1486 = vmatpush1.bf16.msra.mxu0 %v1423
        %1487 = vmatprep.subr.bf16.mxu0 %v1428
        %1488 = vmatpush1.bf16.msra.mxu0 %v1427
        %1489 = vmatprep.subr.bf16.mxu0 %v1432
        %1490 = vmatpush1.bf16.msra.mxu0 %v1431
        %1491 = vmatprep.subr.bf16.mxu0 %v1436
        %1492 = vmatpush1.bf16.msra.mxu0 %v1435
        %1493 = vmatprep.subr.bf16.mxu0 %v1440
        %1494 = vmatpush1.bf16.msra.mxu0 %v1439
        %1495 = vmatprep.subr.bf16.mxu0 %v1444
        %1496 = vmatpush1.bf16.msra.mxu0 %v1443
        %1497 = vmatprep.subr.bf16.mxu0 %v1448
        %1498 = vmatpush1.bf16.msra.mxu0 %v1447
        %1499 = vmatprep.subr.bf16.mxu0 0
        %1500 = vmatpush1.bf16.msra.mxu0 0
        %1501 = vmatprep.subr.bf16.mxu0 0
        %1502 = vmatpush1.bf16.msra.mxu0 0
        %1503 = vmatprep.subr.bf16.mxu0 0
        %1504 = vmatpush1.bf16.msra.mxu0 0
        %1505 = vmatprep.subr.bf16.mxu0 0
        %1506 = vmatpush1.bf16.msra.mxu0 0
        %1507 = vmatprep.subr.bf16.mxu0 0
        %1508 = vmatpush1.bf16.msra.mxu0 0
        %1509 = vmatprep.subr.bf16.mxu0 0
        %1510 = vmatpush1.bf16.msra.mxu0 0
        %1511 = vmatprep.subr.bf16.mxu0 0
        %1512 = vmatpush1.bf16.msra.mxu0 0
        %1513 = vmatprep.subr.bf16.mxu0 0
        %1514 = vmatpush1.bf16.msra.mxu0 0
        %1515 = vmatprep.mubr.bf16.mxu0 0
        %1516 = vmatmul.mubr.bf16.gmra.mrb[0].mxu0 %v1195
        %v1517 = vpop.f32.mrb[0].mxu0
        %v1518 = vadd.f32 0.0, %v1517
        %v1519 = vpop.f32.mrb[0].mxu0
        %v1520 = vadd.f32 0.0, %v1519
        %v1521 = vpop.f32.mrb[0].mxu0
        %v1522 = vadd.f32 0.0, %v1521
        %v1523 = vpop.f32.mrb[0].mxu0
        %v1524 = vadd.f32 0.0, %v1523
        %1525 = vdwg.mxu0
        %1526 = vmatprep.subr.bf16.mxu0 %v1422
        %1527 = vmatpush1.bf16.msra.mxu0 %v1421
        %1528 = vmatprep.subr.bf16.mxu0 %v1426
        %1529 = vmatpush1.bf16.msra.mxu0 %v1425
        %1530 = vmatprep.subr.bf16.mxu0 %v1430
        %1531 = vmatpush1.bf16.msra.mxu0 %v1429
        %1532 = vmatprep.subr.bf16.mxu0 %v1434
        %1533 = vmatpush1.bf16.msra.mxu0 %v1433
        %1534 = vmatprep.subr.bf16.mxu0 %v1438
        %1535 = vmatpush1.bf16.msra.mxu0 %v1437
        %1536 = vmatprep.subr.bf16.mxu0 %v1442
        %1537 = vmatpush1.bf16.msra.mxu0 %v1441
        %1538 = vmatprep.subr.bf16.mxu0 %v1446
        %1539 = vmatpush1.bf16.msra.mxu0 %v1445
        %1540 = vmatprep.subr.bf16.mxu0 %v1450
        %1541 = vmatpush1.bf16.msra.mxu0 %v1449
        %1542 = vmatprep.subr.bf16.mxu0 0
        %1543 = vmatpush1.bf16.msra.mxu0 0
        %1544 = vmatprep.subr.bf16.mxu0 0
        %1545 = vmatpush1.bf16.msra.mxu0 0
        %1546 = vmatprep.subr.bf16.mxu0 0
        %1547 = vmatpush1.bf16.msra.mxu0 0
        %1548 = vmatprep.subr.bf16.mxu0 0
        %1549 = vmatpush1.bf16.msra.mxu0 0
        %1550 = vmatprep.subr.bf16.mxu0 0
        %1551 = vmatpush1.bf16.msra.mxu0 0
        %1552 = vmatprep.subr.bf16.mxu0 0
        %1553 = vmatpush1.bf16.msra.mxu0 0
        %1554 = vmatprep.subr.bf16.mxu0 0
        %1555 = vmatpush1.bf16.msra.mxu0 0
        %1556 = vmatprep.subr.bf16.mxu0 0
        %1557 = vmatpush1.bf16.msra.mxu0 0
        %1558 = vmatprep.mubr.bf16.mxu0 0
        %1559 = vmatmul.mubr.bf16.gmra.mrb[0].mxu0 %v1195
        %v1560 = vpop.f32.mrb[0].mxu0
        %v1561 = vadd.f32 0.0, %v1560
        %v1562 = vpop.f32.mrb[0].mxu0
        %v1563 = vadd.f32 0.0, %v1562
        %v1564 = vpop.f32.mrb[0].mxu0
        %v1565 = vadd.f32 0.0, %v1564
        %v1566 = vpop.f32.mrb[0].mxu0
        %v1567 = vadd.f32 0.0, %v1566
        %1568 = vdwg.mxu0
        %v1569 = vpack.c.bf16 %v1319, %v1319
        %v1570 = vpack.c.bf16 %v1321, %v1321
        %v1571 = vpack.c.bf16 %v1320, %v1320
        %v1572 = vpack.c.bf16 %v1322, %v1322
        %v1573 = vpack.c.bf16 %v1518, %v1518
        %v1574 = vpack.c.bf16 %v1522, %v1522
        %v1575 = vpack.c.bf16 %v1520, %v1520
        %v1576 = vpack.c.bf16 %v1524, %v1524
        %v1577 = vpack.c.bf16 %v1561, %v1561
        %v1578 = vpack.c.bf16 %v1565, %v1565
        %v1579 = vpack.c.bf16 %v1563, %v1563
        %v1580 = vpack.c.bf16 %v1567, %v1567
        %1581 = vmatprep.subr.bf16.mxu0 0
        %1582 = vmatpush1.bf16.xpose.msra.mxu0 %v1573
        %1583 = vmatprep.subr.bf16.mxu0 0
        %1584 = vmatpush1.bf16.xpose.msra.mxu0 0
        %1585 = vmatprep.subr.bf16.mxu0 0
        %1586 = vmatpush1.bf16.xpose.msra.mxu0 0
        %1587 = vmatprep.subr.bf16.mxu0 0
        %1588 = vmatpush1.bf16.xpose.msra.mxu0 0
        %1589 = vmatprep.subr.bf16.mxu0 0
        %1590 = vmatpush1.bf16.xpose.msra.mxu0 0
        %1591 = vmatprep.subr.bf16.mxu0 0
        %1592 = vmatpush1.bf16.xpose.msra.mxu0 0
        %1593 = vmatprep.subr.bf16.mxu0 0
        %1594 = vmatpush1.bf16.xpose.msra.mxu0 0
        %1595 = vmatprep.subr.bf16.mxu0 0
        %1596 = vmatpush1.bf16.xpose.msra.mxu0 0
        %1597 = vmatprep.subr.bf16.mxu0 0
        %1598 = vmatpush1.bf16.xpose.msra.mxu0 0
        %1599 = vmatprep.subr.bf16.mxu0 0
        %1600 = vmatpush1.bf16.xpose.msra.mxu0 0
        %1601 = vmatprep.subr.bf16.mxu0 0
        %1602 = vmatpush1.bf16.xpose.msra.mxu0 0
        %1603 = vmatprep.subr.bf16.mxu0 0
        %1604 = vmatpush1.bf16.xpose.msra.mxu0 0
        %1605 = vmatprep.subr.bf16.mxu0 0
        %1606 = vmatpush1.bf16.xpose.msra.mxu0 0
        %1607 = vmatprep.subr.bf16.mxu0 0
        %1608 = vmatpush1.bf16.xpose.msra.mxu0 0
        %1609 = vmatprep.subr.bf16.mxu0 0
        %1610 = vmatpush1.bf16.xpose.msra.mxu0 0
        %1611 = vmatprep.subr.bf16.mxu0 0
        %1612 = vmatpush1.bf16.xpose.msra.mxu0 0
        %1613 = vmatprep.mubr.bf16.mxu0 0
        %1614 = vmatmul.mubr.bf16.gmra.mrb[0].mxu0 %v1569
        %v1615 = vpop.f32.mrb[0].mxu0
        %v1616 = vadd.f32 0.0, %v1615
        %v1617 = vpop.f32.mrb[0].mxu0
        %v1618 = vpop.f32.mrb[0].mxu0
        %v1619 = vpop.f32.mrb[0].mxu0
        %1620 = vdwg.mxu0
        %1621 = vmatprep.subr.bf16.mxu0 0
        %1622 = vmatpush1.bf16.xpose.msra.mxu0 %v1574
        %1623 = vmatprep.subr.bf16.mxu0 0
        %1624 = vmatpush1.bf16.xpose.msra.mxu0 0
        %1625 = vmatprep.subr.bf16.mxu0 0
        %1626 = vmatpush1.bf16.xpose.msra.mxu0 0
        %1627 = vmatprep.subr.bf16.mxu0 0
        %1628 = vmatpush1.bf16.xpose.msra.mxu0 0
        %1629 = vmatprep.subr.bf16.mxu0 0
        %1630 = vmatpush1.bf16.xpose.msra.mxu0 0
        %1631 = vmatprep.subr.bf16.mxu0 0
        %1632 = vmatpush1.bf16.xpose.msra.mxu0 0
        %1633 = vmatprep.subr.bf16.mxu0 0
        %1634 = vmatpush1.bf16.xpose.msra.mxu0 0
        %1635 = vmatprep.subr.bf16.mxu0 0
        %1636 = vmatpush1.bf16.xpose.msra.mxu0 0
        %1637 = vmatprep.subr.bf16.mxu0 0
        %1638 = vmatpush1.bf16.xpose.msra.mxu0 0
        %1639 = vmatprep.subr.bf16.mxu0 0
        %1640 = vmatpush1.bf16.xpose.msra.mxu0 0
        %1641 = vmatprep.subr.bf16.mxu0 0
        %1642 = vmatpush1.bf16.xpose.msra.mxu0 0
        %1643 = vmatprep.subr.bf16.mxu0 0
        %1644 = vmatpush1.bf16.xpose.msra.mxu0 0
        %1645 = vmatprep.subr.bf16.mxu0 0
        %1646 = vmatpush1.bf16.xpose.msra.mxu0 0
        %1647 = vmatprep.subr.bf16.mxu0 0
        %1648 = vmatpush1.bf16.xpose.msra.mxu0 0
        %1649 = vmatprep.subr.bf16.mxu0 0
        %1650 = vmatpush1.bf16.xpose.msra.mxu0 0
        %1651 = vmatprep.subr.bf16.mxu0 0
        %1652 = vmatpush1.bf16.xpose.msra.mxu0 0
        %1653 = vmatprep.mubr.bf16.mxu0 0
        %1654 = vmatmul.mubr.bf16.gmra.mrb[0].mxu0 %v1570
        %v1655 = vpop.f32.mrb[0].mxu0
        %v1656 = vadd.f32 0.0, %v1655
        %v1657 = vpop.f32.mrb[0].mxu0
        %v1658 = vpop.f32.mrb[0].mxu0
        %v1659 = vpop.f32.mrb[0].mxu0
        %1660 = vdwg.mxu0
        %1661 = vmatprep.subr.bf16.mxu0 0
        %1662 = vmatpush1.bf16.xpose.msra.mxu0 %v1575
        %1663 = vmatprep.subr.bf16.mxu0 0
        %1664 = vmatpush1.bf16.xpose.msra.mxu0 0
        %1665 = vmatprep.subr.bf16.mxu0 0
        %1666 = vmatpush1.bf16.xpose.msra.mxu0 0
        %1667 = vmatprep.subr.bf16.mxu0 0
        %1668 = vmatpush1.bf16.xpose.msra.mxu0 0
        %1669 = vmatprep.subr.bf16.mxu0 0
        %1670 = vmatpush1.bf16.xpose.msra.mxu0 0
        %1671 = vmatprep.subr.bf16.mxu0 0
        %1672 = vmatpush1.bf16.xpose.msra.mxu0 0
        %1673 = vmatprep.subr.bf16.mxu0 0
        %1674 = vmatpush1.bf16.xpose.msra.mxu0 0
        %1675 = vmatprep.subr.bf16.mxu0 0
        %1676 = vmatpush1.bf16.xpose.msra.mxu0 0
        %1677 = vmatprep.subr.bf16.mxu0 0
        %1678 = vmatpush1.bf16.xpose.msra.mxu0 0
        %1679 = vmatprep.subr.bf16.mxu0 0
        %1680 = vmatpush1.bf16.xpose.msra.mxu0 0
        %1681 = vmatprep.subr.bf16.mxu0 0
        %1682 = vmatpush1.bf16.xpose.msra.mxu0 0
        %1683 = vmatprep.subr.bf16.mxu0 0
        %1684 = vmatpush1.bf16.xpose.msra.mxu0 0
        %1685 = vmatprep.subr.bf16.mxu0 0
        %1686 = vmatpush1.bf16.xpose.msra.mxu0 0
        %1687 = vmatprep.subr.bf16.mxu0 0
        %1688 = vmatpush1.bf16.xpose.msra.mxu0 0
        %1689 = vmatprep.subr.bf16.mxu0 0
        %1690 = vmatpush1.bf16.xpose.msra.mxu0 0
        %1691 = vmatprep.subr.bf16.mxu0 0
        %1692 = vmatpush1.bf16.xpose.msra.mxu0 0
        %1693 = vmatprep.mubr.bf16.mxu0 0
        %1694 = vmatmul.mubr.bf16.gmra.mrb[0].mxu0 %v1571
        %v1695 = vpop.f32.mrb[0].mxu0
        %v1696 = vadd.f32 0.0, %v1695
        %v1697 = vpop.f32.mrb[0].mxu0
        %v1698 = vpop.f32.mrb[0].mxu0
        %v1699 = vpop.f32.mrb[0].mxu0
        %1700 = vdwg.mxu0
        %1701 = vmatprep.subr.bf16.mxu0 0
        %1702 = vmatpush1.bf16.xpose.msra.mxu0 %v1576
        %1703 = vmatprep.subr.bf16.mxu0 0
        %1704 = vmatpush1.bf16.xpose.msra.mxu0 0
        %1705 = vmatprep.subr.bf16.mxu0 0
        %1706 = vmatpush1.bf16.xpose.msra.mxu0 0
        %1707 = vmatprep.subr.bf16.mxu0 0
        %1708 = vmatpush1.bf16.xpose.msra.mxu0 0
        %1709 = vmatprep.subr.bf16.mxu0 0
        %1710 = vmatpush1.bf16.xpose.msra.mxu0 0
        %1711 = vmatprep.subr.bf16.mxu0 0
        %1712 = vmatpush1.bf16.xpose.msra.mxu0 0
        %1713 = vmatprep.subr.bf16.mxu0 0
        %1714 = vmatpush1.bf16.xpose.msra.mxu0 0
        %1715 = vmatprep.subr.bf16.mxu0 0
        %1716 = vmatpush1.bf16.xpose.msra.mxu0 0
        %1717 = vmatprep.subr.bf16.mxu0 0
        %1718 = vmatpush1.bf16.xpose.msra.mxu0 0
        %1719 = vmatprep.subr.bf16.mxu0 0
        %1720 = vmatpush1.bf16.xpose.msra.mxu0 0
        %1721 = vmatprep.subr.bf16.mxu0 0
        %1722 = vmatpush1.bf16.xpose.msra.mxu0 0
        %1723 = vmatprep.subr.bf16.mxu0 0
        %1724 = vmatpush1.bf16.xpose.msra.mxu0 0
        %1725 = vmatprep.subr.bf16.mxu0 0
        %1726 = vmatpush1.bf16.xpose.msra.mxu0 0
        %1727 = vmatprep.subr.bf16.mxu0 0
        %1728 = vmatpush1.bf16.xpose.msra.mxu0 0
        %1729 = vmatprep.subr.bf16.mxu0 0
        %1730 = vmatpush1.bf16.xpose.msra.mxu0 0
        %1731 = vmatprep.subr.bf16.mxu0 0
        %1732 = vmatpush1.bf16.xpose.msra.mxu0 0
        %1733 = vmatprep.mubr.bf16.mxu0 0
        %1734 = vmatmul.mubr.bf16.gmra.mrb[0].mxu0 %v1572
        %v1735 = vpop.f32.mrb[0].mxu0
        %v1736 = vadd.f32 0.0, %v1735
        %v1737 = vpop.f32.mrb[0].mxu0
        %v1738 = vpop.f32.mrb[0].mxu0
        %v1739 = vpop.f32.mrb[0].mxu0
        %1740 = vdwg.mxu0
        %vm1741 = vcmask 64512
        %v1742 = vsel %vm1741, %v1616, -inf
        %1743 = vmax.xlane.f32.xlu0 %v1742
        %v1744 = vpop.xlane.xlu0 %1743
        %v1745 = vsel %vm1741, %v1656, -inf
        %1746 = vmax.xlane.f32.xlu0 %v1745
        %v1747 = vpop.xlane.xlu0 %1746
        %v1748 = vsel %vm1741, %v1696, -inf
        %1749 = vmax.xlane.f32.xlu0 %v1748
        %v1750 = vpop.xlane.xlu0 %1749
        %v1751 = vsel %vm1741, %v1736, -inf
        %1752 = vmax.xlane.f32.xlu0 %v1751
        %v1753 = vpop.xlane.xlu0 %1752
        %v1754 = vsub.f32 %v1616, %v1744
        %v1755 = vsub.f32 %v1656, %v1747
        %v1756 = vsub.f32 %v1696, %v1750
        %v1757 = vsub.f32 %v1736, %v1753
        %v1758 = vmul.f32 %v1754, 1.442695
        %v1759 = vpow.pop %v1758
        %v1760 = vmul.f32 %v1755, 1.442695
        %v1761 = vpow.pop %v1760
        %v1762 = vmul.f32 %v1756, 1.442695
        %v1763 = vpow.pop %v1762
        %v1764 = vmul.f32 %v1757, 1.442695
        %v1765 = vpow.pop %v1764
        %v1766 = vsel %vm1741, %v1759, 0.0
        %1767 = vadd.xlane.f32.xlu0 %v1766
        %v1768 = vpop.xlane.xlu0 %1767
        %v1769 = vsel %vm1741, %v1761, 0.0
        %1770 = vadd.xlane.f32.xlu0 %v1769
        %v1771 = vpop.xlane.xlu0 %1770
        %v1772 = vsel %vm1741, %v1763, 0.0
        %1773 = vadd.xlane.f32.xlu0 %v1772
        %v1774 = vpop.xlane.xlu0 %1773
        %v1775 = vsel %vm1741, %v1765, 0.0
        %1776 = vadd.xlane.f32.xlu0 %v1775
        %v1777 = vpop.xlane.xlu0 %1776
        %v1778 = vrcp.pop %v1768
        %v1779 = vmul.f32 %v1759, %v1778
        %v1780 = vrcp.pop %v1771
        %v1781 = vmul.f32 %v1761, %v1780
        %v1782 = vrcp.pop %v1774
        %v1783 = vmul.f32 %v1763, %v1782
        %v1784 = vrcp.pop %v1777
        %v1785 = vmul.f32 %v1765, %v1784
        %v1786 = vpack.c.bf16 %v1779, %v1779
        %v1787 = vpack.c.bf16 %v1781, %v1781
        %v1788 = vpack.c.bf16 %v1783, %v1783
        %v1789 = vpack.c.bf16 %v1785, %v1785
        %v1791 = vsel %vm1741, %v1786, 0
        %vm1793 = vcmask 1043456
        %v1795 = vsel %vm1793, %v1577, 0
        %1797 = vmatprep.subr.bf16.mxu0 0
        %1798 = vmatpush1.bf16.msra.mxu0 %v1795
        %1799 = vmatprep.subr.bf16.mxu0 0
        %1800 = vmatpush1.bf16.msra.mxu0 0
        %1801 = vmatprep.subr.bf16.mxu0 0
        %1802 = vmatpush1.bf16.msra.mxu0 0
        %1803 = vmatprep.subr.bf16.mxu0 0
        %1804 = vmatpush1.bf16.msra.mxu0 0
        %1805 = vmatprep.subr.bf16.mxu0 0
        %1806 = vmatpush1.bf16.msra.mxu0 0
        %1807 = vmatprep.subr.bf16.mxu0 0
        %1808 = vmatpush1.bf16.msra.mxu0 0
        %1809 = vmatprep.subr.bf16.mxu0 0
        %1810 = vmatpush1.bf16.msra.mxu0 0
        %1811 = vmatprep.subr.bf16.mxu0 0
        %1812 = vmatpush1.bf16.msra.mxu0 0
        %1813 = vmatprep.subr.bf16.mxu0 0
        %1814 = vmatpush1.bf16.msra.mxu0 0
        %1815 = vmatprep.subr.bf16.mxu0 0
        %1816 = vmatpush1.bf16.msra.mxu0 0
        %1817 = vmatprep.subr.bf16.mxu0 0
        %1818 = vmatpush1.bf16.msra.mxu0 0
        %1819 = vmatprep.subr.bf16.mxu0 0
        %1820 = vmatpush1.bf16.msra.mxu0 0
        %1821 = vmatprep.subr.bf16.mxu0 0
        %1822 = vmatpush1.bf16.msra.mxu0 0
        %1823 = vmatprep.subr.bf16.mxu0 0
        %1824 = vmatpush1.bf16.msra.mxu0 0
        %1825 = vmatprep.subr.bf16.mxu0 0
        %1826 = vmatpush1.bf16.msra.mxu0 0
        %1827 = vmatprep.subr.bf16.mxu0 0
        %1828 = vmatpush1.bf16.msra.mxu0 0
        %1829 = vmatprep.mubr.bf16.mxu0 0
        %1830 = vmatmul.mubr.bf16.gmra.mrb[0].mxu0 %v1791
        %v1831 = vpop.f32.mrb[0].mxu0
        %v1832 = vadd.f32 0.0, %v1831
        %v1833 = vpop.f32.mrb[0].mxu0
        %v1834 = vpop.f32.mrb[0].mxu0
        %v1835 = vpop.f32.mrb[0].mxu0
        %1836 = vdwg.mxu0
        %v1838 = vsel %vm1741, %v1787, 0
        %v1841 = vsel %vm1793, %v1578, 0
        %1843 = vmatprep.subr.bf16.mxu0 0
        %1844 = vmatpush1.bf16.msra.mxu0 %v1841
        %1845 = vmatprep.subr.bf16.mxu0 0
        %1846 = vmatpush1.bf16.msra.mxu0 0
        %1847 = vmatprep.subr.bf16.mxu0 0
        %1848 = vmatpush1.bf16.msra.mxu0 0
        %1849 = vmatprep.subr.bf16.mxu0 0
        %1850 = vmatpush1.bf16.msra.mxu0 0
        %1851 = vmatprep.subr.bf16.mxu0 0
        %1852 = vmatpush1.bf16.msra.mxu0 0
        %1853 = vmatprep.subr.bf16.mxu0 0
        %1854 = vmatpush1.bf16.msra.mxu0 0
        %1855 = vmatprep.subr.bf16.mxu0 0
        %1856 = vmatpush1.bf16.msra.mxu0 0
        %1857 = vmatprep.subr.bf16.mxu0 0
        %1858 = vmatpush1.bf16.msra.mxu0 0
        %1859 = vmatprep.subr.bf16.mxu0 0
        %1860 = vmatpush1.bf16.msra.mxu0 0
        %1861 = vmatprep.subr.bf16.mxu0 0
        %1862 = vmatpush1.bf16.msra.mxu0 0
        %1863 = vmatprep.subr.bf16.mxu0 0
        %1864 = vmatpush1.bf16.msra.mxu0 0
        %1865 = vmatprep.subr.bf16.mxu0 0
        %1866 = vmatpush1.bf16.msra.mxu0 0
        %1867 = vmatprep.subr.bf16.mxu0 0
        %1868 = vmatpush1.bf16.msra.mxu0 0
        %1869 = vmatprep.subr.bf16.mxu0 0
        %1870 = vmatpush1.bf16.msra.mxu0 0
        %1871 = vmatprep.subr.bf16.mxu0 0
        %1872 = vmatpush1.bf16.msra.mxu0 0
        %1873 = vmatprep.subr.bf16.mxu0 0
        %1874 = vmatpush1.bf16.msra.mxu0 0
        %1875 = vmatprep.mubr.bf16.mxu0 0
        %1876 = vmatmul.mubr.bf16.gmra.mrb[0].mxu0 %v1838
        %v1877 = vpop.f32.mrb[0].mxu0
        %v1878 = vadd.f32 0.0, %v1877
        %v1879 = vpop.f32.mrb[0].mxu0
        %v1880 = vpop.f32.mrb[0].mxu0
        %v1881 = vpop.f32.mrb[0].mxu0
        %1882 = vdwg.mxu0
        %v1884 = vsel %vm1741, %v1788, 0
        %v1887 = vsel %vm1793, %v1579, 0
        %1889 = vmatprep.subr.bf16.mxu0 0
        %1890 = vmatpush1.bf16.msra.mxu0 %v1887
        %1891 = vmatprep.subr.bf16.mxu0 0
        %1892 = vmatpush1.bf16.msra.mxu0 0
        %1893 = vmatprep.subr.bf16.mxu0 0
        %1894 = vmatpush1.bf16.msra.mxu0 0
        %1895 = vmatprep.subr.bf16.mxu0 0
        %1896 = vmatpush1.bf16.msra.mxu0 0
        %1897 = vmatprep.subr.bf16.mxu0 0
        %1898 = vmatpush1.bf16.msra.mxu0 0
        %1899 = vmatprep.subr.bf16.mxu0 0
        %1900 = vmatpush1.bf16.msra.mxu0 0
        %1901 = vmatprep.subr.bf16.mxu0 0
        %1902 = vmatpush1.bf16.msra.mxu0 0
        %1903 = vmatprep.subr.bf16.mxu0 0
        %1904 = vmatpush1.bf16.msra.mxu0 0
        %1905 = vmatprep.subr.bf16.mxu0 0
        %1906 = vmatpush1.bf16.msra.mxu0 0
        %1907 = vmatprep.subr.bf16.mxu0 0
        %1908 = vmatpush1.bf16.msra.mxu0 0
        %1909 = vmatprep.subr.bf16.mxu0 0
        %1910 = vmatpush1.bf16.msra.mxu0 0
        %1911 = vmatprep.subr.bf16.mxu0 0
        %1912 = vmatpush1.bf16.msra.mxu0 0
        %1913 = vmatprep.subr.bf16.mxu0 0
        %1914 = vmatpush1.bf16.msra.mxu0 0
        %1915 = vmatprep.subr.bf16.mxu0 0
        %1916 = vmatpush1.bf16.msra.mxu0 0
        %1917 = vmatprep.subr.bf16.mxu0 0
        %1918 = vmatpush1.bf16.msra.mxu0 0
        %1919 = vmatprep.subr.bf16.mxu0 0
        %1920 = vmatpush1.bf16.msra.mxu0 0
        %1921 = vmatprep.mubr.bf16.mxu0 0
        %1922 = vmatmul.mubr.bf16.gmra.mrb[0].mxu0 %v1884
        %v1923 = vpop.f32.mrb[0].mxu0
        %v1924 = vadd.f32 0.0, %v1923
        %v1925 = vpop.f32.mrb[0].mxu0
        %v1926 = vpop.f32.mrb[0].mxu0
        %v1927 = vpop.f32.mrb[0].mxu0
        %1928 = vdwg.mxu0
        %v1930 = vsel %vm1741, %v1789, 0
        %v1933 = vsel %vm1793, %v1580, 0
        %1935 = vmatprep.subr.bf16.mxu0 0
        %1936 = vmatpush1.bf16.msra.mxu0 %v1933
        %1937 = vmatprep.subr.bf16.mxu0 0
        %1938 = vmatpush1.bf16.msra.mxu0 0
        %1939 = vmatprep.subr.bf16.mxu0 0
        %1940 = vmatpush1.bf16.msra.mxu0 0
        %1941 = vmatprep.subr.bf16.mxu0 0
        %1942 = vmatpush1.bf16.msra.mxu0 0
        %1943 = vmatprep.subr.bf16.mxu0 0
        %1944 = vmatpush1.bf16.msra.mxu0 0
        %1945 = vmatprep.subr.bf16.mxu0 0
        %1946 = vmatpush1.bf16.msra.mxu0 0
        %1947 = vmatprep.subr.bf16.mxu0 0
        %1948 = vmatpush1.bf16.msra.mxu0 0
        %1949 = vmatprep.subr.bf16.mxu0 0
        %1950 = vmatpush1.bf16.msra.mxu0 0
        %1951 = vmatprep.subr.bf16.mxu0 0
        %1952 = vmatpush1.bf16.msra.mxu0 0
        %1953 = vmatprep.subr.bf16.mxu0 0
        %1954 = vmatpush1.bf16.msra.mxu0 0
        %1955 = vmatprep.subr.bf16.mxu0 0
        %1956 = vmatpush1.bf16.msra.mxu0 0
        %1957 = vmatprep.subr.bf16.mxu0 0
        %1958 = vmatpush1.bf16.msra.mxu0 0
        %1959 = vmatprep.subr.bf16.mxu0 0
        %1960 = vmatpush1.bf16.msra.mxu0 0
        %1961 = vmatprep.subr.bf16.mxu0 0
        %1962 = vmatpush1.bf16.msra.mxu0 0
        %1963 = vmatprep.subr.bf16.mxu0 0
        %1964 = vmatpush1.bf16.msra.mxu0 0
        %1965 = vmatprep.subr.bf16.mxu0 0
        %1966 = vmatpush1.bf16.msra.mxu0 0
        %1967 = vmatprep.mubr.bf16.mxu0 0
        %1968 = vmatmul.mubr.bf16.gmra.mrb[0].mxu0 %v1930
        %v1969 = vpop.f32.mrb[0].mxu0
        %v1970 = vadd.f32 0.0, %v1969
        %v1971 = vpop.f32.mrb[0].mxu0
        %v1972 = vpop.f32.mrb[0].mxu0
        %v1973 = vpop.f32.mrb[0].mxu0
        %1974 = vdwg.mxu0
        %v1975 = vpack.c.bf16 %v1878, %v1832
        %v1976 = vpack.c.bf16 %v1970, %v1924
        %v1978 = vlaneseq
        %v1979 = vshrl.u32 %v1978, 7
        %v1980 = vsub.s32 0, %v1979
        %v1981 = vrot.slane %v1194, %v1980
        %v2015 = vunpack.c.l.b16 %v1162
        %v2016 = vunpack.c.l.b16 %v1163
        %v2017 = vunpack.c.l.b16 %v1164
        %v2018 = vunpack.c.l.b16 %v1165
        %v2019 = vunpack.c.l.b16 %v1166
        %v2020 = vunpack.c.l.b16 %v1167
        %v2021 = vunpack.c.l.b16 %v1168
        %v2022 = vunpack.c.l.b16 %v1169
        %v2023 = vunpack.c.l.b16 %v1170
        %v2024 = vunpack.c.l.b16 %v1171
        %v2025 = vunpack.c.l.b16 %v1172
        %v2026 = vunpack.c.l.b16 %v1173
        %v2027 = vunpack.c.l.b16 %v1174
        %v2028 = vunpack.c.l.b16 %v1175
        %v2029 = vunpack.c.l.b16 %v1176
        %v2030 = vunpack.c.l.b16 %v1177
        %v2031 = vunpack.c.l.b16 %v1178
        %v2032 = vunpack.c.l.b16 %v1179
        %v2033 = vunpack.c.l.b16 %v1180
        %v2034 = vunpack.c.l.b16 %v1181
        %v2035 = vunpack.c.l.b16 %v1182
        %v2036 = vunpack.c.l.b16 %v1183
        %v2037 = vunpack.c.l.b16 %v1184
        %v2038 = vunpack.c.l.b16 %v1185
        %v2039 = vunpack.c.l.b16 %v1186
        %v2040 = vunpack.c.l.b16 %v1187
        %v2041 = vunpack.c.l.b16 %v1188
        %v2042 = vunpack.c.l.b16 %v1189
        %v2043 = vunpack.c.l.b16 %v1190
        %v2044 = vunpack.c.l.b16 %v1191
        %v2045 = vunpack.c.l.b16 %v1192
        %v2046 = vunpack.c.l.b16 %v1193
        %v2047 = vpack.c.b16 %v2016, %v2015
        %v2048 = vpack.c.b16 %v2018, %v2017
        %v2049 = vpack.c.b16 %v2020, %v2019
        %v2050 = vpack.c.b16 %v2022, %v2021
        %v2051 = vpack.c.b16 %v2024, %v2023
        %v2052 = vpack.c.b16 %v2026, %v2025
        %v2053 = vpack.c.b16 %v2028, %v2027
        %v2054 = vpack.c.b16 %v2030, %v2029
        %v2055 = vpack.c.b16 %v2032, %v2031
        %v2056 = vpack.c.b16 %v2034, %v2033
        %v2057 = vpack.c.b16 %v2036, %v2035
        %v2058 = vpack.c.b16 %v2038, %v2037
        %v2059 = vpack.c.b16 %v2040, %v2039
        %v2060 = vpack.c.b16 %v2042, %v2041
        %v2061 = vpack.c.b16 %v2044, %v2043
        %v2062 = vpack.c.b16 %v2046, %v2045
        %2079 = vmatprep.subr.bf16.mxu0 0
        %2080 = vmatpush1.bf16.msra.mxu0 %v2047
        %2081 = vmatprep.subr.bf16.mxu0 0
        %2082 = vmatpush1.bf16.msra.mxu0 %v2048
        %2083 = vmatprep.subr.bf16.mxu0 0
        %2084 = vmatpush1.bf16.msra.mxu0 %v2049
        %2085 = vmatprep.subr.bf16.mxu0 0
        %2086 = vmatpush1.bf16.msra.mxu0 %v2050
        %2087 = vmatprep.subr.bf16.mxu0 0
        %2088 = vmatpush1.bf16.msra.mxu0 %v2051
        %2089 = vmatprep.subr.bf16.mxu0 0
        %2090 = vmatpush1.bf16.msra.mxu0 %v2052
        %2091 = vmatprep.subr.bf16.mxu0 0
        %2092 = vmatpush1.bf16.msra.mxu0 %v2053
        %2093 = vmatprep.subr.bf16.mxu0 0
        %2094 = vmatpush1.bf16.msra.mxu0 %v2054
        %2095 = vmatprep.subr.bf16.mxu0 0
        %2096 = vmatpush1.bf16.msra.mxu0 %v2055
        %2097 = vmatprep.subr.bf16.mxu0 0
        %2098 = vmatpush1.bf16.msra.mxu0 %v2056
        %2099 = vmatprep.subr.bf16.mxu0 0
        %2100 = vmatpush1.bf16.msra.mxu0 %v2057
        %2101 = vmatprep.subr.bf16.mxu0 0
        %2102 = vmatpush1.bf16.msra.mxu0 %v2058
        %2103 = vmatprep.subr.bf16.mxu0 0
        %2104 = vmatpush1.bf16.msra.mxu0 %v2059
        %2105 = vmatprep.subr.bf16.mxu0 0
        %2106 = vmatpush1.bf16.msra.mxu0 %v2060
        %2107 = vmatprep.subr.bf16.mxu0 0
        %2108 = vmatpush1.bf16.msra.mxu0 %v2061
        %2109 = vmatprep.subr.bf16.mxu0 0
        %2110 = vmatpush1.bf16.msra.mxu0 %v2062
        %2111 = vmatprep.mubr.bf16.mxu0 %v1976
        %2112 = vmatmul.mubr.bf16.gmra.mrb[0].mxu0 %v1975
        %v2113 = vpop.f32.mrb[0].mxu0
        %v2114 = vadd.f32 %v1981, %v2113
        %v2115 = vpop.f32.mrb[0].mxu0
        %v2116 = vpop.f32.mrb[0].mxu0
        %v2117 = vadd.f32 %v1981, %v2116
        %v2118 = vpop.f32.mrb[0].mxu0
        %2119 = vdwg.mxu0
        %v2120 = vadd.f32 %v1071, %v2114
        %v2121 = vadd.f32 %v1072, %v2117
        %v2122 = vld [vmem:[%s1042] sm:$0x1]
        %v2123 = vld [vmem:[%s1045] sm:$0x1]
        %2124 = vadd.xlane.f32.xlu0 %v2120
        %v2125 = vpop.xlane.xlu0 %2124
        %2126 = vadd.xlane.f32.xlu0 %v2121
        %v2127 = vpop.xlane.xlu0 %2126
        %v2128 = vmul.f32 %v2125, %v1079
        %v2129 = vmul.f32 %v2127, %v1079
        %v2130 = vsub.f32 %v2120, %v2128
        %v2131 = vsub.f32 %v2121, %v2129
        %v2132 = vmul.f32 %v2130, %v2130
        %v2133 = vmul.f32 %v2131, %v2131
        %2134 = vadd.xlane.f32.xlu0 %v2132
        %v2135 = vpop.xlane.xlu0 %2134
        %2136 = vadd.xlane.f32.xlu0 %v2133
        %v2137 = vpop.xlane.xlu0 %2136
        %v2138 = vmul.f32 %v2135, %v1079
        %v2139 = vmul.f32 %v2137, %v1079
        %v2140 = vadd.f32 %v2138, 1e-05
        %v2141 = vadd.f32 %v2139, 1e-05
        %v2142 = vrsqrt.pop %v2140
        %v2143 = vrsqrt.pop %v2141
        %v2144 = vmul.f32 %v2130, %v2142
        %v2145 = vmul.f32 %v2131, %v2143
        %v2147 = vlaneseq
        %v2148 = vshrl.u32 %v2147, 7
        %v2149 = vsub.s32 0, %v2148
        %v2150 = vrot.slane %v2122, %v2149
        %v2152 = vmul.f32 %v2144, %v2150
        %v2153 = vmul.f32 %v2145, %v2150
        %v2155 = vlaneseq
        %v2156 = vshrl.u32 %v2155, 7
        %v2157 = vsub.s32 0, %v2156
        %v2158 = vrot.slane %v2123, %v2157
        %v2160 = vadd.f32 %v2152, %v2158
        %v2161 = vadd.f32 %v2153, %v2158
        %v2162 = vld [vmem:[%s1] sm:$0xff]
        %v2163 = vld [vmem:[%s1 + $0x8] sm:$0xff]
        %v2164 = vld [vmem:[%s877] sm:$0xff]
        %v2165 = vld [vmem:[%s877 + $0x8] sm:$0xff]
        %v2166 = vld [vmem:[%s877 + $0x10] sm:$0xff]
        %v2167 = vld [vmem:[%s877 + $0x18] sm:$0xff]
        %v2168 = vld [vmem:[%s877 + $0x20] sm:$0xff]
        %v2169 = vld [vmem:[%s877 + $0x28] sm:$0xff]
        %v2170 = vld [vmem:[%s877 + $0x30] sm:$0xff]
        %v2171 = vld [vmem:[%s877 + $0x38] sm:$0xff]
        %v2172 = vld [vmem:[%s877 + $0x40] sm:$0xff]
        %v2173 = vld [vmem:[%s877 + $0x48] sm:$0xff]
        %v2174 = vld [vmem:[%s877 + $0x50] sm:$0xff]
        %v2175 = vld [vmem:[%s877 + $0x58] sm:$0xff]
        %v2176 = vld [vmem:[%s877 + $0x60] sm:$0xff]
        %v2177 = vld [vmem:[%s877 + $0x68] sm:$0xff]
        %v2178 = vld [vmem:[%s877 + $0x70] sm:$0xff]
        %v2179 = vld [vmem:[%s877 + $0x78] sm:$0xff]
        %v2180 = vld [vmem:[%s886] sm:$0xff]
        %v2181 = vld [vmem:[%s886 + $0x8] sm:$0xff]
        %v2182 = vld [vmem:[%s886 + $0x10] sm:$0xff]
        %v2183 = vld [vmem:[%s886 + $0x18] sm:$0xff]
        %v2184 = vld [vmem:[%s886 + $0x20] sm:$0xff]
        %v2185 = vld [vmem:[%s886 + $0x28] sm:$0xff]
        %v2186 = vld [vmem:[%s886 + $0x30] sm:$0xff]
        %v2187 = vld [vmem:[%s886 + $0x38] sm:$0xff]
        %v2188 = vld [vmem:[%s886 + $0x40] sm:$0xff]
        %v2189 = vld [vmem:[%s886 + $0x48] sm:$0xff]
        %v2190 = vld [vmem:[%s886 + $0x50] sm:$0xff]
        %v2191 = vld [vmem:[%s886 + $0x58] sm:$0xff]
        %v2192 = vld [vmem:[%s886 + $0x60] sm:$0xff]
        %v2193 = vld [vmem:[%s886 + $0x68] sm:$0xff]
        %v2194 = vld [vmem:[%s886 + $0x70] sm:$0xff]
        %v2195 = vld [vmem:[%s886 + $0x78] sm:$0xff]
        %v2196 = vld [vmem:[%s886 + $0x80] sm:$0xff]
        %v2197 = vld [vmem:[%s886 + $0x88] sm:$0xff]
        %v2198 = vld [vmem:[%s886 + $0x90] sm:$0xff]
        %v2199 = vld [vmem:[%s886 + $0x98] sm:$0xff]
        %v2200 = vld [vmem:[%s886 + $0xa0] sm:$0xff]
        %v2201 = vld [vmem:[%s886 + $0xa8] sm:$0xff]
        %v2202 = vld [vmem:[%s886 + $0xb0] sm:$0xff]
        %v2203 = vld [vmem:[%s886 + $0xb8] sm:$0xff]
        %v2204 = vld [vmem:[%s886 + $0xc0] sm:$0xff]
        %v2205 = vld [vmem:[%s886 + $0xc8] sm:$0xff]
        %v2206 = vld [vmem:[%s886 + $0xd0] sm:$0xff]
        %v2207 = vld [vmem:[%s886 + $0xd8] sm:$0xff]
        %v2208 = vld [vmem:[%s886 + $0xe0] sm:$0xff]
        %v2209 = vld [vmem:[%s886 + $0xe8] sm:$0xff]
        %v2210 = vld [vmem:[%s886 + $0xf0] sm:$0xff]
        %v2211 = vld [vmem:[%s886 + $0xf8] sm:$0xff]
        %v2212 = vld [vmem:[%s895] sm:$0xf]
        %v2213 = vld [vmem:[%s895 + $0x4] sm:$0xf]
        %v2214 = vld [vmem:[%s895 + $0x8] sm:$0xf]
        %v2215 = vld [vmem:[%s895 + $0xc] sm:$0xf]
        %v2216 = vld [vmem:[%s895 + $0x10] sm:$0xf]
        %v2217 = vld [vmem:[%s895 + $0x14] sm:$0xf]
        %v2218 = vld [vmem:[%s895 + $0x18] sm:$0xf]
        %v2219 = vld [vmem:[%s895 + $0x1c] sm:$0xf]
        %v2220 = vld [vmem:[%s895 + $0x20] sm:$0xf]
        %v2221 = vld [vmem:[%s895 + $0x24] sm:$0xf]
        %v2222 = vld [vmem:[%s895 + $0x28] sm:$0xf]
        %v2223 = vld [vmem:[%s895 + $0x2c] sm:$0xf]
        %v2224 = vld [vmem:[%s895 + $0x30] sm:$0xf]
        %v2225 = vld [vmem:[%s895 + $0x34] sm:$0xf]
        %v2226 = vld [vmem:[%s895 + $0x38] sm:$0xf]
        %v2227 = vld [vmem:[%s895 + $0x3c] sm:$0xf]
        %v2228 = vld [vmem:[%s895 + $0x40] sm:$0xf]
        %v2229 = vld [vmem:[%s895 + $0x44] sm:$0xf]
        %v2230 = vld [vmem:[%s895 + $0x48] sm:$0xf]
        %v2231 = vld [vmem:[%s895 + $0x4c] sm:$0xf]
        %v2232 = vld [vmem:[%s895 + $0x50] sm:$0xf]
        %v2233 = vld [vmem:[%s895 + $0x54] sm:$0xf]
        %v2234 = vld [vmem:[%s895 + $0x58] sm:$0xf]
        %v2235 = vld [vmem:[%s895 + $0x5c] sm:$0xf]
        %v2236 = vld [vmem:[%s895 + $0x60] sm:$0xf]
        %v2237 = vld [vmem:[%s895 + $0x64] sm:$0xf]
        %v2238 = vld [vmem:[%s895 + $0x68] sm:$0xf]
        %v2239 = vld [vmem:[%s895 + $0x6c] sm:$0xf]
        %v2240 = vld [vmem:[%s895 + $0x70] sm:$0xf]
        %v2241 = vld [vmem:[%s895 + $0x74] sm:$0xf]
        %v2242 = vld [vmem:[%s895 + $0x78] sm:$0xf]
        %v2243 = vld [vmem:[%s895 + $0x7c] sm:$0xf]
        %v2244 = vld [vmem:[%s1048] sm:$0x1]
        %v2245 = vpack.c.bf16 %v2161, %v2160
        %v2246 = vpack.c.bf16 %v2163, %v2162
        %v2263 = vunpack.c.l.b16 %v2164
        %v2264 = vunpack.c.h.b16 %v2164
        %v2265 = vunpack.c.l.b16 %v2165
        %v2266 = vunpack.c.h.b16 %v2165
        %v2267 = vunpack.c.l.b16 %v2166
        %v2268 = vunpack.c.h.b16 %v2166
        %v2269 = vunpack.c.l.b16 %v2167
        %v2270 = vunpack.c.h.b16 %v2167
        %v2271 = vunpack.c.l.b16 %v2168
        %v2272 = vunpack.c.h.b16 %v2168
        %v2273 = vunpack.c.l.b16 %v2169
        %v2274 = vunpack.c.h.b16 %v2169
        %v2275 = vunpack.c.l.b16 %v2170
        %v2276 = vunpack.c.h.b16 %v2170
        %v2277 = vunpack.c.l.b16 %v2171
        %v2278 = vunpack.c.h.b16 %v2171
        %v2279 = vunpack.c.l.b16 %v2172
        %v2280 = vunpack.c.h.b16 %v2172
        %v2281 = vunpack.c.l.b16 %v2173
        %v2282 = vunpack.c.h.b16 %v2173
        %v2283 = vunpack.c.l.b16 %v2174
        %v2284 = vunpack.c.h.b16 %v2174
        %v2285 = vunpack.c.l.b16 %v2175
        %v2286 = vunpack.c.h.b16 %v2175
        %v2287 = vunpack.c.l.b16 %v2176
        %v2288 = vunpack.c.h.b16 %v2176
        %v2289 = vunpack.c.l.b16 %v2177
        %v2290 = vunpack.c.h.b16 %v2177
        %v2291 = vunpack.c.l.b16 %v2178
        %v2292 = vunpack.c.h.b16 %v2178
        %v2293 = vunpack.c.l.b16 %v2179
        %v2294 = vunpack.c.h.b16 %v2179
        %v2295 = vpack.c.b16 %v2265, %v2263
        %v2296 = vpack.c.b16 %v2266, %v2264
        %v2297 = vpack.c.b16 %v2269, %v2267
        %v2298 = vpack.c.b16 %v2270, %v2268
        %v2299 = vpack.c.b16 %v2273, %v2271
        %v2300 = vpack.c.b16 %v2274, %v2272
        %v2301 = vpack.c.b16 %v2277, %v2275
        %v2302 = vpack.c.b16 %v2278, %v2276
        %v2303 = vpack.c.b16 %v2281, %v2279
        %v2304 = vpack.c.b16 %v2282, %v2280
        %v2305 = vpack.c.b16 %v2285, %v2283
        %v2306 = vpack.c.b16 %v2286, %v2284
        %v2307 = vpack.c.b16 %v2289, %v2287
        %v2308 = vpack.c.b16 %v2290, %v2288
        %v2309 = vpack.c.b16 %v2293, %v2291
        %v2310 = vpack.c.b16 %v2294, %v2292
        %2327 = vmatprep.subr.bf16.mxu0 %v2296
        %2328 = vmatpush1.bf16.msra.mxu0 %v2295
        %2329 = vmatprep.subr.bf16.mxu0 %v2298
        %2330 = vmatpush1.bf16.msra.mxu0 %v2297
        %2331 = vmatprep.subr.bf16.mxu0 %v2300
        %2332 = vmatpush1.bf16.msra.mxu0 %v2299
        %2333 = vmatprep.subr.bf16.mxu0 %v2302
        %2334 = vmatpush1.bf16.msra.mxu0 %v2301
        %2335 = vmatprep.subr.bf16.mxu0 %v2304
        %2336 = vmatpush1.bf16.msra.mxu0 %v2303
        %2337 = vmatprep.subr.bf16.mxu0 %v2306
        %2338 = vmatpush1.bf16.msra.mxu0 %v2305
        %2339 = vmatprep.subr.bf16.mxu0 %v2308
        %2340 = vmatpush1.bf16.msra.mxu0 %v2307
        %2341 = vmatprep.subr.bf16.mxu0 %v2310
        %2342 = vmatpush1.bf16.msra.mxu0 %v2309
        %2343 = vmatprep.subr.bf16.mxu0 0
        %2344 = vmatpush1.bf16.msra.mxu0 0
        %2345 = vmatprep.subr.bf16.mxu0 0
        %2346 = vmatpush1.bf16.msra.mxu0 0
        %2347 = vmatprep.subr.bf16.mxu0 0
        %2348 = vmatpush1.bf16.msra.mxu0 0
        %2349 = vmatprep.subr.bf16.mxu0 0
        %2350 = vmatpush1.bf16.msra.mxu0 0
        %2351 = vmatprep.subr.bf16.mxu0 0
        %2352 = vmatpush1.bf16.msra.mxu0 0
        %2353 = vmatprep.subr.bf16.mxu0 0
        %2354 = vmatpush1.bf16.msra.mxu0 0
        %2355 = vmatprep.subr.bf16.mxu0 0
        %2356 = vmatpush1.bf16.msra.mxu0 0
        %2357 = vmatprep.subr.bf16.mxu0 0
        %2358 = vmatpush1.bf16.msra.mxu0 0
        %2359 = vmatprep.mubr.bf16.mxu0 0
        %2360 = vmatmul.mubr.bf16.gmra.mrb[0].mxu0 %v2245
        %v2361 = vpop.f32.mrb[0].mxu0
        %v2362 = vadd.f32 0.0, %v2361
        %v2363 = vpop.f32.mrb[0].mxu0
        %v2364 = vadd.f32 0.0, %v2363
        %v2365 = vpop.f32.mrb[0].mxu0
        %v2366 = vadd.f32 0.0, %v2365
        %v2367 = vpop.f32.mrb[0].mxu0
        %v2368 = vadd.f32 0.0, %v2367
        %2369 = vdwg.mxu0
        %v2370 = vmul.f32 %v2362, 0.088388346
        %v2371 = vmul.f32 %v2364, 0.088388346
        %v2372 = vmul.f32 %v2366, 0.088388346
        %v2373 = vmul.f32 %v2368, 0.088388346
        %v2406 = vunpack.c.l.b16 %v2180
        %v2407 = vunpack.c.h.b16 %v2180
        %v2408 = vunpack.c.l.b16 %v2181
        %v2409 = vunpack.c.h.b16 %v2181
        %v2410 = vunpack.c.l.b16 %v2182
        %v2411 = vunpack.c.h.b16 %v2182
        %v2412 = vunpack.c.l.b16 %v2183
        %v2413 = vunpack.c.h.b16 %v2183
        %v2414 = vunpack.c.l.b16 %v2184
        %v2415 = vunpack.c.h.b16 %v2184
        %v2416 = vunpack.c.l.b16 %v2185
        %v2417 = vunpack.c.h.b16 %v2185
        %v2418 = vunpack.c.l.b16 %v2186
        %v2419 = vunpack.c.h.b16 %v2186
        %v2420 = vunpack.c.l.b16 %v2187
        %v2421 = vunpack.c.h.b16 %v2187
        %v2422 = vunpack.c.l.b16 %v2188
        %v2423 = vunpack.c.h.b16 %v2188
        %v2424 = vunpack.c.l.b16 %v2189
        %v2425 = vunpack.c.h.b16 %v2189
        %v2426 = vunpack.c.l.b16 %v2190
        %v2427 = vunpack.c.h.b16 %v2190
        %v2428 = vunpack.c.l.b16 %v2191
        %v2429 = vunpack.c.h.b16 %v2191
        %v2430 = vunpack.c.l.b16 %v2192
        %v2431 = vunpack.c.h.b16 %v2192
        %v2432 = vunpack.c.l.b16 %v2193
        %v2433 = vunpack.c.h.b16 %v2193
        %v2434 = vunpack.c.l.b16 %v2194
        %v2435 = vunpack.c.h.b16 %v2194
        %v2436 = vunpack.c.l.b16 %v2195
        %v2437 = vunpack.c.h.b16 %v2195
        %v2438 = vunpack.c.l.b16 %v2196
        %v2439 = vunpack.c.h.b16 %v2196
        %v2440 = vunpack.c.l.b16 %v2197
        %v2441 = vunpack.c.h.b16 %v2197
        %v2442 = vunpack.c.l.b16 %v2198
        %v2443 = vunpack.c.h.b16 %v2198
        %v2444 = vunpack.c.l.b16 %v2199
        %v2445 = vunpack.c.h.b16 %v2199
        %v2446 = vunpack.c.l.b16 %v2200
        %v2447 = vunpack.c.h.b16 %v2200
        %v2448 = vunpack.c.l.b16 %v2201
        %v2449 = vunpack.c.h.b16 %v2201
        %v2450 = vunpack.c.l.b16 %v2202
        %v2451 = vunpack.c.h.b16 %v2202
        %v2452 = vunpack.c.l.b16 %v2203
        %v2453 = vunpack.c.h.b16 %v2203
        %v2454 = vunpack.c.l.b16 %v2204
        %v2455 = vunpack.c.h.b16 %v2204
        %v2456 = vunpack.c.l.b16 %v2205
        %v2457 = vunpack.c.h.b16 %v2205
        %v2458 = vunpack.c.l.b16 %v2206
        %v2459 = vunpack.c.h.b16 %v2206
        %v2460 = vunpack.c.l.b16 %v2207
        %v2461 = vunpack.c.h.b16 %v2207
        %v2462 = vunpack.c.l.b16 %v2208
        %v2463 = vunpack.c.h.b16 %v2208
        %v2464 = vunpack.c.l.b16 %v2209
        %v2465 = vunpack.c.h.b16 %v2209
        %v2466 = vunpack.c.l.b16 %v2210
        %v2467 = vunpack.c.h.b16 %v2210
        %v2468 = vunpack.c.l.b16 %v2211
        %v2469 = vunpack.c.h.b16 %v2211
        %v2470 = vpack.c.b16 %v2410, %v2406
        %v2471 = vpack.c.b16 %v2411, %v2407
        %v2472 = vpack.c.b16 %v2412, %v2408
        %v2473 = vpack.c.b16 %v2413, %v2409
        %v2474 = vpack.c.b16 %v2418, %v2414
        %v2475 = vpack.c.b16 %v2419, %v2415
        %v2476 = vpack.c.b16 %v2420, %v2416
        %v2477 = vpack.c.b16 %v2421, %v2417
        %v2478 = vpack.c.b16 %v2426, %v2422
        %v2479 = vpack.c.b16 %v2427, %v2423
        %v2480 = vpack.c.b16 %v2428, %v2424
        %v2481 = vpack.c.b16 %v2429, %v2425
        %v2482 = vpack.c.b16 %v2434, %v2430
        %v2483 = vpack.c.b16 %v2435, %v2431
        %v2484 = vpack.c.b16 %v2436, %v2432
        %v2485 = vpack.c.b16 %v2437, %v2433
        %v2486 = vpack.c.b16 %v2442, %v2438
        %v2487 = vpack.c.b16 %v2443, %v2439
        %v2488 = vpack.c.b16 %v2444, %v2440
        %v2489 = vpack.c.b16 %v2445, %v2441
        %v2490 = vpack.c.b16 %v2450, %v2446
        %v2491 = vpack.c.b16 %v2451, %v2447
        %v2492 = vpack.c.b16 %v2452, %v2448
        %v2493 = vpack.c.b16 %v2453, %v2449
        %v2494 = vpack.c.b16 %v2458, %v2454
        %v2495 = vpack.c.b16 %v2459, %v2455
        %v2496 = vpack.c.b16 %v2460, %v2456
        %v2497 = vpack.c.b16 %v2461, %v2457
        %v2498 = vpack.c.b16 %v2466, %v2462
        %v2499 = vpack.c.b16 %v2467, %v2463
        %v2500 = vpack.c.b16 %v2468, %v2464
        %v2501 = vpack.c.b16 %v2469, %v2465
        %2534 = vmatprep.subr.bf16.mxu0 %v2471
        %2535 = vmatpush1.bf16.msra.mxu0 %v2470
        %2536 = vmatprep.subr.bf16.mxu0 %v2475
        %2537 = vmatpush1.bf16.msra.mxu0 %v2474
        %2538 = vmatprep.subr.bf16.mxu0 %v2479
        %2539 = vmatpush1.bf16.msra.mxu0 %v2478
        %2540 = vmatprep.subr.bf16.mxu0 %v2483
        %2541 = vmatpush1.bf16.msra.mxu0 %v2482
        %2542 = vmatprep.subr.bf16.mxu0 %v2487
        %2543 = vmatpush1.bf16.msra.mxu0 %v2486
        %2544 = vmatprep.subr.bf16.mxu0 %v2491
        %2545 = vmatpush1.bf16.msra.mxu0 %v2490
        %2546 = vmatprep.subr.bf16.mxu0 %v2495
        %2547 = vmatpush1.bf16.msra.mxu0 %v2494
        %2548 = vmatprep.subr.bf16.mxu0 %v2499
        %2549 = vmatpush1.bf16.msra.mxu0 %v2498
        %2550 = vmatprep.subr.bf16.mxu0 0
        %2551 = vmatpush1.bf16.msra.mxu0 0
        %2552 = vmatprep.subr.bf16.mxu0 0
        %2553 = vmatpush1.bf16.msra.mxu0 0
        %2554 = vmatprep.subr.bf16.mxu0 0
        %2555 = vmatpush1.bf16.msra.mxu0 0
        %2556 = vmatprep.subr.bf16.mxu0 0
        %2557 = vmatpush1.bf16.msra.mxu0 0
        %2558 = vmatprep.subr.bf16.mxu0 0
        %2559 = vmatpush1.bf16.msra.mxu0 0
        %2560 = vmatprep.subr.bf16.mxu0 0
        %2561 = vmatpush1.bf16.msra.mxu0 0
        %2562 = vmatprep.subr.bf16.mxu0 0
        %2563 = vmatpush1.bf16.msra.mxu0 0
        %2564 = vmatprep.subr.bf16.mxu0 0
        %2565 = vmatpush1.bf16.msra.mxu0 0
        %2566 = vmatprep.mubr.bf16.mxu0 0
        %2567 = vmatmul.mubr.bf16.gmra.mrb[0].mxu0 %v2246
        %v2568 = vpop.f32.mrb[0].mxu0
        %v2569 = vadd.f32 0.0, %v2568
        %v2570 = vpop.f32.mrb[0].mxu0
        %v2571 = vadd.f32 0.0, %v2570
        %v2572 = vpop.f32.mrb[0].mxu0
        %v2573 = vadd.f32 0.0, %v2572
        %v2574 = vpop.f32.mrb[0].mxu0
        %v2575 = vadd.f32 0.0, %v2574
        %2576 = vdwg.mxu0
        %2577 = vmatprep.subr.bf16.mxu0 %v2473
        %2578 = vmatpush1.bf16.msra.mxu0 %v2472
        %2579 = vmatprep.subr.bf16.mxu0 %v2477
        %2580 = vmatpush1.bf16.msra.mxu0 %v2476
        %2581 = vmatprep.subr.bf16.mxu0 %v2481
        %2582 = vmatpush1.bf16.msra.mxu0 %v2480
        %2583 = vmatprep.subr.bf16.mxu0 %v2485
        %2584 = vmatpush1.bf16.msra.mxu0 %v2484
        %2585 = vmatprep.subr.bf16.mxu0 %v2489
        %2586 = vmatpush1.bf16.msra.mxu0 %v2488
        %2587 = vmatprep.subr.bf16.mxu0 %v2493
        %2588 = vmatpush1.bf16.msra.mxu0 %v2492
        %2589 = vmatprep.subr.bf16.mxu0 %v2497
        %2590 = vmatpush1.bf16.msra.mxu0 %v2496
        %2591 = vmatprep.subr.bf16.mxu0 %v2501
        %2592 = vmatpush1.bf16.msra.mxu0 %v2500
        %2593 = vmatprep.subr.bf16.mxu0 0
        %2594 = vmatpush1.bf16.msra.mxu0 0
        %2595 = vmatprep.subr.bf16.mxu0 0
        %2596 = vmatpush1.bf16.msra.mxu0 0
        %2597 = vmatprep.subr.bf16.mxu0 0
        %2598 = vmatpush1.bf16.msra.mxu0 0
        %2599 = vmatprep.subr.bf16.mxu0 0
        %2600 = vmatpush1.bf16.msra.mxu0 0
        %2601 = vmatprep.subr.bf16.mxu0 0
        %2602 = vmatpush1.bf16.msra.mxu0 0
        %2603 = vmatprep.subr.bf16.mxu0 0
        %2604 = vmatpush1.bf16.msra.mxu0 0
        %2605 = vmatprep.subr.bf16.mxu0 0
        %2606 = vmatpush1.bf16.msra.mxu0 0
        %2607 = vmatprep.subr.bf16.mxu0 0
        %2608 = vmatpush1.bf16.msra.mxu0 0
        %2609 = vmatprep.mubr.bf16.mxu0 0
        %2610 = vmatmul.mubr.bf16.gmra.mrb[0].mxu0 %v2246
        %v2611 = vpop.f32.mrb[0].mxu0
        %v2612 = vadd.f32 0.0, %v2611
        %v2613 = vpop.f32.mrb[0].mxu0
        %v2614 = vadd.f32 0.0, %v2613
        %v2615 = vpop.f32.mrb[0].mxu0
        %v2616 = vadd.f32 0.0, %v2615
        %v2617 = vpop.f32.mrb[0].mxu0
        %v2618 = vadd.f32 0.0, %v2617
        %2619 = vdwg.mxu0
        %v2620 = vpack.c.bf16 %v2370, %v2370
        %v2621 = vpack.c.bf16 %v2372, %v2372
        %v2622 = vpack.c.bf16 %v2371, %v2371
        %v2623 = vpack.c.bf16 %v2373, %v2373
        %v2624 = vpack.c.bf16 %v2569, %v2569
        %v2625 = vpack.c.bf16 %v2573, %v2573
        %v2626 = vpack.c.bf16 %v2571, %v2571
        %v2627 = vpack.c.bf16 %v2575, %v2575
        %v2628 = vpack.c.bf16 %v2612, %v2612
        %v2629 = vpack.c.bf16 %v2616, %v2616
        %v2630 = vpack.c.bf16 %v2614, %v2614
        %v2631 = vpack.c.bf16 %v2618, %v2618
        %2632 = vmatprep.subr.bf16.mxu0 0
        %2633 = vmatpush1.bf16.xpose.msra.mxu0 %v2624
        %2634 = vmatprep.subr.bf16.mxu0 0
        %2635 = vmatpush1.bf16.xpose.msra.mxu0 0
        %2636 = vmatprep.subr.bf16.mxu0 0
        %2637 = vmatpush1.bf16.xpose.msra.mxu0 0
        %2638 = vmatprep.subr.bf16.mxu0 0
        %2639 = vmatpush1.bf16.xpose.msra.mxu0 0
        %2640 = vmatprep.subr.bf16.mxu0 0
        %2641 = vmatpush1.bf16.xpose.msra.mxu0 0
        %2642 = vmatprep.subr.bf16.mxu0 0
        %2643 = vmatpush1.bf16.xpose.msra.mxu0 0
        %2644 = vmatprep.subr.bf16.mxu0 0
        %2645 = vmatpush1.bf16.xpose.msra.mxu0 0
        %2646 = vmatprep.subr.bf16.mxu0 0
        %2647 = vmatpush1.bf16.xpose.msra.mxu0 0
        %2648 = vmatprep.subr.bf16.mxu0 0
        %2649 = vmatpush1.bf16.xpose.msra.mxu0 0
        %2650 = vmatprep.subr.bf16.mxu0 0
        %2651 = vmatpush1.bf16.xpose.msra.mxu0 0
        %2652 = vmatprep.subr.bf16.mxu0 0
        %2653 = vmatpush1.bf16.xpose.msra.mxu0 0
        %2654 = vmatprep.subr.bf16.mxu0 0
        %2655 = vmatpush1.bf16.xpose.msra.mxu0 0
        %2656 = vmatprep.subr.bf16.mxu0 0
        %2657 = vmatpush1.bf16.xpose.msra.mxu0 0
        %2658 = vmatprep.subr.bf16.mxu0 0
        %2659 = vmatpush1.bf16.xpose.msra.mxu0 0
        %2660 = vmatprep.subr.bf16.mxu0 0
        %2661 = vmatpush1.bf16.xpose.msra.mxu0 0
        %2662 = vmatprep.subr.bf16.mxu0 0
        %2663 = vmatpush1.bf16.xpose.msra.mxu0 0
        %2664 = vmatprep.mubr.bf16.mxu0 0
        %2665 = vmatmul.mubr.bf16.gmra.mrb[0].mxu0 %v2620
        %v2666 = vpop.f32.mrb[0].mxu0
        %v2667 = vadd.f32 0.0, %v2666
        %v2668 = vpop.f32.mrb[0].mxu0
        %v2669 = vpop.f32.mrb[0].mxu0
        %v2670 = vpop.f32.mrb[0].mxu0
        %2671 = vdwg.mxu0
        %2672 = vmatprep.subr.bf16.mxu0 0
        %2673 = vmatpush1.bf16.xpose.msra.mxu0 %v2625
        %2674 = vmatprep.subr.bf16.mxu0 0
        %2675 = vmatpush1.bf16.xpose.msra.mxu0 0
        %2676 = vmatprep.subr.bf16.mxu0 0
        %2677 = vmatpush1.bf16.xpose.msra.mxu0 0
        %2678 = vmatprep.subr.bf16.mxu0 0
        %2679 = vmatpush1.bf16.xpose.msra.mxu0 0
        %2680 = vmatprep.subr.bf16.mxu0 0
        %2681 = vmatpush1.bf16.xpose.msra.mxu0 0
        %2682 = vmatprep.subr.bf16.mxu0 0
        %2683 = vmatpush1.bf16.xpose.msra.mxu0 0
        %2684 = vmatprep.subr.bf16.mxu0 0
        %2685 = vmatpush1.bf16.xpose.msra.mxu0 0
        %2686 = vmatprep.subr.bf16.mxu0 0
        %2687 = vmatpush1.bf16.xpose.msra.mxu0 0
        %2688 = vmatprep.subr.bf16.mxu0 0
        %2689 = vmatpush1.bf16.xpose.msra.mxu0 0
        %2690 = vmatprep.subr.bf16.mxu0 0
        %2691 = vmatpush1.bf16.xpose.msra.mxu0 0
        %2692 = vmatprep.subr.bf16.mxu0 0
        %2693 = vmatpush1.bf16.xpose.msra.mxu0 0
        %2694 = vmatprep.subr.bf16.mxu0 0
        %2695 = vmatpush1.bf16.xpose.msra.mxu0 0
        %2696 = vmatprep.subr.bf16.mxu0 0
        %2697 = vmatpush1.bf16.xpose.msra.mxu0 0
        %2698 = vmatprep.subr.bf16.mxu0 0
        %2699 = vmatpush1.bf16.xpose.msra.mxu0 0
        %2700 = vmatprep.subr.bf16.mxu0 0
        %2701 = vmatpush1.bf16.xpose.msra.mxu0 0
        %2702 = vmatprep.subr.bf16.mxu0 0
        %2703 = vmatpush1.bf16.xpose.msra.mxu0 0
        %2704 = vmatprep.mubr.bf16.mxu0 0
        %2705 = vmatmul.mubr.bf16.gmra.mrb[0].mxu0 %v2621
        %v2706 = vpop.f32.mrb[0].mxu0
        %v2707 = vadd.f32 0.0, %v2706
        %v2708 = vpop.f32.mrb[0].mxu0
        %v2709 = vpop.f32.mrb[0].mxu0
        %v2710 = vpop.f32.mrb[0].mxu0
        %2711 = vdwg.mxu0
        %2712 = vmatprep.subr.bf16.mxu0 0
        %2713 = vmatpush1.bf16.xpose.msra.mxu0 %v2626
        %2714 = vmatprep.subr.bf16.mxu0 0
        %2715 = vmatpush1.bf16.xpose.msra.mxu0 0
        %2716 = vmatprep.subr.bf16.mxu0 0
        %2717 = vmatpush1.bf16.xpose.msra.mxu0 0
        %2718 = vmatprep.subr.bf16.mxu0 0
        %2719 = vmatpush1.bf16.xpose.msra.mxu0 0
        %2720 = vmatprep.subr.bf16.mxu0 0
        %2721 = vmatpush1.bf16.xpose.msra.mxu0 0
        %2722 = vmatprep.subr.bf16.mxu0 0
        %2723 = vmatpush1.bf16.xpose.msra.mxu0 0
        %2724 = vmatprep.subr.bf16.mxu0 0
        %2725 = vmatpush1.bf16.xpose.msra.mxu0 0
        %2726 = vmatprep.subr.bf16.mxu0 0
        %2727 = vmatpush1.bf16.xpose.msra.mxu0 0
        %2728 = vmatprep.subr.bf16.mxu0 0
        %2729 = vmatpush1.bf16.xpose.msra.mxu0 0
        %2730 = vmatprep.subr.bf16.mxu0 0
        %2731 = vmatpush1.bf16.xpose.msra.mxu0 0
        %2732 = vmatprep.subr.bf16.mxu0 0
        %2733 = vmatpush1.bf16.xpose.msra.mxu0 0
        %2734 = vmatprep.subr.bf16.mxu0 0
        %2735 = vmatpush1.bf16.xpose.msra.mxu0 0
        %2736 = vmatprep.subr.bf16.mxu0 0
        %2737 = vmatpush1.bf16.xpose.msra.mxu0 0
        %2738 = vmatprep.subr.bf16.mxu0 0
        %2739 = vmatpush1.bf16.xpose.msra.mxu0 0
        %2740 = vmatprep.subr.bf16.mxu0 0
        %2741 = vmatpush1.bf16.xpose.msra.mxu0 0
        %2742 = vmatprep.subr.bf16.mxu0 0
        %2743 = vmatpush1.bf16.xpose.msra.mxu0 0
        %2744 = vmatprep.mubr.bf16.mxu0 0
        %2745 = vmatmul.mubr.bf16.gmra.mrb[0].mxu0 %v2622
        %v2746 = vpop.f32.mrb[0].mxu0
        %v2747 = vadd.f32 0.0, %v2746
        %v2748 = vpop.f32.mrb[0].mxu0
        %v2749 = vpop.f32.mrb[0].mxu0
        %v2750 = vpop.f32.mrb[0].mxu0
        %2751 = vdwg.mxu0
        %2752 = vmatprep.subr.bf16.mxu0 0
        %2753 = vmatpush1.bf16.xpose.msra.mxu0 %v2627
        %2754 = vmatprep.subr.bf16.mxu0 0
        %2755 = vmatpush1.bf16.xpose.msra.mxu0 0
        %2756 = vmatprep.subr.bf16.mxu0 0
        %2757 = vmatpush1.bf16.xpose.msra.mxu0 0
        %2758 = vmatprep.subr.bf16.mxu0 0
        %2759 = vmatpush1.bf16.xpose.msra.mxu0 0
        %2760 = vmatprep.subr.bf16.mxu0 0
        %2761 = vmatpush1.bf16.xpose.msra.mxu0 0
        %2762 = vmatprep.subr.bf16.mxu0 0
        %2763 = vmatpush1.bf16.xpose.msra.mxu0 0
        %2764 = vmatprep.subr.bf16.mxu0 0
        %2765 = vmatpush1.bf16.xpose.msra.mxu0 0
        %2766 = vmatprep.subr.bf16.mxu0 0
        %2767 = vmatpush1.bf16.xpose.msra.mxu0 0
        %2768 = vmatprep.subr.bf16.mxu0 0
        %2769 = vmatpush1.bf16.xpose.msra.mxu0 0
        %2770 = vmatprep.subr.bf16.mxu0 0
        %2771 = vmatpush1.bf16.xpose.msra.mxu0 0
        %2772 = vmatprep.subr.bf16.mxu0 0
        %2773 = vmatpush1.bf16.xpose.msra.mxu0 0
        %2774 = vmatprep.subr.bf16.mxu0 0
        %2775 = vmatpush1.bf16.xpose.msra.mxu0 0
        %2776 = vmatprep.subr.bf16.mxu0 0
        %2777 = vmatpush1.bf16.xpose.msra.mxu0 0
        %2778 = vmatprep.subr.bf16.mxu0 0
        %2779 = vmatpush1.bf16.xpose.msra.mxu0 0
        %2780 = vmatprep.subr.bf16.mxu0 0
        %2781 = vmatpush1.bf16.xpose.msra.mxu0 0
        %2782 = vmatprep.subr.bf16.mxu0 0
        %2783 = vmatpush1.bf16.xpose.msra.mxu0 0
        %2784 = vmatprep.mubr.bf16.mxu0 0
        %2785 = vmatmul.mubr.bf16.gmra.mrb[0].mxu0 %v2623
        %v2786 = vpop.f32.mrb[0].mxu0
        %v2787 = vadd.f32 0.0, %v2786
        %v2788 = vpop.f32.mrb[0].mxu0
        %v2789 = vpop.f32.mrb[0].mxu0
        %v2790 = vpop.f32.mrb[0].mxu0
        %2791 = vdwg.mxu0
        %v2792 = vsel %vm1741, %v2667, -inf
        %2793 = vmax.xlane.f32.xlu0 %v2792
        %v2794 = vpop.xlane.xlu0 %2793
        %v2795 = vsel %vm1741, %v2707, -inf
        %2796 = vmax.xlane.f32.xlu0 %v2795
        %v2797 = vpop.xlane.xlu0 %2796
        %v2798 = vsel %vm1741, %v2747, -inf
        %2799 = vmax.xlane.f32.xlu0 %v2798
        %v2800 = vpop.xlane.xlu0 %2799
        %v2801 = vsel %vm1741, %v2787, -inf
        %2802 = vmax.xlane.f32.xlu0 %v2801
        %v2803 = vpop.xlane.xlu0 %2802
        %v2804 = vsub.f32 %v2667, %v2794
        %v2805 = vsub.f32 %v2707, %v2797
        %v2806 = vsub.f32 %v2747, %v2800
        %v2807 = vsub.f32 %v2787, %v2803
        %v2808 = vmul.f32 %v2804, 1.442695
        %v2809 = vpow.pop %v2808
        %v2810 = vmul.f32 %v2805, 1.442695
        %v2811 = vpow.pop %v2810
        %v2812 = vmul.f32 %v2806, 1.442695
        %v2813 = vpow.pop %v2812
        %v2814 = vmul.f32 %v2807, 1.442695
        %v2815 = vpow.pop %v2814
        %v2816 = vsel %vm1741, %v2809, 0.0
        %2817 = vadd.xlane.f32.xlu0 %v2816
        %v2818 = vpop.xlane.xlu0 %2817
        %v2819 = vsel %vm1741, %v2811, 0.0
        %2820 = vadd.xlane.f32.xlu0 %v2819
        %v2821 = vpop.xlane.xlu0 %2820
        %v2822 = vsel %vm1741, %v2813, 0.0
        %2823 = vadd.xlane.f32.xlu0 %v2822
        %v2824 = vpop.xlane.xlu0 %2823
        %v2825 = vsel %vm1741, %v2815, 0.0
        %2826 = vadd.xlane.f32.xlu0 %v2825
        %v2827 = vpop.xlane.xlu0 %2826
        %v2828 = vrcp.pop %v2818
        %v2829 = vmul.f32 %v2809, %v2828
        %v2830 = vrcp.pop %v2821
        %v2831 = vmul.f32 %v2811, %v2830
        %v2832 = vrcp.pop %v2824
        %v2833 = vmul.f32 %v2813, %v2832
        %v2834 = vrcp.pop %v2827
        %v2835 = vmul.f32 %v2815, %v2834
        %v2836 = vpack.c.bf16 %v2829, %v2829
        %v2837 = vpack.c.bf16 %v2831, %v2831
        %v2838 = vpack.c.bf16 %v2833, %v2833
        %v2839 = vpack.c.bf16 %v2835, %v2835
        %v2841 = vsel %vm1741, %v2836, 0
        %v2844 = vsel %vm1793, %v2628, 0
        %2846 = vmatprep.subr.bf16.mxu0 0
        %2847 = vmatpush1.bf16.msra.mxu0 %v2844
        %2848 = vmatprep.subr.bf16.mxu0 0
        %2849 = vmatpush1.bf16.msra.mxu0 0
        %2850 = vmatprep.subr.bf16.mxu0 0
        %2851 = vmatpush1.bf16.msra.mxu0 0
        %2852 = vmatprep.subr.bf16.mxu0 0
        %2853 = vmatpush1.bf16.msra.mxu0 0
        %2854 = vmatprep.subr.bf16.mxu0 0
        %2855 = vmatpush1.bf16.msra.mxu0 0
        %2856 = vmatprep.subr.bf16.mxu0 0
        %2857 = vmatpush1.bf16.msra.mxu0 0
        %2858 = vmatprep.subr.bf16.mxu0 0
        %2859 = vmatpush1.bf16.msra.mxu0 0
        %2860 = vmatprep.subr.bf16.mxu0 0
        %2861 = vmatpush1.bf16.msra.mxu0 0
        %2862 = vmatprep.subr.bf16.mxu0 0
        %2863 = vmatpush1.bf16.msra.mxu0 0
        %2864 = vmatprep.subr.bf16.mxu0 0
        %2865 = vmatpush1.bf16.msra.mxu0 0
        %2866 = vmatprep.subr.bf16.mxu0 0
        %2867 = vmatpush1.bf16.msra.mxu0 0
        %2868 = vmatprep.subr.bf16.mxu0 0
        %2869 = vmatpush1.bf16.msra.mxu0 0
        %2870 = vmatprep.subr.bf16.mxu0 0
        %2871 = vmatpush1.bf16.msra.mxu0 0
        %2872 = vmatprep.subr.bf16.mxu0 0
        %2873 = vmatpush1.bf16.msra.mxu0 0
        %2874 = vmatprep.subr.bf16.mxu0 0
        %2875 = vmatpush1.bf16.msra.mxu0 0
        %2876 = vmatprep.subr.bf16.mxu0 0
        %2877 = vmatpush1.bf16.msra.mxu0 0
        %2878 = vmatprep.mubr.bf16.mxu0 0
        %2879 = vmatmul.mubr.bf16.gmra.mrb[0].mxu0 %v2841
        %v2880 = vpop.f32.mrb[0].mxu0
        %v2881 = vadd.f32 0.0, %v2880
        %v2882 = vpop.f32.mrb[0].mxu0
        %v2883 = vpop.f32.mrb[0].mxu0
        %v2884 = vpop.f32.mrb[0].mxu0
        %2885 = vdwg.mxu0
        %v2887 = vsel %vm1741, %v2837, 0
        %v2890 = vsel %vm1793, %v2629, 0
        %2892 = vmatprep.subr.bf16.mxu0 0
        %2893 = vmatpush1.bf16.msra.mxu0 %v2890
        %2894 = vmatprep.subr.bf16.mxu0 0
        %2895 = vmatpush1.bf16.msra.mxu0 0
        %2896 = vmatprep.subr.bf16.mxu0 0
        %2897 = vmatpush1.bf16.msra.mxu0 0
        %2898 = vmatprep.subr.bf16.mxu0 0
        %2899 = vmatpush1.bf16.msra.mxu0 0
        %2900 = vmatprep.subr.bf16.mxu0 0
        %2901 = vmatpush1.bf16.msra.mxu0 0
        %2902 = vmatprep.subr.bf16.mxu0 0
        %2903 = vmatpush1.bf16.msra.mxu0 0
        %2904 = vmatprep.subr.bf16.mxu0 0
        %2905 = vmatpush1.bf16.msra.mxu0 0
        %2906 = vmatprep.subr.bf16.mxu0 0
        %2907 = vmatpush1.bf16.msra.mxu0 0
        %2908 = vmatprep.subr.bf16.mxu0 0
        %2909 = vmatpush1.bf16.msra.mxu0 0
        %2910 = vmatprep.subr.bf16.mxu0 0
        %2911 = vmatpush1.bf16.msra.mxu0 0
        %2912 = vmatprep.subr.bf16.mxu0 0
        %2913 = vmatpush1.bf16.msra.mxu0 0
        %2914 = vmatprep.subr.bf16.mxu0 0
        %2915 = vmatpush1.bf16.msra.mxu0 0
        %2916 = vmatprep.subr.bf16.mxu0 0
        %2917 = vmatpush1.bf16.msra.mxu0 0
        %2918 = vmatprep.subr.bf16.mxu0 0
        %2919 = vmatpush1.bf16.msra.mxu0 0
        %2920 = vmatprep.subr.bf16.mxu0 0
        %2921 = vmatpush1.bf16.msra.mxu0 0
        %2922 = vmatprep.subr.bf16.mxu0 0
        %2923 = vmatpush1.bf16.msra.mxu0 0
        %2924 = vmatprep.mubr.bf16.mxu0 0
        %2925 = vmatmul.mubr.bf16.gmra.mrb[0].mxu0 %v2887
        %v2926 = vpop.f32.mrb[0].mxu0
        %v2927 = vadd.f32 0.0, %v2926
        %v2928 = vpop.f32.mrb[0].mxu0
        %v2929 = vpop.f32.mrb[0].mxu0
        %v2930 = vpop.f32.mrb[0].mxu0
        %2931 = vdwg.mxu0
        %v2933 = vsel %vm1741, %v2838, 0
        %v2936 = vsel %vm1793, %v2630, 0
        %2938 = vmatprep.subr.bf16.mxu0 0
        %2939 = vmatpush1.bf16.msra.mxu0 %v2936
        %2940 = vmatprep.subr.bf16.mxu0 0
        %2941 = vmatpush1.bf16.msra.mxu0 0
        %2942 = vmatprep.subr.bf16.mxu0 0
        %2943 = vmatpush1.bf16.msra.mxu0 0
        %2944 = vmatprep.subr.bf16.mxu0 0
        %2945 = vmatpush1.bf16.msra.mxu0 0
        %2946 = vmatprep.subr.bf16.mxu0 0
        %2947 = vmatpush1.bf16.msra.mxu0 0
        %2948 = vmatprep.subr.bf16.mxu0 0
        %2949 = vmatpush1.bf16.msra.mxu0 0
        %2950 = vmatprep.subr.bf16.mxu0 0
        %2951 = vmatpush1.bf16.msra.mxu0 0
        %2952 = vmatprep.subr.bf16.mxu0 0
        %2953 = vmatpush1.bf16.msra.mxu0 0
        %2954 = vmatprep.subr.bf16.mxu0 0
        %2955 = vmatpush1.bf16.msra.mxu0 0
        %2956 = vmatprep.subr.bf16.mxu0 0
        %2957 = vmatpush1.bf16.msra.mxu0 0
        %2958 = vmatprep.subr.bf16.mxu0 0
        %2959 = vmatpush1.bf16.msra.mxu0 0
        %2960 = vmatprep.subr.bf16.mxu0 0
        %2961 = vmatpush1.bf16.msra.mxu0 0
        %2962 = vmatprep.subr.bf16.mxu0 0
        %2963 = vmatpush1.bf16.msra.mxu0 0
        %2964 = vmatprep.subr.bf16.mxu0 0
        %2965 = vmatpush1.bf16.msra.mxu0 0
        %2966 = vmatprep.subr.bf16.mxu0 0
        %2967 = vmatpush1.bf16.msra.mxu0 0
        %2968 = vmatprep.subr.bf16.mxu0 0
        %2969 = vmatpush1.bf16.msra.mxu0 0
        %2970 = vmatprep.mubr.bf16.mxu0 0
        %2971 = vmatmul.mubr.bf16.gmra.mrb[0].mxu0 %v2933
        %v2972 = vpop.f32.mrb[0].mxu0
        %v2973 = vadd.f32 0.0, %v2972
        %v2974 = vpop.f32.mrb[0].mxu0
        %v2975 = vpop.f32.mrb[0].mxu0
        %v2976 = vpop.f32.mrb[0].mxu0
        %2977 = vdwg.mxu0
        %v2979 = vsel %vm1741, %v2839, 0
        %v2982 = vsel %vm1793, %v2631, 0
        %2984 = vmatprep.subr.bf16.mxu0 0
        %2985 = vmatpush1.bf16.msra.mxu0 %v2982
        %2986 = vmatprep.subr.bf16.mxu0 0
        %2987 = vmatpush1.bf16.msra.mxu0 0
        %2988 = vmatprep.subr.bf16.mxu0 0
        %2989 = vmatpush1.bf16.msra.mxu0 0
        %2990 = vmatprep.subr.bf16.mxu0 0
        %2991 = vmatpush1.bf16.msra.mxu0 0
        %2992 = vmatprep.subr.bf16.mxu0 0
        %2993 = vmatpush1.bf16.msra.mxu0 0
        %2994 = vmatprep.subr.bf16.mxu0 0
        %2995 = vmatpush1.bf16.msra.mxu0 0
        %2996 = vmatprep.subr.bf16.mxu0 0
        %2997 = vmatpush1.bf16.msra.mxu0 0
        %2998 = vmatprep.subr.bf16.mxu0 0
        %2999 = vmatpush1.bf16.msra.mxu0 0
        %3000 = vmatprep.subr.bf16.mxu0 0
        %3001 = vmatpush1.bf16.msra.mxu0 0
        %3002 = vmatprep.subr.bf16.mxu0 0
        %3003 = vmatpush1.bf16.msra.mxu0 0
        %3004 = vmatprep.subr.bf16.mxu0 0
        %3005 = vmatpush1.bf16.msra.mxu0 0
        %3006 = vmatprep.subr.bf16.mxu0 0
        %3007 = vmatpush1.bf16.msra.mxu0 0
        %3008 = vmatprep.subr.bf16.mxu0 0
        %3009 = vmatpush1.bf16.msra.mxu0 0
        %3010 = vmatprep.subr.bf16.mxu0 0
        %3011 = vmatpush1.bf16.msra.mxu0 0
        %3012 = vmatprep.subr.bf16.mxu0 0
        %3013 = vmatpush1.bf16.msra.mxu0 0
        %3014 = vmatprep.subr.bf16.mxu0 0
        %3015 = vmatpush1.bf16.msra.mxu0 0
        %3016 = vmatprep.mubr.bf16.mxu0 0
        %3017 = vmatmul.mubr.bf16.gmra.mrb[0].mxu0 %v2979
        %v3018 = vpop.f32.mrb[0].mxu0
        %v3019 = vadd.f32 0.0, %v3018
        %v3020 = vpop.f32.mrb[0].mxu0
        %v3021 = vpop.f32.mrb[0].mxu0
        %v3022 = vpop.f32.mrb[0].mxu0
        %3023 = vdwg.mxu0
        %v3024 = vpack.c.bf16 %v2927, %v2881
        %v3025 = vpack.c.bf16 %v3019, %v2973
        %v3027 = vlaneseq
        %v3028 = vshrl.u32 %v3027, 7
        %v3029 = vsub.s32 0, %v3028
        %v3030 = vrot.slane %v2244, %v3029
        %v3064 = vunpack.c.l.b16 %v2212
        %v3065 = vunpack.c.l.b16 %v2213
        %v3066 = vunpack.c.l.b16 %v2214
        %v3067 = vunpack.c.l.b16 %v2215
        %v3068 = vunpack.c.l.b16 %v2216
        %v3069 = vunpack.c.l.b16 %v2217
        %v3070 = vunpack.c.l.b16 %v2218
        %v3071 = vunpack.c.l.b16 %v2219
        %v3072 = vunpack.c.l.b16 %v2220
        %v3073 = vunpack.c.l.b16 %v2221
        %v3074 = vunpack.c.l.b16 %v2222
        %v3075 = vunpack.c.l.b16 %v2223
        %v3076 = vunpack.c.l.b16 %v2224
        %v3077 = vunpack.c.l.b16 %v2225
        %v3078 = vunpack.c.l.b16 %v2226
        %v3079 = vunpack.c.l.b16 %v2227
        %v3080 = vunpack.c.l.b16 %v2228
        %v3081 = vunpack.c.l.b16 %v2229
        %v3082 = vunpack.c.l.b16 %v2230
        %v3083 = vunpack.c.l.b16 %v2231
        %v3084 = vunpack.c.l.b16 %v2232
        %v3085 = vunpack.c.l.b16 %v2233
        %v3086 = vunpack.c.l.b16 %v2234
        %v3087 = vunpack.c.l.b16 %v2235
        %v3088 = vunpack.c.l.b16 %v2236
        %v3089 = vunpack.c.l.b16 %v2237
        %v3090 = vunpack.c.l.b16 %v2238
        %v3091 = vunpack.c.l.b16 %v2239
        %v3092 = vunpack.c.l.b16 %v2240
        %v3093 = vunpack.c.l.b16 %v2241
        %v3094 = vunpack.c.l.b16 %v2242
        %v3095 = vunpack.c.l.b16 %v2243
        %v3096 = vpack.c.b16 %v3065, %v3064
        %v3097 = vpack.c.b16 %v3067, %v3066
        %v3098 = vpack.c.b16 %v3069, %v3068
        %v3099 = vpack.c.b16 %v3071, %v3070
        %v3100 = vpack.c.b16 %v3073, %v3072
        %v3101 = vpack.c.b16 %v3075, %v3074
        %v3102 = vpack.c.b16 %v3077, %v3076
        %v3103 = vpack.c.b16 %v3079, %v3078
        %v3104 = vpack.c.b16 %v3081, %v3080
        %v3105 = vpack.c.b16 %v3083, %v3082
        %v3106 = vpack.c.b16 %v3085, %v3084
        %v3107 = vpack.c.b16 %v3087, %v3086
        %v3108 = vpack.c.b16 %v3089, %v3088
        %v3109 = vpack.c.b16 %v3091, %v3090
        %v3110 = vpack.c.b16 %v3093, %v3092
        %v3111 = vpack.c.b16 %v3095, %v3094
        %3128 = vmatprep.subr.bf16.mxu0 0
        %3129 = vmatpush1.bf16.msra.mxu0 %v3096
        %3130 = vmatprep.subr.bf16.mxu0 0
        %3131 = vmatpush1.bf16.msra.mxu0 %v3097
        %3132 = vmatprep.subr.bf16.mxu0 0
        %3133 = vmatpush1.bf16.msra.mxu0 %v3098
        %3134 = vmatprep.subr.bf16.mxu0 0
        %3135 = vmatpush1.bf16.msra.mxu0 %v3099
        %3136 = vmatprep.subr.bf16.mxu0 0
        %3137 = vmatpush1.bf16.msra.mxu0 %v3100
        %3138 = vmatprep.subr.bf16.mxu0 0
        %3139 = vmatpush1.bf16.msra.mxu0 %v3101
        %3140 = vmatprep.subr.bf16.mxu0 0
        %3141 = vmatpush1.bf16.msra.mxu0 %v3102
        %3142 = vmatprep.subr.bf16.mxu0 0
        %3143 = vmatpush1.bf16.msra.mxu0 %v3103
        %3144 = vmatprep.subr.bf16.mxu0 0
        %3145 = vmatpush1.bf16.msra.mxu0 %v3104
        %3146 = vmatprep.subr.bf16.mxu0 0
        %3147 = vmatpush1.bf16.msra.mxu0 %v3105
        %3148 = vmatprep.subr.bf16.mxu0 0
        %3149 = vmatpush1.bf16.msra.mxu0 %v3106
        %3150 = vmatprep.subr.bf16.mxu0 0
        %3151 = vmatpush1.bf16.msra.mxu0 %v3107
        %3152 = vmatprep.subr.bf16.mxu0 0
        %3153 = vmatpush1.bf16.msra.mxu0 %v3108
        %3154 = vmatprep.subr.bf16.mxu0 0
        %3155 = vmatpush1.bf16.msra.mxu0 %v3109
        %3156 = vmatprep.subr.bf16.mxu0 0
        %3157 = vmatpush1.bf16.msra.mxu0 %v3110
        %3158 = vmatprep.subr.bf16.mxu0 0
        %3159 = vmatpush1.bf16.msra.mxu0 %v3111
        %3160 = vmatprep.mubr.bf16.mxu0 %v3025
        %3161 = vmatmul.mubr.bf16.gmra.mrb[0].mxu0 %v3024
        %v3162 = vpop.f32.mrb[0].mxu0
        %v3163 = vadd.f32 %v3030, %v3162
        %v3164 = vpop.f32.mrb[0].mxu0
        %v3165 = vpop.f32.mrb[0].mxu0
        %v3166 = vadd.f32 %v3030, %v3165
        %v3167 = vpop.f32.mrb[0].mxu0
        %3168 = vdwg.mxu0
        %v3169 = vadd.f32 %v2120, %v3163
        %v3170 = vadd.f32 %v2121, %v3166
        %v3171 = vld [vmem:[%s1051] sm:$0x1]
        %v3172 = vld [vmem:[%s1054] sm:$0x1]
        %3173 = vadd.xlane.f32.xlu0 %v3169
        %v3174 = vpop.xlane.xlu0 %3173
        %3175 = vadd.xlane.f32.xlu0 %v3170
        %v3176 = vpop.xlane.xlu0 %3175
        %v3177 = vmul.f32 %v3174, %v1079
        %v3178 = vmul.f32 %v3176, %v1079
        %v3179 = vsub.f32 %v3169, %v3177
        %v3180 = vsub.f32 %v3170, %v3178
        %v3181 = vmul.f32 %v3179, %v3179
        %v3182 = vmul.f32 %v3180, %v3180
        %3183 = vadd.xlane.f32.xlu0 %v3181
        %v3184 = vpop.xlane.xlu0 %3183
        %3185 = vadd.xlane.f32.xlu0 %v3182
        %v3186 = vpop.xlane.xlu0 %3185
        %v3187 = vmul.f32 %v3184, %v1079
        %v3188 = vmul.f32 %v3186, %v1079
        %v3189 = vadd.f32 %v3187, 1e-05
        %v3190 = vadd.f32 %v3188, 1e-05
        %v3191 = vrsqrt.pop %v3189
        %v3192 = vrsqrt.pop %v3190
        %v3193 = vmul.f32 %v3179, %v3191
        %v3194 = vmul.f32 %v3180, %v3192
        %v3196 = vlaneseq
        %v3197 = vshrl.u32 %v3196, 7
        %v3198 = vsub.s32 0, %v3197
        %v3199 = vrot.slane %v3171, %v3198
        %v3201 = vmul.f32 %v3193, %v3199
        %v3202 = vmul.f32 %v3194, %v3199
        %v3204 = vlaneseq
        %v3205 = vshrl.u32 %v3204, 7
        %v3206 = vsub.s32 0, %v3205
        %v3207 = vrot.slane %v3172, %v3206
        %v3209 = vadd.f32 %v3201, %v3207
        %v3210 = vadd.f32 %v3202, %v3207
        %v3211 = vpack.c.bf16 %v3210, %v3209
        %v3212 = vld [vmem:[%s904] sm:$0xff]
        %v3213 = vld [vmem:[%s904 + $0x8] sm:$0xff]
        %v3214 = vld [vmem:[%s904 + $0x10] sm:$0xff]
        %v3215 = vld [vmem:[%s904 + $0x18] sm:$0xff]
        %v3216 = vld [vmem:[%s904 + $0x20] sm:$0xff]
        %v3217 = vld [vmem:[%s904 + $0x28] sm:$0xff]
        %v3218 = vld [vmem:[%s904 + $0x30] sm:$0xff]
        %v3219 = vld [vmem:[%s904 + $0x38] sm:$0xff]
        %v3220 = vld [vmem:[%s904 + $0x40] sm:$0xff]
        %v3221 = vld [vmem:[%s904 + $0x48] sm:$0xff]
        %v3222 = vld [vmem:[%s904 + $0x50] sm:$0xff]
        %v3223 = vld [vmem:[%s904 + $0x58] sm:$0xff]
        %v3224 = vld [vmem:[%s904 + $0x60] sm:$0xff]
        %v3225 = vld [vmem:[%s904 + $0x68] sm:$0xff]
        %v3226 = vld [vmem:[%s904 + $0x70] sm:$0xff]
        %v3227 = vld [vmem:[%s904 + $0x78] sm:$0xff]
        %v3228 = vld [vmem:[%s1058] sm:$0x3]
        %v3230 = vlaneseq
        %v3231 = vshrl.u32 %v3230, 7
        %v3232 = vsub.s32 0, %v3231
        %v3233 = vrot.slane %v3228, %v3232
        %v3234 = vlaneseq
        %v3235 = vshrl.u32 %v3234, 7
        %v3236 = vsub.s32 1, %v3235
        %v3237 = vrot.slane %v3228, %v3236
        %v3256 = vunpack.c.l.b16 %v3212
        %v3257 = vunpack.c.h.b16 %v3212
        %v3258 = vunpack.c.l.b16 %v3213
        %v3259 = vunpack.c.h.b16 %v3213
        %v3260 = vunpack.c.l.b16 %v3214
        %v3261 = vunpack.c.h.b16 %v3214
        %v3262 = vunpack.c.l.b16 %v3215
        %v3263 = vunpack.c.h.b16 %v3215
        %v3264 = vunpack.c.l.b16 %v3216
        %v3265 = vunpack.c.h.b16 %v3216
        %v3266 = vunpack.c.l.b16 %v3217
        %v3267 = vunpack.c.h.b16 %v3217
        %v3268 = vunpack.c.l.b16 %v3218
        %v3269 = vunpack.c.h.b16 %v3218
        %v3270 = vunpack.c.l.b16 %v3219
        %v3271 = vunpack.c.h.b16 %v3219
        %v3272 = vunpack.c.l.b16 %v3220
        %v3273 = vunpack.c.h.b16 %v3220
        %v3274 = vunpack.c.l.b16 %v3221
        %v3275 = vunpack.c.h.b16 %v3221
        %v3276 = vunpack.c.l.b16 %v3222
        %v3277 = vunpack.c.h.b16 %v3222
        %v3278 = vunpack.c.l.b16 %v3223
        %v3279 = vunpack.c.h.b16 %v3223
        %v3280 = vunpack.c.l.b16 %v3224
        %v3281 = vunpack.c.h.b16 %v3224
        %v3282 = vunpack.c.l.b16 %v3225
        %v3283 = vunpack.c.h.b16 %v3225
        %v3284 = vunpack.c.l.b16 %v3226
        %v3285 = vunpack.c.h.b16 %v3226
        %v3286 = vunpack.c.l.b16 %v3227
        %v3287 = vunpack.c.h.b16 %v3227
        %v3288 = vpack.c.b16 %v3258, %v3256
        %v3289 = vpack.c.b16 %v3259, %v3257
        %v3290 = vpack.c.b16 %v3262, %v3260
        %v3291 = vpack.c.b16 %v3263, %v3261
        %v3292 = vpack.c.b16 %v3266, %v3264
        %v3293 = vpack.c.b16 %v3267, %v3265
        %v3294 = vpack.c.b16 %v3270, %v3268
        %v3295 = vpack.c.b16 %v3271, %v3269
        %v3296 = vpack.c.b16 %v3274, %v3272
        %v3297 = vpack.c.b16 %v3275, %v3273
        %v3298 = vpack.c.b16 %v3278, %v3276
        %v3299 = vpack.c.b16 %v3279, %v3277
        %v3300 = vpack.c.b16 %v3282, %v3280
        %v3301 = vpack.c.b16 %v3283, %v3281
        %v3302 = vpack.c.b16 %v3286, %v3284
        %v3303 = vpack.c.b16 %v3287, %v3285
        %3320 = vmatprep.subr.bf16.mxu0 %v3289
        %3321 = vmatpush1.bf16.msra.mxu0 %v3288
        %3322 = vmatprep.subr.bf16.mxu0 %v3291
        %3323 = vmatpush1.bf16.msra.mxu0 %v3290
        %3324 = vmatprep.subr.bf16.mxu0 %v3293
        %3325 = vmatpush1.bf16.msra.mxu0 %v3292
        %3326 = vmatprep.subr.bf16.mxu0 %v3295
        %3327 = vmatpush1.bf16.msra.mxu0 %v3294
        %3328 = vmatprep.subr.bf16.mxu0 %v3297
        %3329 = vmatpush1.bf16.msra.mxu0 %v3296
        %3330 = vmatprep.subr.bf16.mxu0 %v3299
        %3331 = vmatpush1.bf16.msra.mxu0 %v3298
        %3332 = vmatprep.subr.bf16.mxu0 %v3301
        %3333 = vmatpush1.bf16.msra.mxu0 %v3300
        %3334 = vmatprep.subr.bf16.mxu0 %v3303
        %3335 = vmatpush1.bf16.msra.mxu0 %v3302
        %3336 = vmatprep.subr.bf16.mxu0 0
        %3337 = vmatpush1.bf16.msra.mxu0 0
        %3338 = vmatprep.subr.bf16.mxu0 0
        %3339 = vmatpush1.bf16.msra.mxu0 0
        %3340 = vmatprep.subr.bf16.mxu0 0
        %3341 = vmatpush1.bf16.msra.mxu0 0
        %3342 = vmatprep.subr.bf16.mxu0 0
        %3343 = vmatpush1.bf16.msra.mxu0 0
        %3344 = vmatprep.subr.bf16.mxu0 0
        %3345 = vmatpush1.bf16.msra.mxu0 0
        %3346 = vmatprep.subr.bf16.mxu0 0
        %3347 = vmatpush1.bf16.msra.mxu0 0
        %3348 = vmatprep.subr.bf16.mxu0 0
        %3349 = vmatpush1.bf16.msra.mxu0 0
        %3350 = vmatprep.subr.bf16.mxu0 0
        %3351 = vmatpush1.bf16.msra.mxu0 0
        %3352 = vmatprep.mubr.bf16.mxu0 0
        %3353 = vmatmul.mubr.bf16.gmra.mrb[0].mxu0 %v3211
        %v3354 = vpop.f32.mrb[0].mxu0
        %v3355 = vadd.f32 %v3233, %v3354
        %v3356 = vpop.f32.mrb[0].mxu0
        %v3357 = vadd.f32 %v3237, %v3356
        %v3358 = vpop.f32.mrb[0].mxu0
        %v3359 = vadd.f32 %v3233, %v3358
        %v3360 = vpop.f32.mrb[0].mxu0
        %v3361 = vadd.f32 %v3237, %v3360
        %3362 = vdwg.mxu0
        %v3363 = vmul.f32 %v3355, 0.5
        %v3364 = vmul.f32 %v3357, 0.5
        %v3365 = vmul.f32 %v3359, 0.5
        %v3366 = vmul.f32 %v3361, 0.5
        %v3367 = vmul.f32 %v3355, 0.70710677
        %v3368 = vmul.f32 %v3357, 0.70710677
        %v3369 = vmul.f32 %v3359, 0.70710677
        %v3370 = vmul.f32 %v3361, 0.70710677
        %v3371 = verf.f32.pop %v3367
        %v3372 = verf.f32.pop %v3368
        %v3373 = verf.f32.pop %v3369
        %v3374 = verf.f32.pop %v3370
        %v3375 = vadd.f32 %v3371, 1.0
        %v3376 = vadd.f32 %v3372, 1.0
        %v3377 = vadd.f32 %v3373, 1.0
        %v3378 = vadd.f32 %v3374, 1.0
        %v3379 = vmul.f32 %v3363, %v3375
        %v3380 = vmul.f32 %v3364, %v3376
        %v3381 = vmul.f32 %v3365, %v3377
        %v3382 = vmul.f32 %v3366, %v3378
        %v3383 = vpack.c.bf16 %v3381, %v3379
        %v3384 = vpack.c.bf16 %v3382, %v3380
        %v3385 = vld [vmem:[%s913] sm:$0xf]
        %v3386 = vld [vmem:[%s913 + $0x4] sm:$0xf]
        %v3387 = vld [vmem:[%s913 + $0x8] sm:$0xf]
        %v3388 = vld [vmem:[%s913 + $0xc] sm:$0xf]
        %v3389 = vld [vmem:[%s913 + $0x10] sm:$0xf]
        %v3390 = vld [vmem:[%s913 + $0x14] sm:$0xf]
        %v3391 = vld [vmem:[%s913 + $0x18] sm:$0xf]
        %v3392 = vld [vmem:[%s913 + $0x1c] sm:$0xf]
        %v3393 = vld [vmem:[%s913 + $0x20] sm:$0xf]
        %v3394 = vld [vmem:[%s913 + $0x24] sm:$0xf]
        %v3395 = vld [vmem:[%s913 + $0x28] sm:$0xf]
        %v3396 = vld [vmem:[%s913 + $0x2c] sm:$0xf]
        %v3397 = vld [vmem:[%s913 + $0x30] sm:$0xf]
        %v3398 = vld [vmem:[%s913 + $0x34] sm:$0xf]
        %v3399 = vld [vmem:[%s913 + $0x38] sm:$0xf]
        %v3400 = vld [vmem:[%s913 + $0x3c] sm:$0xf]
        %v3401 = vld [vmem:[%s913 + $0x40] sm:$0xf]
        %v3402 = vld [vmem:[%s913 + $0x44] sm:$0xf]
        %v3403 = vld [vmem:[%s913 + $0x48] sm:$0xf]
        %v3404 = vld [vmem:[%s913 + $0x4c] sm:$0xf]
        %v3405 = vld [vmem:[%s913 + $0x50] sm:$0xf]
        %v3406 = vld [vmem:[%s913 + $0x54] sm:$0xf]
        %v3407 = vld [vmem:[%s913 + $0x58] sm:$0xf]
        %v3408 = vld [vmem:[%s913 + $0x5c] sm:$0xf]
        %v3409 = vld [vmem:[%s913 + $0x60] sm:$0xf]
        %v3410 = vld [vmem:[%s913 + $0x64] sm:$0xf]
        %v3411 = vld [vmem:[%s913 + $0x68] sm:$0xf]
        %v3412 = vld [vmem:[%s913 + $0x6c] sm:$0xf]
        %v3413 = vld [vmem:[%s913 + $0x70] sm:$0xf]
        %v3414 = vld [vmem:[%s913 + $0x74] sm:$0xf]
        %v3415 = vld [vmem:[%s913 + $0x78] sm:$0xf]
        %v3416 = vld [vmem:[%s913 + $0x7c] sm:$0xf]
        %v3449 = vunpack.c.l.b16 %v3385
        %v3450 = vunpack.c.l.b16 %v3386
        %v3451 = vunpack.c.l.b16 %v3387
        %v3452 = vunpack.c.l.b16 %v3388
        %v3453 = vunpack.c.l.b16 %v3389
        %v3454 = vunpack.c.l.b16 %v3390
        %v3455 = vunpack.c.l.b16 %v3391
        %v3456 = vunpack.c.l.b16 %v3392
        %v3457 = vunpack.c.l.b16 %v3393
        %v3458 = vunpack.c.l.b16 %v3394
        %v3459 = vunpack.c.l.b16 %v3395
        %v3460 = vunpack.c.l.b16 %v3396
        %v3461 = vunpack.c.l.b16 %v3397
        %v3462 = vunpack.c.l.b16 %v3398
        %v3463 = vunpack.c.l.b16 %v3399
        %v3464 = vunpack.c.l.b16 %v3400
        %v3465 = vunpack.c.l.b16 %v3401
        %v3466 = vunpack.c.l.b16 %v3402
        %v3467 = vunpack.c.l.b16 %v3403
        %v3468 = vunpack.c.l.b16 %v3404
        %v3469 = vunpack.c.l.b16 %v3405
        %v3470 = vunpack.c.l.b16 %v3406
        %v3471 = vunpack.c.l.b16 %v3407
        %v3472 = vunpack.c.l.b16 %v3408
        %v3473 = vunpack.c.l.b16 %v3409
        %v3474 = vunpack.c.l.b16 %v3410
        %v3475 = vunpack.c.l.b16 %v3411
        %v3476 = vunpack.c.l.b16 %v3412
        %v3477 = vunpack.c.l.b16 %v3413
        %v3478 = vunpack.c.l.b16 %v3414
        %v3479 = vunpack.c.l.b16 %v3415
        %v3480 = vunpack.c.l.b16 %v3416
        %v3481 = vpack.c.b16 %v3450, %v3449
        %v3482 = vpack.c.b16 %v3452, %v3451
        %v3483 = vpack.c.b16 %v3454, %v3453
        %v3484 = vpack.c.b16 %v3456, %v3455
        %v3485 = vpack.c.b16 %v3458, %v3457
        %v3486 = vpack.c.b16 %v3460, %v3459
        %v3487 = vpack.c.b16 %v3462, %v3461
        %v3488 = vpack.c.b16 %v3464, %v3463
        %v3489 = vpack.c.b16 %v3466, %v3465
        %v3490 = vpack.c.b16 %v3468, %v3467
        %v3491 = vpack.c.b16 %v3470, %v3469
        %v3492 = vpack.c.b16 %v3472, %v3471
        %v3493 = vpack.c.b16 %v3474, %v3473
        %v3494 = vpack.c.b16 %v3476, %v3475
        %v3495 = vpack.c.b16 %v3478, %v3477
        %v3496 = vpack.c.b16 %v3480, %v3479
        %3513 = vmatprep.subr.bf16.mxu0 0
        %3514 = vmatpush1.bf16.msra.mxu0 %v3481
        %3515 = vmatprep.subr.bf16.mxu0 0
        %3516 = vmatpush1.bf16.msra.mxu0 %v3482
        %3517 = vmatprep.subr.bf16.mxu0 0
        %3518 = vmatpush1.bf16.msra.mxu0 %v3483
        %3519 = vmatprep.subr.bf16.mxu0 0
        %3520 = vmatpush1.bf16.msra.mxu0 %v3484
        %3521 = vmatprep.subr.bf16.mxu0 0
        %3522 = vmatpush1.bf16.msra.mxu0 %v3485
        %3523 = vmatprep.subr.bf16.mxu0 0
        %3524 = vmatpush1.bf16.msra.mxu0 %v3486
        %3525 = vmatprep.subr.bf16.mxu0 0
        %3526 = vmatpush1.bf16.msra.mxu0 %v3487
        %3527 = vmatprep.subr.bf16.mxu0 0
        %3528 = vmatpush1.bf16.msra.mxu0 %v3488
        %3529 = vmatprep.subr.bf16.mxu0 0
        %3530 = vmatpush1.bf16.msra.mxu0 %v3489
        %3531 = vmatprep.subr.bf16.mxu0 0
        %3532 = vmatpush1.bf16.msra.mxu0 %v3490
        %3533 = vmatprep.subr.bf16.mxu0 0
        %3534 = vmatpush1.bf16.msra.mxu0 %v3491
        %3535 = vmatprep.subr.bf16.mxu0 0
        %3536 = vmatpush1.bf16.msra.mxu0 %v3492
        %3537 = vmatprep.subr.bf16.mxu0 0
        %3538 = vmatpush1.bf16.msra.mxu0 %v3493
        %3539 = vmatprep.subr.bf16.mxu0 0
        %3540 = vmatpush1.bf16.msra.mxu0 %v3494
        %3541 = vmatprep.subr.bf16.mxu0 0
        %3542 = vmatpush1.bf16.msra.mxu0 %v3495
        %3543 = vmatprep.subr.bf16.mxu0 0
        %3544 = vmatpush1.bf16.msra.mxu0 %v3496
        %3545 = vmatprep.mubr.bf16.mxu0 %v3384
        %3546 = vmatmul.mubr.bf16.gmra.mrb[0].mxu0 %v3383
        %v3547 = vpop.f32.mrb[0].mxu0
        %v3548 = vadd.f32 0.0, %v3547
        %v3549 = vpop.f32.mrb[0].mxu0
        %v3550 = vpop.f32.mrb[0].mxu0
        %v3551 = vadd.f32 0.0, %v3550
        %v3552 = vpop.f32.mrb[0].mxu0
        %3553 = vdwg.mxu0
        %v3554 = vadd.f32 %v3169, %v3548
        %v3555 = vadd.f32 %v3170, %v3551
        %v3556 = vld [vmem:[%s1061] sm:$0x1]
        %v3558 = vlaneseq
        %v3559 = vshrl.u32 %v3558, 7
        %v3560 = vsub.s32 0, %v3559
        %v3561 = vrot.slane %v3556, %v3560
        %v3563 = vadd.f32 %v3554, %v3561
        %v3564 = vadd.f32 %v3555, %v3561
        %3565 = vst [vmem:[#allocation17] sm:$0xff] %v3563
        %3566 = vst [vmem:[#allocation17 + $0x8] sm:$0xff] %v3564
        // Predicated region
        $region141: #{tpu_custom_call.1} parent=99 // pred_check
          %p3567 = pneg %p568
        $region142: #{tpu_custom_call.1} parent=99 // pred_check_branch
          %3569 = sbr.rel (%p3567) target = $region144
        $region143: #{tpu_custom_call.1} parent=99 // pred_region
          %s3571 = ssub.s32 256, 256
          %3572 = vsyncadd [#allocation4], %s3571
          %s3573 = sshll.u32 [#allocation17], 4
          %s3574 = int_to_ptr.vmem [resolvable:$true] %s3573
          %3579 = dma.vmem_to_hbm [thread:$0]  %s3574, 256, %s20, [#allocation4], 128, 128, 8
        $region144: #{tpu_custom_call.1} parent=99 // pred_fallthru
          _
        // Predicated region
        $region145: #{tpu_custom_call.1} parent=99 // pred_check
          %p3580 = pneg %p568
        $region146: #{tpu_custom_call.1} parent=99 // pred_check_branch
          %3582 = sbr.rel (%p3580) target = $region148
        $region147: #{tpu_custom_call.1} parent=99 // pred_region
          %3583 = dma.done [#allocation4], 256
        $region148: #{tpu_custom_call.1} parent=99 // pred_fallthru
          _
      $region100: #{tpu_custom_call.1} parent=5 // pred_fallthru
        _
      %p3584 = scmp.le.s32.totalorder 2, %s40
      // Predicated region
      $region149: #{tpu_custom_call.1} parent=5 // pred_check
        %p3585 = pneg %p3584
      $region150: #{tpu_custom_call.1} parent=5 // pred_check_branch
        %3587 = sbr.rel (%p3585) target = $region152
      $region151: #{tpu_custom_call.1} parent=5 // pred_region
        %s3588 = ssub.s32 %s40, 2
      $region152: #{tpu_custom_call.1} parent=5 // pred_fallthru
        _
    $region6: #{tpu_custom_call.1} parent=1 // loop_footer
      %s44 = sadd.s32 1, %s40
    $region7: #{tpu_custom_call.1} parent=1 // loop_footer_branch
      %39 = sbr.rel target = $region3
    $region8: #{tpu_custom_call.1} parent=1 // loop_exit
      _
    %3589 = vsyncpa [#allocation3], 1
    %s3590 = scalar_lea.sflag [#allocation3], 1
    %3591 = vsyncpa %s3590, 1
    %3592 = vsyncpa [#allocation6], 1
    %s3593 = scalar_lea.sflag [#allocation6], 1
    %3594 = vsyncpa %s3593, 1
    %3595 = vsyncpa [#allocation9], 1
    %s3596 = scalar_lea.sflag [#allocation9], 1
    %3597 = vsyncpa %s3596, 1
    %3598 = vsyncpa [#allocation12], 1
    %s3599 = scalar_lea.sflag [#allocation12], 1
    %3600 = vsyncpa %s3599, 1
    %3601 = vsyncpa [#allocation15], 1
    %s3602 = scalar_lea.sflag [#allocation15], 1
    %3603 = vsyncpa %s3602, 1
    %3604 = vsyncpa [#allocation4], 1
    %s3605 = scalar_lea.sflag [#allocation4], 1
    %3606 = vsyncpa %s3605, 1

</llo_original>
